<compile_context>
chip_gen: v6e
topology: v6e:2x2x1
jax: 0.10.0
libtpu: 0.0.40
codegen_flags: <defaults>
</compile_context>

<pallas_src>
import functools

import jax
import jax.numpy as jnp
from jax.experimental import pallas as pl
from jax.experimental.pallas import tpu as pltpu


# ----------------------------------------------------------------------------
# In-kernel helpers
# ----------------------------------------------------------------------------
def _flat_shift(x2d, s):
    """out[:, p] = x2d[:, p + s], zero-filled where p + s leaves [0, HW)."""
    if s == 0:
        return x2d
    C, HW = x2d.shape
    zeros = jnp.zeros((C, abs(s)), x2d.dtype)
    if s > 0:
        return jnp.concatenate([x2d[:, s:], zeros], axis=1)
    return jnp.concatenate([zeros, x2d[:, :HW + s]], axis=1)


# ----------------------------------------------------------------------------
# Fused InceptionA kernel (one image per grid step)
# ----------------------------------------------------------------------------
def _inception_kernel(x_ref, wall_ref, wbig_ref, w3b_ref, ball_ref, mcol_ref,
                      o_ref, y_ref, colA_ref, colB_ref, *, H, W):
    bias = ball_ref[...]                                        # (144, 1) f32

    # ---- four fused 1x1 convs: one (72, Cin) @ (Cin, HW) MXU matmul ---------
    y = jax.lax.dot_general(
        wall_ref[...], x_ref[0],
        dimension_numbers=(((1,), (0,)), ((), ())),
        preferred_element_type=jnp.float32)                     # (72, HW) f32
    # branch1x1 goes straight to the output.
    o_ref[0, 0:16, :] = (y[0:16] + bias[0:16]).astype(o_ref.dtype)
    # [t5 | t3] (biased, inputs of the merged conv) and pool pre-sum -> scratch.
    y_ref[0:32, :] = y[16:48] + bias[16:48]
    y_ref[32:56, :] = y[48:72]                                  # (w_pool/9) @ x

    # ---- hoisted column-validity mask rows (loaded / cast once) -------------
    mf = {-2: mcol_ref[0:1, :], -1: mcol_ref[1:2, :],
           1: mcol_ref[3:4, :],  2: mcol_ref[4:5, :]}
    mb = {d: mf[d].astype(jnp.bfloat16) for d in (-2, -1, 1, 2)}

    # ---- merged branch5x5_2 + branch3x3dbl_2: one 800-row bf16 im2col slab --
    y32 = y_ref[0:32, :].astype(jnp.bfloat16)                   # (32, HW) bf16
    hvar = {}
    for dw in (-2, -1, 0, 1, 2):                                # K horiz variants
        h = _flat_shift(y32, dw)
        if dw:
            h = h * mb[dw]
        hvar[dw] = h
    for kh in range(5):
        dh = kh - 2
        for kw in range(5):
            t = kh * 5 + kw
            colA_ref[t * 32:(t + 1) * 32, :] = _flat_shift(hvar[kw - 2], dh * W)
    z = jax.lax.dot_general(
        wbig_ref[...], colA_ref[...],
        dimension_numbers=(((1,), (0,)), ((), ())),
        preferred_element_type=jnp.float32)                     # (48, HW) f32
    o_ref[0, 16:40, :] = (z[0:24] + bias[48:72]).astype(o_ref.dtype)   # branch5x5
    u3 = (z[24:48] + bias[72:96]).astype(jnp.bfloat16)          # (24, HW) bf16

    # ---- branch3x3dbl_3: 3x3 conv on u3 via a 216-row bf16 im2col slab ------
    hvar3 = {}
    for dw in (-1, 0, 1):
        h = _flat_shift(u3, dw)
        if dw:
            h = h * mb[dw]
        hvar3[dw] = h
    for kh in range(3):
        dh = kh - 1
        for kw in range(3):
            t = kh * 3 + kw
            colB_ref[t * 24:(t + 1) * 24, :] = _flat_shift(hvar3[kw - 1], dh * W)
    o3 = jax.lax.dot_general(
        w3b_ref[...], colB_ref[...],
        dimension_numbers=(((1,), (0,)), ((), ())),
        preferred_element_type=jnp.float32) + bias[96:120]
    o_ref[0, 40:64, :] = o3.astype(o_ref.dtype)                 # branch3x3dbl

    # ---- branch_pool: avg_pool2d(3,1,1) fused as 9-tap shift-sum (1/9 is ----
    # ---- pre-folded into the 1x1 weights; sum kept in f32) ------------------
    tp = y_ref[32:56, :]                                        # (24, HW) f32
    hp = {}
    for dw in (-1, 0, 1):
        h = _flat_shift(tp, dw)
        if dw:
            h = h * mf[dw]
        hp[dw] = h
    op = None
    for dh in (-1, 0, 1):
        for dw in (-1, 0, 1):
            term = _flat_shift(hp[dw], dh * W)
            op = term if op is None else op + term
    o_ref[0, 64:88, :] = (op + bias[120:144]).astype(o_ref.dtype)


# ----------------------------------------------------------------------------
# Parameter init (HWIO, PyTorch-default-like kaiming-uniform bounds)
# ----------------------------------------------------------------------------
def _conv_init(key, kh, kw, cin, cout):
    kw_key, kb_key = jax.random.split(key)
    bound = 1.0 / (cin * kh * kw) ** 0.5
    w = jax.random.uniform(kw_key, (kh, kw, cin, cout), jnp.float32, -bound, bound)
    b = jax.random.uniform(kb_key, (cout,), jnp.float32, -bound, bound)
    return w, b


def init_inception_a_params(key, in_channels):
    ks = jax.random.split(key, 7)
    return {
        "branch1x1":      _conv_init(ks[0], 1, 1, in_channels, 16),
        "branch5x5_1":    _conv_init(ks[1], 1, 1, in_channels, 16),
        "branch5x5_2":    _conv_init(ks[2], 5, 5, 16, 24),
        "branch3x3dbl_1": _conv_init(ks[3], 1, 1, in_channels, 16),
        "branch3x3dbl_2": _conv_init(ks[4], 3, 3, 16, 24),
        "branch3x3dbl_3": _conv_init(ks[5], 3, 3, 24, 24),
        "branch_pool":    _conv_init(ks[6], 1, 1, in_channels, 24),
    }


def prepare_inception_a_params(params):
    """Fold raw HWIO params into fused, MXU-shaped bf16 matrices (done once)."""
    def flat(w):  # (KH, KW, Cin, Cout) -> (Cout, KH*KW*Cin), tap-major rows
        kh, kw, ci, co = w.shape
        return jnp.transpose(w, (3, 0, 1, 2)).reshape(co, kh * kw * ci)

    w1, b1 = params["branch1x1"]
    w51, b51 = params["branch5x5_1"]
    w52, b52 = params["branch5x5_2"]
    w31, b31 = params["branch3x3dbl_1"]
    w32, b32 = params["branch3x3dbl_2"]
    w33, b33 = params["branch3x3dbl_3"]
    wp, bp = params["branch_pool"]

    # Four 1x1 convs fused into one matrix; pool's 1/9 scale folded in.
    wall = jnp.concatenate(
        [flat(w1), flat(w51), flat(w31), flat(wp) * (1.0 / 9.0)], axis=0)

    # Merged weight for branch5x5_2 (out rows 0:24) + branch3x3dbl_2 (24:48)
    # over a single 25-tap x 32-channel ([t5 | t3]) im2col slab.  The 3x3
    # weight occupies only the 9 central taps / last 16 channels; zeros
    # elsewhere make the merge numerically exact.
    blocks = []
    for kh in range(5):
        for kw in range(5):
            blk = jnp.zeros((48, 32), jnp.float32)
            blk = blk.at[0:24, 0:16].set(w52[kh, kw].T)          # (24, 16)
            if 1 <= kh <= 3 and 1 <= kw <= 3:
                blk = blk.at[24:48, 16:32].set(w32[kh - 1, kw - 1].T)
            blocks.append(blk)
    wbig = jnp.concatenate(blocks, axis=1)                        # (48, 800)

    ball = jnp.concatenate([b1, b51, b31, b52, b32, b33, bp]).reshape(-1, 1)
    return {
        "wall": wall.astype(jnp.bfloat16),        # (72, Cin)
        "wbig": wbig.astype(jnp.bfloat16),        # (48, 800)
        "w3b":  flat(w33).astype(jnp.bfloat16),   # (24, 216)
        "ball": ball.astype(jnp.float32),         # (144, 1)
    }


# ----------------------------------------------------------------------------
# Forward (matches torch InceptionA.forward; input/output are NCHW)
# ----------------------------------------------------------------------------
def inception_a_forward(x_nchw, prep):
    N, Cin, H, W = x_nchw.shape
    HW = H * W
    x3 = x_nchw.reshape(N, Cin, HW).astype(jnp.bfloat16)

    # Column-validity masks for horizontal tap offsets dw in {-2..2}.
    col = jax.lax.broadcasted_iota(jnp.int32, (1, HW), 1) % W
    mcol = jnp.concatenate(
        [((col + dw >= 0) & (col + dw < W)).astype(jnp.float32)
         for dw in range(-2, 3)], axis=0)                         # (5, HW)

    kern = functools.partial(_inception_kernel, H=H, W=W)
    const = lambda n: (0, 0)
    out = pl.pallas_call(
        kern,
        out_shape=jax.ShapeDtypeStruct((N, 88, HW), jnp.float32),
        grid=(N,),
        in_specs=[
            pl.BlockSpec((1, Cin, HW), lambda n: (n, 0, 0)),
            pl.BlockSpec(prep["wall"].shape, const),
            pl.BlockSpec(prep["wbig"].shape, const),
            pl.BlockSpec(prep["w3b"].shape, const),
            pl.BlockSpec(prep["ball"].shape, const),
            pl.BlockSpec((5, HW), const),
        ],
        out_specs=pl.BlockSpec((1, 88, HW), lambda n: (n, 0, 0)),
        scratch_shapes=[
            pltpu.VMEM((56, HW), jnp.float32),     # biased 1x1 results + pool pre-sum
            pltpu.VMEM((800, HW), jnp.bfloat16),   # merged 5x5 + 3x3a im2col slab
            pltpu.VMEM((216, HW), jnp.bfloat16),   # 3x3dbl_3 im2col slab
        ],
        compiler_params=pltpu.CompilerParams(
            dimension_semantics=("parallel",)),
    )(x3, prep["wall"], prep["wbig"], prep["w3b"], prep["ball"], mcol)

    return out.reshape(N, 88, H, W)


# ----------------------------------------------------------------------------
# Pure-JAX (f32) reference for correctness checking
# ----------------------------------------------------------------------------
def _ref_conv(x, w, b, padding):
    y = jax.lax.conv_general_dilated(
        x, w, window_strides=(1, 1),
        padding=((padding, padding), (padding, padding)),
        dimension_numbers=("NHWC", "HWIO", "NHWC"))
    return y + b.reshape(1, 1, 1, -1)


def inception_a_reference(x_nchw, params):
    x = jnp.transpose(x_nchw, (0, 2, 3, 1))
    b1 = _ref_conv(x, *params["branch1x1"], padding=0)
    b5 = _ref_conv(x, *params["branch5x5_1"], padding=0)
    b5 = _ref_conv(b5, *params["branch5x5_2"], padding=2)
    b3 = _ref_conv(x, *params["branch3x3dbl_1"], padding=0)
    b3 = _ref_conv(b3, *params["branch3x3dbl_2"], padding=1)
    b3 = _ref_conv(b3, *params["branch3x3dbl_3"], padding=1)
    xp = jnp.pad(x, ((0, 0), (1, 1), (1, 1), (0, 0)))
    N, H, W, C = x.shape
    pooled = sum(xp[:, kh:kh + H, kw:kw + W, :]
                 for kh in range(3) for kw in range(3)) / 9.0
    bp = _ref_conv(pooled, *params["branch_pool"], padding=0)
    out = jnp.concatenate([b1, b5, b3, bp], axis=-1)
    return jnp.transpose(out, (0, 3, 1, 2))


# ----------------------------------------------------------------------------
if __name__ == "__main__":
    key = jax.random.PRNGKey(0)
    k_x, k_p = jax.random.split(key)

    N, C_in, H, W = 2, 4, 16, 16
    x = jax.random.normal(k_x, (N, C_in, H, W), jnp.float32)   # NCHW like torch
    params = init_inception_a_params(k_p, C_in)
    prep = prepare_inception_a_params(params)

    out = jax.jit(inception_a_forward)(x, prep)
    out = jax.block_until_ready(out)
    assert out.shape == (N, 16 + 24 + 24 + 24, H, W), out.shape

    ref = jax.block_until_ready(inception_a_reference(x, params))
    max_err = float(jnp.max(jnp.abs(out - ref)))
    # bf16 MXU operands / bf16 im2col slabs with f32 accumulation -> relaxed tol.
    assert jnp.allclose(out, ref, atol=5e-2, rtol=5e-2), max_err

    print("KERNEL_OK")
</pallas_src>

<mosaic_0001>
module attributes {stable_mosaic.version = 11 : i64} {
  func.func @_inception_kernel(%arg0: i32, %arg1: memref<1x4x256xbf16, #tpu.memory_space<vmem>>, %arg2: memref<72x4xbf16, #tpu.memory_space<vmem>>, %arg3: memref<48x800xbf16, #tpu.memory_space<vmem>>, %arg4: memref<24x216xbf16, #tpu.memory_space<vmem>>, %arg5: memref<144x1xf32, #tpu.memory_space<vmem>>, %arg6: memref<5x256xf32, #tpu.memory_space<vmem>>, %arg7: memref<1x88x256xf32, #tpu.memory_space<vmem>>, %arg8: memref<56x256xf32, #tpu.memory_space<vmem>>, %arg9: memref<800x256xbf16, #tpu.memory_space<vmem>>, %arg10: memref<216x256xbf16, #tpu.memory_space<vmem>>) attributes {dimension_semantics = [#tpu.dimension_semantics<parallel>], iteration_bounds = array<i64: 2>, scalar_prefetch = 0 : i64, scratch_operands = 3 : i64, tpu.core_type = #tpu.core_type<tc>, window_params = [{transform_indices = @transform_0, window_bounds = array<i64: 1, 4, 256>}, {pipeline_mode = #tpu.pipeline_mode<synchronous>, transform_indices = @transform_1, window_bounds = array<i64: 72, 4>}, {pipeline_mode = #tpu.pipeline_mode<synchronous>, transform_indices = @transform_2, window_bounds = array<i64: 48, 800>}, {pipeline_mode = #tpu.pipeline_mode<synchronous>, transform_indices = @transform_3, window_bounds = array<i64: 24, 216>}, {pipeline_mode = #tpu.pipeline_mode<synchronous>, transform_indices = @transform_4, window_bounds = array<i64: 144, 1>}, {pipeline_mode = #tpu.pipeline_mode<synchronous>, transform_indices = @transform_5, window_bounds = array<i64: 5, 256>}, {transform_indices = @transform_6, window_bounds = array<i64: 1, 88, 256>}]} {
    %c0 = arith.constant 0 : index
    %c0_0 = arith.constant 0 : index
    %0 = vector.load %arg5[%c0, %c0_0] : memref<144x1xf32, #tpu.memory_space<vmem>>, vector<144x1xf32>
    %c0_1 = arith.constant 0 : index
    %c0_2 = arith.constant 0 : index
    %1 = vector.load %arg2[%c0_1, %c0_2] : memref<72x4xbf16, #tpu.memory_space<vmem>>, vector<72x4xbf16>
    %c0_3 = arith.constant 0 : index
    %c0_4 = arith.constant 0 : index
    %c0_5 = arith.constant 0 : index
    %2 = vector.load %arg1[%c0_3, %c0_4, %c0_5] : memref<1x4x256xbf16, #tpu.memory_space<vmem>>, vector<1x4x256xbf16>
    %3 = vector.shape_cast %2 : vector<1x4x256xbf16> to vector<4x256xbf16>
    %cst = arith.constant dense<0.000000e+00> : vector<72x256xf32>
    %4 = tpu.matmul %1, %3, %cst {dimension_numbers = #tpu.dot_dimension_numbers<[1], [0], [0], [1], [0, 0, 1, 1], [], []>} : vector<72x4xbf16>, vector<4x256xbf16>, vector<72x256xf32> -> vector<72x256xf32>
    %5 = vector.extract_strided_slice %4 {offsets = [0, 0], sizes = [16, 256], strides = [1, 1]} : vector<72x256xf32> to vector<16x256xf32>
    %6 = vector.extract_strided_slice %0 {offsets = [0, 0], sizes = [16, 1], strides = [1, 1]} : vector<144x1xf32> to vector<16x1xf32>
    %7 = vector.broadcast %6 : vector<16x1xf32> to vector<16x256xf32>
    %8 = arith.addf %5, %7 : vector<16x256xf32>
    %c0_6 = arith.constant 0 : index
    %c0_7 = arith.constant 0 : index
    %c0_8 = arith.constant 0 : index
    %9 = vector.load %arg7[%c0_6, %c0_7, %c0_8] : memref<1x88x256xf32, #tpu.memory_space<vmem>>, vector<1x16x256xf32>
    %10 = vector.shape_cast %9 : vector<1x16x256xf32> to vector<16x256xf32>
    %11 = vector.shape_cast %8 : vector<16x256xf32> to vector<1x16x256xf32>
    tpu.vector_store %arg7[%c0_6, %c0_7, %c0_8], %11 {strides = array<i32>} : memref<1x88x256xf32, #tpu.memory_space<vmem>>, vector<1x16x256xf32>,
    %12 = vector.extract_strided_slice %4 {offsets = [16, 0], sizes = [32, 256], strides = [1, 1]} : vector<72x256xf32> to vector<32x256xf32>
    %13 = vector.extract_strided_slice %0 {offsets = [16, 0], sizes = [32, 1], strides = [1, 1]} : vector<144x1xf32> to vector<32x1xf32>
    %14 = vector.broadcast %13 : vector<32x1xf32> to vector<32x256xf32>
    %15 = arith.addf %12, %14 : vector<32x256xf32>
    %c0_9 = arith.constant 0 : index
    %c0_10 = arith.constant 0 : index
    %16 = vector.load %arg8[%c0_9, %c0_10] : memref<56x256xf32, #tpu.memory_space<vmem>>, vector<32x256xf32>
    tpu.vector_store %arg8[%c0_9, %c0_10], %15 {strides = array<i32>} : memref<56x256xf32, #tpu.memory_space<vmem>>, vector<32x256xf32>,
    %17 = vector.extract_strided_slice %4 {offsets = [48, 0], sizes = [24, 256], strides = [1, 1]} : vector<72x256xf32> to vector<24x256xf32>
    %c32 = arith.constant 32 : index
    %c0_11 = arith.constant 0 : index
    %18 = vector.load %arg8[%c32, %c0_11] : memref<56x256xf32, #tpu.memory_space<vmem>>, vector<24x256xf32>
    tpu.vector_store %arg8[%c32, %c0_11], %17 {strides = array<i32>} : memref<56x256xf32, #tpu.memory_space<vmem>>, vector<24x256xf32>,
    %c0_12 = arith.constant 0 : index
    %c0_13 = arith.constant 0 : index
    %19 = vector.load %arg6[%c0_12, %c0_13] : memref<5x256xf32, #tpu.memory_space<vmem>>, vector<1x256xf32>
    %c1 = arith.constant 1 : index
    %c0_14 = arith.constant 0 : index
    %20 = vector.load %arg6[%c1, %c0_14] : memref<5x256xf32, #tpu.memory_space<vmem>>, vector<1x256xf32>
    %c3 = arith.constant 3 : index
    %c0_15 = arith.constant 0 : index
    %21 = vector.load %arg6[%c3, %c0_15] : memref<5x256xf32, #tpu.memory_space<vmem>>, vector<1x256xf32>
    %c4 = arith.constant 4 : index
    %c0_16 = arith.constant 0 : index
    %22 = vector.load %arg6[%c4, %c0_16] : memref<5x256xf32, #tpu.memory_space<vmem>>, vector<1x256xf32>
    %23 = arith.truncf %19 : vector<1x256xf32> to vector<1x256xbf16>
    %24 = arith.truncf %20 : vector<1x256xf32> to vector<1x256xbf16>
    %25 = arith.truncf %21 : vector<1x256xf32> to vector<1x256xbf16>
    %26 = arith.truncf %22 : vector<1x256xf32> to vector<1x256xbf16>
    %c0_17 = arith.constant 0 : index
    %c0_18 = arith.constant 0 : index
    %27 = vector.load %arg8[%c0_17, %c0_18] : memref<56x256xf32, #tpu.memory_space<vmem>>, vector<32x256xf32>
    %28 = arith.truncf %27 : vector<32x256xf32> to vector<32x256xbf16>
    %cst_19 = arith.constant 0.000000e+00 : bf16
    %29 = vector.broadcast %cst_19 : bf16 to vector<32x2xbf16>
    %30 = vector.extract_strided_slice %28 {offsets = [0, 0], sizes = [32, 254], strides = [1, 1]} : vector<32x256xbf16> to vector<32x254xbf16>
    %31 = tpu.concatenate %29, %30 in 1 : vector<32x2xbf16>, vector<32x254xbf16> -> vector<32x256xbf16>
    %32 = vector.broadcast %23 : vector<1x256xbf16> to vector<32x256xbf16>
    %33 = arith.mulf %31, %32 : vector<32x256xbf16>
    %cst_20 = arith.constant 0.000000e+00 : bf16
    %34 = vector.broadcast %cst_20 : bf16 to vector<32x1xbf16>
    %35 = vector.extract_strided_slice %28 {offsets = [0, 0], sizes = [32, 255], strides = [1, 1]} : vector<32x256xbf16> to vector<32x255xbf16>
    %36 = tpu.concatenate %34, %35 in 1 : vector<32x1xbf16>, vector<32x255xbf16> -> vector<32x256xbf16>
    %37 = vector.broadcast %24 : vector<1x256xbf16> to vector<32x256xbf16>
    %38 = arith.mulf %36, %37 : vector<32x256xbf16>
    %cst_21 = arith.constant 0.000000e+00 : bf16
    %39 = vector.broadcast %cst_21 : bf16 to vector<32x1xbf16>
    %40 = vector.extract_strided_slice %28 {offsets = [0, 1], sizes = [32, 255], strides = [1, 1]} : vector<32x256xbf16> to vector<32x255xbf16>
    %41 = tpu.concatenate %40, %39 in 1 : vector<32x255xbf16>, vector<32x1xbf16> -> vector<32x256xbf16>
    %42 = vector.broadcast %25 : vector<1x256xbf16> to vector<32x256xbf16>
    %43 = arith.mulf %41, %42 : vector<32x256xbf16>
    %cst_22 = arith.constant 0.000000e+00 : bf16
    %44 = vector.broadcast %cst_22 : bf16 to vector<32x2xbf16>
    %45 = vector.extract_strided_slice %28 {offsets = [0, 2], sizes = [32, 254], strides = [1, 1]} : vector<32x256xbf16> to vector<32x254xbf16>
    %46 = tpu.concatenate %45, %44 in 1 : vector<32x254xbf16>, vector<32x2xbf16> -> vector<32x256xbf16>
    %47 = vector.broadcast %26 : vector<1x256xbf16> to vector<32x256xbf16>
    %48 = arith.mulf %46, %47 : vector<32x256xbf16>
    %cst_23 = arith.constant 0.000000e+00 : bf16
    %49 = vector.broadcast %cst_23 : bf16 to vector<32x32xbf16>
    %50 = vector.extract_strided_slice %33 {offsets = [0, 0], sizes = [32, 224], strides = [1, 1]} : vector<32x256xbf16> to vector<32x224xbf16>
    %51 = tpu.concatenate %49, %50 in 1 : vector<32x32xbf16>, vector<32x224xbf16> -> vector<32x256xbf16>
    %c0_24 = arith.constant 0 : index
    %c0_25 = arith.constant 0 : index
    %52 = vector.load %arg9[%c0_24, %c0_25] : memref<800x256xbf16, #tpu.memory_space<vmem>>, vector<32x256xbf16>
    tpu.vector_store %arg9[%c0_24, %c0_25], %51 {strides = array<i32>} : memref<800x256xbf16, #tpu.memory_space<vmem>>, vector<32x256xbf16>,
    %cst_26 = arith.constant 0.000000e+00 : bf16
    %53 = vector.broadcast %cst_26 : bf16 to vector<32x32xbf16>
    %54 = vector.extract_strided_slice %38 {offsets = [0, 0], sizes = [32, 224], strides = [1, 1]} : vector<32x256xbf16> to vector<32x224xbf16>
    %55 = tpu.concatenate %53, %54 in 1 : vector<32x32xbf16>, vector<32x224xbf16> -> vector<32x256xbf16>
    %c32_27 = arith.constant 32 : index
    %c0_28 = arith.constant 0 : index
    %56 = vector.load %arg9[%c32_27, %c0_28] : memref<800x256xbf16, #tpu.memory_space<vmem>>, vector<32x256xbf16>
    tpu.vector_store %arg9[%c32_27, %c0_28], %55 {strides = array<i32>} : memref<800x256xbf16, #tpu.memory_space<vmem>>, vector<32x256xbf16>,
    %cst_29 = arith.constant 0.000000e+00 : bf16
    %57 = vector.broadcast %cst_29 : bf16 to vector<32x32xbf16>
    %58 = vector.extract_strided_slice %28 {offsets = [0, 0], sizes = [32, 224], strides = [1, 1]} : vector<32x256xbf16> to vector<32x224xbf16>
    %59 = tpu.concatenate %57, %58 in 1 : vector<32x32xbf16>, vector<32x224xbf16> -> vector<32x256xbf16>
    %c64 = arith.constant 64 : index
    %c0_30 = arith.constant 0 : index
    %60 = vector.load %arg9[%c64, %c0_30] : memref<800x256xbf16, #tpu.memory_space<vmem>>, vector<32x256xbf16>
    tpu.vector_store %arg9[%c64, %c0_30], %59 {strides = array<i32>} : memref<800x256xbf16, #tpu.memory_space<vmem>>, vector<32x256xbf16>,
    %cst_31 = arith.constant 0.000000e+00 : bf16
    %61 = vector.broadcast %cst_31 : bf16 to vector<32x32xbf16>
    %62 = vector.extract_strided_slice %43 {offsets = [0, 0], sizes = [32, 224], strides = [1, 1]} : vector<32x256xbf16> to vector<32x224xbf16>
    %63 = tpu.concatenate %61, %62 in 1 : vector<32x32xbf16>, vector<32x224xbf16> -> vector<32x256xbf16>
    %c96 = arith.constant 96 : index
    %c0_32 = arith.constant 0 : index
    %64 = vector.load %arg9[%c96, %c0_32] : memref<800x256xbf16, #tpu.memory_space<vmem>>, vector<32x256xbf16>
    tpu.vector_store %arg9[%c96, %c0_32], %63 {strides = array<i32>} : memref<800x256xbf16, #tpu.memory_space<vmem>>, vector<32x256xbf16>,
    %cst_33 = arith.constant 0.000000e+00 : bf16
    %65 = vector.broadcast %cst_33 : bf16 to vector<32x32xbf16>
    %66 = vector.extract_strided_slice %48 {offsets = [0, 0], sizes = [32, 224], strides = [1, 1]} : vector<32x256xbf16> to vector<32x224xbf16>
    %67 = tpu.concatenate %65, %66 in 1 : vector<32x32xbf16>, vector<32x224xbf16> -> vector<32x256xbf16>
    %c128 = arith.constant 128 : index
    %c0_34 = arith.constant 0 : index
    %68 = vector.load %arg9[%c128, %c0_34] : memref<800x256xbf16, #tpu.memory_space<vmem>>, vector<32x256xbf16>
    tpu.vector_store %arg9[%c128, %c0_34], %67 {strides = array<i32>} : memref<800x256xbf16, #tpu.memory_space<vmem>>, vector<32x256xbf16>,
    %cst_35 = arith.constant 0.000000e+00 : bf16
    %69 = vector.broadcast %cst_35 : bf16 to vector<32x16xbf16>
    %70 = vector.extract_strided_slice %33 {offsets = [0, 0], sizes = [32, 240], strides = [1, 1]} : vector<32x256xbf16> to vector<32x240xbf16>
    %71 = tpu.concatenate %69, %70 in 1 : vector<32x16xbf16>, vector<32x240xbf16> -> vector<32x256xbf16>
    %c160 = arith.constant 160 : index
    %c0_36 = arith.constant 0 : index
    %72 = vector.load %arg9[%c160, %c0_36] : memref<800x256xbf16, #tpu.memory_space<vmem>>, vector<32x256xbf16>
    tpu.vector_store %arg9[%c160, %c0_36], %71 {strides = array<i32>} : memref<800x256xbf16, #tpu.memory_space<vmem>>, vector<32x256xbf16>,
    %cst_37 = arith.constant 0.000000e+00 : bf16
    %73 = vector.broadcast %cst_37 : bf16 to vector<32x16xbf16>
    %74 = vector.extract_strided_slice %38 {offsets = [0, 0], sizes = [32, 240], strides = [1, 1]} : vector<32x256xbf16> to vector<32x240xbf16>
    %75 = tpu.concatenate %73, %74 in 1 : vector<32x16xbf16>, vector<32x240xbf16> -> vector<32x256xbf16>
    %c192 = arith.constant 192 : index
    %c0_38 = arith.constant 0 : index
    %76 = vector.load %arg9[%c192, %c0_38] : memref<800x256xbf16, #tpu.memory_space<vmem>>, vector<32x256xbf16>
    tpu.vector_store %arg9[%c192, %c0_38], %75 {strides = array<i32>} : memref<800x256xbf16, #tpu.memory_space<vmem>>, vector<32x256xbf16>,
    %cst_39 = arith.constant 0.000000e+00 : bf16
    %77 = vector.broadcast %cst_39 : bf16 to vector<32x16xbf16>
    %78 = vector.extract_strided_slice %28 {offsets = [0, 0], sizes = [32, 240], strides = [1, 1]} : vector<32x256xbf16> to vector<32x240xbf16>
    %79 = tpu.concatenate %77, %78 in 1 : vector<32x16xbf16>, vector<32x240xbf16> -> vector<32x256xbf16>
    %c224 = arith.constant 224 : index
    %c0_40 = arith.constant 0 : index
    %80 = vector.load %arg9[%c224, %c0_40] : memref<800x256xbf16, #tpu.memory_space<vmem>>, vector<32x256xbf16>
    tpu.vector_store %arg9[%c224, %c0_40], %79 {strides = array<i32>} : memref<800x256xbf16, #tpu.memory_space<vmem>>, vector<32x256xbf16>,
    %cst_41 = arith.constant 0.000000e+00 : bf16
    %81 = vector.broadcast %cst_41 : bf16 to vector<32x16xbf16>
    %82 = vector.extract_strided_slice %43 {offsets = [0, 0], sizes = [32, 240], strides = [1, 1]} : vector<32x256xbf16> to vector<32x240xbf16>
    %83 = tpu.concatenate %81, %82 in 1 : vector<32x16xbf16>, vector<32x240xbf16> -> vector<32x256xbf16>
    %c256 = arith.constant 256 : index
    %c0_42 = arith.constant 0 : index
    %84 = vector.load %arg9[%c256, %c0_42] : memref<800x256xbf16, #tpu.memory_space<vmem>>, vector<32x256xbf16>
    tpu.vector_store %arg9[%c256, %c0_42], %83 {strides = array<i32>} : memref<800x256xbf16, #tpu.memory_space<vmem>>, vector<32x256xbf16>,
    %cst_43 = arith.constant 0.000000e+00 : bf16
    %85 = vector.broadcast %cst_43 : bf16 to vector<32x16xbf16>
    %86 = vector.extract_strided_slice %48 {offsets = [0, 0], sizes = [32, 240], strides = [1, 1]} : vector<32x256xbf16> to vector<32x240xbf16>
    %87 = tpu.concatenate %85, %86 in 1 : vector<32x16xbf16>, vector<32x240xbf16> -> vector<32x256xbf16>
    %c288 = arith.constant 288 : index
    %c0_44 = arith.constant 0 : index
    %88 = vector.load %arg9[%c288, %c0_44] : memref<800x256xbf16, #tpu.memory_space<vmem>>, vector<32x256xbf16>
    tpu.vector_store %arg9[%c288, %c0_44], %87 {strides = array<i32>} : memref<800x256xbf16, #tpu.memory_space<vmem>>, vector<32x256xbf16>,
    %c320 = arith.constant 320 : index
    %c0_45 = arith.constant 0 : index
    %89 = vector.load %arg9[%c320, %c0_45] : memref<800x256xbf16, #tpu.memory_space<vmem>>, vector<32x256xbf16>
    tpu.vector_store %arg9[%c320, %c0_45], %33 {strides = array<i32>} : memref<800x256xbf16, #tpu.memory_space<vmem>>, vector<32x256xbf16>,
    %c352 = arith.constant 352 : index
    %c0_46 = arith.constant 0 : index
    %90 = vector.load %arg9[%c352, %c0_46] : memref<800x256xbf16, #tpu.memory_space<vmem>>, vector<32x256xbf16>
    tpu.vector_store %arg9[%c352, %c0_46], %38 {strides = array<i32>} : memref<800x256xbf16, #tpu.memory_space<vmem>>, vector<32x256xbf16>,
    %c384 = arith.constant 384 : index
    %c0_47 = arith.constant 0 : index
    %91 = vector.load %arg9[%c384, %c0_47] : memref<800x256xbf16, #tpu.memory_space<vmem>>, vector<32x256xbf16>
    tpu.vector_store %arg9[%c384, %c0_47], %28 {strides = array<i32>} : memref<800x256xbf16, #tpu.memory_space<vmem>>, vector<32x256xbf16>,
    %c416 = arith.constant 416 : index
    %c0_48 = arith.constant 0 : index
    %92 = vector.load %arg9[%c416, %c0_48] : memref<800x256xbf16, #tpu.memory_space<vmem>>, vector<32x256xbf16>
    tpu.vector_store %arg9[%c416, %c0_48], %43 {strides = array<i32>} : memref<800x256xbf16, #tpu.memory_space<vmem>>, vector<32x256xbf16>,
    %c448 = arith.constant 448 : index
    %c0_49 = arith.constant 0 : index
    %93 = vector.load %arg9[%c448, %c0_49] : memref<800x256xbf16, #tpu.memory_space<vmem>>, vector<32x256xbf16>
    tpu.vector_store %arg9[%c448, %c0_49], %48 {strides = array<i32>} : memref<800x256xbf16, #tpu.memory_space<vmem>>, vector<32x256xbf16>,
    %cst_50 = arith.constant 0.000000e+00 : bf16
    %94 = vector.broadcast %cst_50 : bf16 to vector<32x16xbf16>
    %95 = vector.extract_strided_slice %33 {offsets = [0, 16], sizes = [32, 240], strides = [1, 1]} : vector<32x256xbf16> to vector<32x240xbf16>
    %96 = tpu.concatenate %95, %94 in 1 : vector<32x240xbf16>, vector<32x16xbf16> -> vector<32x256xbf16>
    %c480 = arith.constant 480 : index
    %c0_51 = arith.constant 0 : index
    %97 = vector.load %arg9[%c480, %c0_51] : memref<800x256xbf16, #tpu.memory_space<vmem>>, vector<32x256xbf16>
    tpu.vector_store %arg9[%c480, %c0_51], %96 {strides = array<i32>} : memref<800x256xbf16, #tpu.memory_space<vmem>>, vector<32x256xbf16>,
    %cst_52 = arith.constant 0.000000e+00 : bf16
    %98 = vector.broadcast %cst_52 : bf16 to vector<32x16xbf16>
    %99 = vector.extract_strided_slice %38 {offsets = [0, 16], sizes = [32, 240], strides = [1, 1]} : vector<32x256xbf16> to vector<32x240xbf16>
    %100 = tpu.concatenate %99, %98 in 1 : vector<32x240xbf16>, vector<32x16xbf16> -> vector<32x256xbf16>
    %c512 = arith.constant 512 : index
    %c0_53 = arith.constant 0 : index
    %101 = vector.load %arg9[%c512, %c0_53] : memref<800x256xbf16, #tpu.memory_space<vmem>>, vector<32x256xbf16>
    tpu.vector_store %arg9[%c512, %c0_53], %100 {strides = array<i32>} : memref<800x256xbf16, #tpu.memory_space<vmem>>, vector<32x256xbf16>,
    %cst_54 = arith.constant 0.000000e+00 : bf16
    %102 = vector.broadcast %cst_54 : bf16 to vector<32x16xbf16>
    %103 = vector.extract_strided_slice %28 {offsets = [0, 16], sizes = [32, 240], strides = [1, 1]} : vector<32x256xbf16> to vector<32x240xbf16>
    %104 = tpu.concatenate %103, %102 in 1 : vector<32x240xbf16>, vector<32x16xbf16> -> vector<32x256xbf16>
    %c544 = arith.constant 544 : index
    %c0_55 = arith.constant 0 : index
    %105 = vector.load %arg9[%c544, %c0_55] : memref<800x256xbf16, #tpu.memory_space<vmem>>, vector<32x256xbf16>
    tpu.vector_store %arg9[%c544, %c0_55], %104 {strides = array<i32>} : memref<800x256xbf16, #tpu.memory_space<vmem>>, vector<32x256xbf16>,
    %cst_56 = arith.constant 0.000000e+00 : bf16
    %106 = vector.broadcast %cst_56 : bf16 to vector<32x16xbf16>
    %107 = vector.extract_strided_slice %43 {offsets = [0, 16], sizes = [32, 240], strides = [1, 1]} : vector<32x256xbf16> to vector<32x240xbf16>
    %108 = tpu.concatenate %107, %106 in 1 : vector<32x240xbf16>, vector<32x16xbf16> -> vector<32x256xbf16>
    %c576 = arith.constant 576 : index
    %c0_57 = arith.constant 0 : index
    %109 = vector.load %arg9[%c576, %c0_57] : memref<800x256xbf16, #tpu.memory_space<vmem>>, vector<32x256xbf16>
    tpu.vector_store %arg9[%c576, %c0_57], %108 {strides = array<i32>} : memref<800x256xbf16, #tpu.memory_space<vmem>>, vector<32x256xbf16>,
    %cst_58 = arith.constant 0.000000e+00 : bf16
    %110 = vector.broadcast %cst_58 : bf16 to vector<32x16xbf16>
    %111 = vector.extract_strided_slice %48 {offsets = [0, 16], sizes = [32, 240], strides = [1, 1]} : vector<32x256xbf16> to vector<32x240xbf16>
    %112 = tpu.concatenate %111, %110 in 1 : vector<32x240xbf16>, vector<32x16xbf16> -> vector<32x256xbf16>
    %c608 = arith.constant 608 : index
    %c0_59 = arith.constant 0 : index
    %113 = vector.load %arg9[%c608, %c0_59] : memref<800x256xbf16, #tpu.memory_space<vmem>>, vector<32x256xbf16>
    tpu.vector_store %arg9[%c608, %c0_59], %112 {strides = array<i32>} : memref<800x256xbf16, #tpu.memory_space<vmem>>, vector<32x256xbf16>,
    %cst_60 = arith.constant 0.000000e+00 : bf16
    %114 = vector.broadcast %cst_60 : bf16 to vector<32x32xbf16>
    %115 = vector.extract_strided_slice %33 {offsets = [0, 32], sizes = [32, 224], strides = [1, 1]} : vector<32x256xbf16> to vector<32x224xbf16>
    %116 = tpu.concatenate %115, %114 in 1 : vector<32x224xbf16>, vector<32x32xbf16> -> vector<32x256xbf16>
    %c640 = arith.constant 640 : index
    %c0_61 = arith.constant 0 : index
    %117 = vector.load %arg9[%c640, %c0_61] : memref<800x256xbf16, #tpu.memory_space<vmem>>, vector<32x256xbf16>
    tpu.vector_store %arg9[%c640, %c0_61], %116 {strides = array<i32>} : memref<800x256xbf16, #tpu.memory_space<vmem>>, vector<32x256xbf16>,
    %cst_62 = arith.constant 0.000000e+00 : bf16
    %118 = vector.broadcast %cst_62 : bf16 to vector<32x32xbf16>
    %119 = vector.extract_strided_slice %38 {offsets = [0, 32], sizes = [32, 224], strides = [1, 1]} : vector<32x256xbf16> to vector<32x224xbf16>
    %120 = tpu.concatenate %119, %118 in 1 : vector<32x224xbf16>, vector<32x32xbf16> -> vector<32x256xbf16>
    %c672 = arith.constant 672 : index
    %c0_63 = arith.constant 0 : index
    %121 = vector.load %arg9[%c672, %c0_63] : memref<800x256xbf16, #tpu.memory_space<vmem>>, vector<32x256xbf16>
    tpu.vector_store %arg9[%c672, %c0_63], %120 {strides = array<i32>} : memref<800x256xbf16, #tpu.memory_space<vmem>>, vector<32x256xbf16>,
    %cst_64 = arith.constant 0.000000e+00 : bf16
    %122 = vector.broadcast %cst_64 : bf16 to vector<32x32xbf16>
    %123 = vector.extract_strided_slice %28 {offsets = [0, 32], sizes = [32, 224], strides = [1, 1]} : vector<32x256xbf16> to vector<32x224xbf16>
    %124 = tpu.concatenate %123, %122 in 1 : vector<32x224xbf16>, vector<32x32xbf16> -> vector<32x256xbf16>
    %c704 = arith.constant 704 : index
    %c0_65 = arith.constant 0 : index
    %125 = vector.load %arg9[%c704, %c0_65] : memref<800x256xbf16, #tpu.memory_space<vmem>>, vector<32x256xbf16>
    tpu.vector_store %arg9[%c704, %c0_65], %124 {strides = array<i32>} : memref<800x256xbf16, #tpu.memory_space<vmem>>, vector<32x256xbf16>,
    %cst_66 = arith.constant 0.000000e+00 : bf16
    %126 = vector.broadcast %cst_66 : bf16 to vector<32x32xbf16>
    %127 = vector.extract_strided_slice %43 {offsets = [0, 32], sizes = [32, 224], strides = [1, 1]} : vector<32x256xbf16> to vector<32x224xbf16>
    %128 = tpu.concatenate %127, %126 in 1 : vector<32x224xbf16>, vector<32x32xbf16> -> vector<32x256xbf16>
    %c736 = arith.constant 736 : index
    %c0_67 = arith.constant 0 : index
    %129 = vector.load %arg9[%c736, %c0_67] : memref<800x256xbf16, #tpu.memory_space<vmem>>, vector<32x256xbf16>
    tpu.vector_store %arg9[%c736, %c0_67], %128 {strides = array<i32>} : memref<800x256xbf16, #tpu.memory_space<vmem>>, vector<32x256xbf16>,
    %cst_68 = arith.constant 0.000000e+00 : bf16
    %130 = vector.broadcast %cst_68 : bf16 to vector<32x32xbf16>
    %131 = vector.extract_strided_slice %48 {offsets = [0, 32], sizes = [32, 224], strides = [1, 1]} : vector<32x256xbf16> to vector<32x224xbf16>
    %132 = tpu.concatenate %131, %130 in 1 : vector<32x224xbf16>, vector<32x32xbf16> -> vector<32x256xbf16>
    %c768 = arith.constant 768 : index
    %c0_69 = arith.constant 0 : index
    %133 = vector.load %arg9[%c768, %c0_69] : memref<800x256xbf16, #tpu.memory_space<vmem>>, vector<32x256xbf16>
    tpu.vector_store %arg9[%c768, %c0_69], %132 {strides = array<i32>} : memref<800x256xbf16, #tpu.memory_space<vmem>>, vector<32x256xbf16>,
    %c0_70 = arith.constant 0 : index
    %c0_71 = arith.constant 0 : index
    %134 = vector.load %arg3[%c0_70, %c0_71] : memref<48x800xbf16, #tpu.memory_space<vmem>>, vector<48x800xbf16>
    %c0_72 = arith.constant 0 : index
    %c0_73 = arith.constant 0 : index
    %135 = vector.load %arg9[%c0_72, %c0_73] : memref<800x256xbf16, #tpu.memory_space<vmem>>, vector<800x256xbf16>
    %cst_74 = arith.constant dense<0.000000e+00> : vector<48x256xf32>
    %136 = tpu.matmul %134, %135, %cst_74 {dimension_numbers = #tpu.dot_dimension_numbers<[1], [0], [0], [1], [0, 0, 1, 1], [], []>} : vector<48x800xbf16>, vector<800x256xbf16>, vector<48x256xf32> -> vector<48x256xf32>
    %137 = vector.extract_strided_slice %136 {offsets = [0, 0], sizes = [24, 256], strides = [1, 1]} : vector<48x256xf32> to vector<24x256xf32>
    %138 = vector.extract_strided_slice %0 {offsets = [48, 0], sizes = [24, 1], strides = [1, 1]} : vector<144x1xf32> to vector<24x1xf32>
    %139 = vector.broadcast %138 : vector<24x1xf32> to vector<24x256xf32>
    %140 = arith.addf %137, %139 : vector<24x256xf32>
    %c0_75 = arith.constant 0 : index
    %c16 = arith.constant 16 : index
    %c0_76 = arith.constant 0 : index
    %141 = vector.load %arg7[%c0_75, %c16, %c0_76] : memref<1x88x256xf32, #tpu.memory_space<vmem>>, vector<1x24x256xf32>
    %142 = vector.shape_cast %141 : vector<1x24x256xf32> to vector<24x256xf32>
    %143 = vector.shape_cast %140 : vector<24x256xf32> to vector<1x24x256xf32>
    tpu.vector_store %arg7[%c0_75, %c16, %c0_76], %143 {strides = array<i32>} : memref<1x88x256xf32, #tpu.memory_space<vmem>>, vector<1x24x256xf32>,
    %144 = vector.extract_strided_slice %136 {offsets = [24, 0], sizes = [24, 256], strides = [1, 1]} : vector<48x256xf32> to vector<24x256xf32>
    %145 = vector.extract_strided_slice %0 {offsets = [72, 0], sizes = [24, 1], strides = [1, 1]} : vector<144x1xf32> to vector<24x1xf32>
    %146 = vector.broadcast %145 : vector<24x1xf32> to vector<24x256xf32>
    %147 = arith.addf %144, %146 : vector<24x256xf32>
    %148 = arith.truncf %147 : vector<24x256xf32> to vector<24x256xbf16>
    %cst_77 = arith.constant 0.000000e+00 : bf16
    %149 = vector.broadcast %cst_77 : bf16 to vector<24x1xbf16>
    %150 = vector.extract_strided_slice %148 {offsets = [0, 0], sizes = [24, 255], strides = [1, 1]} : vector<24x256xbf16> to vector<24x255xbf16>
    %151 = tpu.concatenate %149, %150 in 1 : vector<24x1xbf16>, vector<24x255xbf16> -> vector<24x256xbf16>
    %152 = vector.broadcast %24 : vector<1x256xbf16> to vector<24x256xbf16>
    %153 = arith.mulf %151, %152 : vector<24x256xbf16>
    %cst_78 = arith.constant 0.000000e+00 : bf16
    %154 = vector.broadcast %cst_78 : bf16 to vector<24x1xbf16>
    %155 = vector.extract_strided_slice %148 {offsets = [0, 1], sizes = [24, 255], strides = [1, 1]} : vector<24x256xbf16> to vector<24x255xbf16>
    %156 = tpu.concatenate %155, %154 in 1 : vector<24x255xbf16>, vector<24x1xbf16> -> vector<24x256xbf16>
    %157 = vector.broadcast %25 : vector<1x256xbf16> to vector<24x256xbf16>
    %158 = arith.mulf %156, %157 : vector<24x256xbf16>
    %cst_79 = arith.constant 0.000000e+00 : bf16
    %159 = vector.broadcast %cst_79 : bf16 to vector<24x16xbf16>
    %160 = vector.extract_strided_slice %153 {offsets = [0, 0], sizes = [24, 240], strides = [1, 1]} : vector<24x256xbf16> to vector<24x240xbf16>
    %161 = tpu.concatenate %159, %160 in 1 : vector<24x16xbf16>, vector<24x240xbf16> -> vector<24x256xbf16>
    %c0_80 = arith.constant 0 : index
    %c0_81 = arith.constant 0 : index
    %162 = vector.load %arg10[%c0_80, %c0_81] : memref<216x256xbf16, #tpu.memory_space<vmem>>, vector<24x256xbf16>
    tpu.vector_store %arg10[%c0_80, %c0_81], %161 {strides = array<i32>} : memref<216x256xbf16, #tpu.memory_space<vmem>>, vector<24x256xbf16>,
    %cst_82 = arith.constant 0.000000e+00 : bf16
    %163 = vector.broadcast %cst_82 : bf16 to vector<24x16xbf16>
    %164 = vector.extract_strided_slice %148 {offsets = [0, 0], sizes = [24, 240], strides = [1, 1]} : vector<24x256xbf16> to vector<24x240xbf16>
    %165 = tpu.concatenate %163, %164 in 1 : vector<24x16xbf16>, vector<24x240xbf16> -> vector<24x256xbf16>
    %c24 = arith.constant 24 : index
    %c0_83 = arith.constant 0 : index
    %166 = vector.load %arg10[%c24, %c0_83] : memref<216x256xbf16, #tpu.memory_space<vmem>>, vector<24x256xbf16>
    tpu.vector_store %arg10[%c24, %c0_83], %165 {strides = array<i32>} : memref<216x256xbf16, #tpu.memory_space<vmem>>, vector<24x256xbf16>,
    %cst_84 = arith.constant 0.000000e+00 : bf16
    %167 = vector.broadcast %cst_84 : bf16 to vector<24x16xbf16>
    %168 = vector.extract_strided_slice %158 {offsets = [0, 0], sizes = [24, 240], strides = [1, 1]} : vector<24x256xbf16> to vector<24x240xbf16>
    %169 = tpu.concatenate %167, %168 in 1 : vector<24x16xbf16>, vector<24x240xbf16> -> vector<24x256xbf16>
    %c48 = arith.constant 48 : index
    %c0_85 = arith.constant 0 : index
    %170 = vector.load %arg10[%c48, %c0_85] : memref<216x256xbf16, #tpu.memory_space<vmem>>, vector<24x256xbf16>
    tpu.vector_store %arg10[%c48, %c0_85], %169 {strides = array<i32>} : memref<216x256xbf16, #tpu.memory_space<vmem>>, vector<24x256xbf16>,
    %c72 = arith.constant 72 : index
    %c0_86 = arith.constant 0 : index
    %171 = vector.load %arg10[%c72, %c0_86] : memref<216x256xbf16, #tpu.memory_space<vmem>>, vector<24x256xbf16>
    tpu.vector_store %arg10[%c72, %c0_86], %153 {strides = array<i32>} : memref<216x256xbf16, #tpu.memory_space<vmem>>, vector<24x256xbf16>,
    %c96_87 = arith.constant 96 : index
    %c0_88 = arith.constant 0 : index
    %172 = vector.load %arg10[%c96_87, %c0_88] : memref<216x256xbf16, #tpu.memory_space<vmem>>, vector<24x256xbf16>
    tpu.vector_store %arg10[%c96_87, %c0_88], %148 {strides = array<i32>} : memref<216x256xbf16, #tpu.memory_space<vmem>>, vector<24x256xbf16>,
    %c120 = arith.constant 120 : index
    %c0_89 = arith.constant 0 : index
    %173 = vector.load %arg10[%c120, %c0_89] : memref<216x256xbf16, #tpu.memory_space<vmem>>, vector<24x256xbf16>
    tpu.vector_store %arg10[%c120, %c0_89], %158 {strides = array<i32>} : memref<216x256xbf16, #tpu.memory_space<vmem>>, vector<24x256xbf16>,
    %cst_90 = arith.constant 0.000000e+00 : bf16
    %174 = vector.broadcast %cst_90 : bf16 to vector<24x16xbf16>
    %175 = vector.extract_strided_slice %153 {offsets = [0, 16], sizes = [24, 240], strides = [1, 1]} : vector<24x256xbf16> to vector<24x240xbf16>
    %176 = tpu.concatenate %175, %174 in 1 : vector<24x240xbf16>, vector<24x16xbf16> -> vector<24x256xbf16>
    %c144 = arith.constant 144 : index
    %c0_91 = arith.constant 0 : index
    %177 = vector.load %arg10[%c144, %c0_91] : memref<216x256xbf16, #tpu.memory_space<vmem>>, vector<24x256xbf16>
    tpu.vector_store %arg10[%c144, %c0_91], %176 {strides = array<i32>} : memref<216x256xbf16, #tpu.memory_space<vmem>>, vector<24x256xbf16>,
    %cst_92 = arith.constant 0.000000e+00 : bf16
    %178 = vector.broadcast %cst_92 : bf16 to vector<24x16xbf16>
    %179 = vector.extract_strided_slice %148 {offsets = [0, 16], sizes = [24, 240], strides = [1, 1]} : vector<24x256xbf16> to vector<24x240xbf16>
    %180 = tpu.concatenate %179, %178 in 1 : vector<24x240xbf16>, vector<24x16xbf16> -> vector<24x256xbf16>
    %c168 = arith.constant 168 : index
    %c0_93 = arith.constant 0 : index
    %181 = vector.load %arg10[%c168, %c0_93] : memref<216x256xbf16, #tpu.memory_space<vmem>>, vector<24x256xbf16>
    tpu.vector_store %arg10[%c168, %c0_93], %180 {strides = array<i32>} : memref<216x256xbf16, #tpu.memory_space<vmem>>, vector<24x256xbf16>,
    %cst_94 = arith.constant 0.000000e+00 : bf16
    %182 = vector.broadcast %cst_94 : bf16 to vector<24x16xbf16>
    %183 = vector.extract_strided_slice %158 {offsets = [0, 16], sizes = [24, 240], strides = [1, 1]} : vector<24x256xbf16> to vector<24x240xbf16>
    %184 = tpu.concatenate %183, %182 in 1 : vector<24x240xbf16>, vector<24x16xbf16> -> vector<24x256xbf16>
    %c192_95 = arith.constant 192 : index
    %c0_96 = arith.constant 0 : index
    %185 = vector.load %arg10[%c192_95, %c0_96] : memref<216x256xbf16, #tpu.memory_space<vmem>>, vector<24x256xbf16>
    tpu.vector_store %arg10[%c192_95, %c0_96], %184 {strides = array<i32>} : memref<216x256xbf16, #tpu.memory_space<vmem>>, vector<24x256xbf16>,
    %c0_97 = arith.constant 0 : index
    %c0_98 = arith.constant 0 : index
    %186 = vector.load %arg4[%c0_97, %c0_98] : memref<24x216xbf16, #tpu.memory_space<vmem>>, vector<24x216xbf16>
    %c0_99 = arith.constant 0 : index
    %c0_100 = arith.constant 0 : index
    %187 = vector.load %arg10[%c0_99, %c0_100] : memref<216x256xbf16, #tpu.memory_space<vmem>>, vector<216x256xbf16>
    %cst_101 = arith.constant dense<0.000000e+00> : vector<24x256xf32>
    %188 = tpu.matmul %186, %187, %cst_101 {dimension_numbers = #tpu.dot_dimension_numbers<[1], [0], [0], [1], [0, 0, 1, 1], [], []>} : vector<24x216xbf16>, vector<216x256xbf16>, vector<24x256xf32> -> vector<24x256xf32>
    %189 = vector.extract_strided_slice %0 {offsets = [96, 0], sizes = [24, 1], strides = [1, 1]} : vector<144x1xf32> to vector<24x1xf32>
    %190 = vector.broadcast %189 : vector<24x1xf32> to vector<24x256xf32>
    %191 = arith.addf %188, %190 : vector<24x256xf32>
    %c0_102 = arith.constant 0 : index
    %c40 = arith.constant 40 : index
    %c0_103 = arith.constant 0 : index
    %192 = vector.load %arg7[%c0_102, %c40, %c0_103] : memref<1x88x256xf32, #tpu.memory_space<vmem>>, vector<1x24x256xf32>
    %193 = vector.shape_cast %192 : vector<1x24x256xf32> to vector<24x256xf32>
    %194 = vector.shape_cast %191 : vector<24x256xf32> to vector<1x24x256xf32>
    tpu.vector_store %arg7[%c0_102, %c40, %c0_103], %194 {strides = array<i32>} : memref<1x88x256xf32, #tpu.memory_space<vmem>>, vector<1x24x256xf32>,
    %c32_104 = arith.constant 32 : index
    %c0_105 = arith.constant 0 : index
    %195 = vector.load %arg8[%c32_104, %c0_105] : memref<56x256xf32, #tpu.memory_space<vmem>>, vector<24x256xf32>
    %cst_106 = arith.constant 0.000000e+00 : f32
    %196 = vector.broadcast %cst_106 : f32 to vector<24x1xf32>
    %197 = vector.extract_strided_slice %195 {offsets = [0, 0], sizes = [24, 255], strides = [1, 1]} : vector<24x256xf32> to vector<24x255xf32>
    %198 = tpu.concatenate %196, %197 in 1 : vector<24x1xf32>, vector<24x255xf32> -> vector<24x256xf32>
    %199 = vector.broadcast %20 : vector<1x256xf32> to vector<24x256xf32>
    %200 = arith.mulf %198, %199 : vector<24x256xf32>
    %cst_107 = arith.constant 0.000000e+00 : f32
    %201 = vector.broadcast %cst_107 : f32 to vector<24x1xf32>
    %202 = vector.extract_strided_slice %195 {offsets = [0, 1], sizes = [24, 255], strides = [1, 1]} : vector<24x256xf32> to vector<24x255xf32>
    %203 = tpu.concatenate %202, %201 in 1 : vector<24x255xf32>, vector<24x1xf32> -> vector<24x256xf32>
    %204 = vector.broadcast %21 : vector<1x256xf32> to vector<24x256xf32>
    %205 = arith.mulf %203, %204 : vector<24x256xf32>
    %cst_108 = arith.constant 0.000000e+00 : f32
    %206 = vector.broadcast %cst_108 : f32 to vector<24x16xf32>
    %207 = vector.extract_strided_slice %200 {offsets = [0, 0], sizes = [24, 240], strides = [1, 1]} : vector<24x256xf32> to vector<24x240xf32>
    %208 = tpu.concatenate %206, %207 in 1 : vector<24x16xf32>, vector<24x240xf32> -> vector<24x256xf32>
    %cst_109 = arith.constant 0.000000e+00 : f32
    %209 = vector.broadcast %cst_109 : f32 to vector<24x16xf32>
    %210 = vector.extract_strided_slice %195 {offsets = [0, 0], sizes = [24, 240], strides = [1, 1]} : vector<24x256xf32> to vector<24x240xf32>
    %211 = tpu.concatenate %209, %210 in 1 : vector<24x16xf32>, vector<24x240xf32> -> vector<24x256xf32>
    %212 = arith.addf %208, %211 : vector<24x256xf32>
    %cst_110 = arith.constant 0.000000e+00 : f32
    %213 = vector.broadcast %cst_110 : f32 to vector<24x16xf32>
    %214 = vector.extract_strided_slice %205 {offsets = [0, 0], sizes = [24, 240], strides = [1, 1]} : vector<24x256xf32> to vector<24x240xf32>
    %215 = tpu.concatenate %213, %214 in 1 : vector<24x16xf32>, vector<24x240xf32> -> vector<24x256xf32>
    %216 = arith.addf %212, %215 : vector<24x256xf32>
    %217 = arith.addf %216, %200 : vector<24x256xf32>
    %218 = arith.addf %217, %195 : vector<24x256xf32>
    %219 = arith.addf %218, %205 : vector<24x256xf32>
    %cst_111 = arith.constant 0.000000e+00 : f32
    %220 = vector.broadcast %cst_111 : f32 to vector<24x16xf32>
    %221 = vector.extract_strided_slice %200 {offsets = [0, 16], sizes = [24, 240], strides = [1, 1]} : vector<24x256xf32> to vector<24x240xf32>
    %222 = tpu.concatenate %221, %220 in 1 : vector<24x240xf32>, vector<24x16xf32> -> vector<24x256xf32>
    %223 = arith.addf %219, %222 : vector<24x256xf32>
    %cst_112 = arith.constant 0.000000e+00 : f32
    %224 = vector.broadcast %cst_112 : f32 to vector<24x16xf32>
    %225 = vector.extract_strided_slice %195 {offsets = [0, 16], sizes = [24, 240], strides = [1, 1]} : vector<24x256xf32> to vector<24x240xf32>
    %226 = tpu.concatenate %225, %224 in 1 : vector<24x240xf32>, vector<24x16xf32> -> vector<24x256xf32>
    %227 = arith.addf %223, %226 : vector<24x256xf32>
    %cst_113 = arith.constant 0.000000e+00 : f32
    %228 = vector.broadcast %cst_113 : f32 to vector<24x16xf32>
    %229 = vector.extract_strided_slice %205 {offsets = [0, 16], sizes = [24, 240], strides = [1, 1]} : vector<24x256xf32> to vector<24x240xf32>
    %230 = tpu.concatenate %229, %228 in 1 : vector<24x240xf32>, vector<24x16xf32> -> vector<24x256xf32>
    %231 = arith.addf %227, %230 : vector<24x256xf32>
    %232 = vector.extract_strided_slice %0 {offsets = [120, 0], sizes = [24, 1], strides = [1, 1]} : vector<144x1xf32> to vector<24x1xf32>
    %233 = vector.broadcast %232 : vector<24x1xf32> to vector<24x256xf32>
    %234 = arith.addf %231, %233 : vector<24x256xf32>
    %c0_114 = arith.constant 0 : index
    %c64_115 = arith.constant 64 : index
    %c0_116 = arith.constant 0 : index
    %235 = vector.load %arg7[%c0_114, %c64_115, %c0_116] : memref<1x88x256xf32, #tpu.memory_space<vmem>>, vector<1x24x256xf32>
    %236 = vector.shape_cast %235 : vector<1x24x256xf32> to vector<24x256xf32>
    %237 = vector.shape_cast %234 : vector<24x256xf32> to vector<1x24x256xf32>
    tpu.vector_store %arg7[%c0_114, %c64_115, %c0_116], %237 {strides = array<i32>} : memref<1x88x256xf32, #tpu.memory_space<vmem>>, vector<1x24x256xf32>,
    return
  }
  func.func @transform_0(%arg0: i32) -> (i32, i32, i32) {
    %c0_i32 = arith.constant 0 : i32
    %c0_i32_0 = arith.constant 0 : i32
    %c0_i32_1 = arith.constant 0 : i32
    return %arg0, %c0_i32, %c0_i32_0 : i32, i32, i32
  }
  func.func @transform_1(%arg0: i32) -> (i32, i32) {
    %c0_i32 = arith.constant 0 : i32
    %c0_i32_0 = arith.constant 0 : i32
    %c0_i32_1 = arith.constant 0 : i32
    return %c0_i32, %c0_i32_0 : i32, i32
  }
  func.func @transform_2(%arg0: i32) -> (i32, i32) {
    %c0_i32 = arith.constant 0 : i32
    %c0_i32_0 = arith.constant 0 : i32
    %c0_i32_1 = arith.constant 0 : i32
    return %c0_i32, %c0_i32_0 : i32, i32
  }
  func.func @transform_3(%arg0: i32) -> (i32, i32) {
    %c0_i32 = arith.constant 0 : i32
    %c0_i32_0 = arith.constant 0 : i32
    %c0_i32_1 = arith.constant 0 : i32
    return %c0_i32, %c0_i32_0 : i32, i32
  }
  func.func @transform_4(%arg0: i32) -> (i32, i32) {
    %c0_i32 = arith.constant 0 : i32
    %c0_i32_0 = arith.constant 0 : i32
    %c0_i32_1 = arith.constant 0 : i32
    return %c0_i32, %c0_i32_0 : i32, i32
  }
  func.func @transform_5(%arg0: i32) -> (i32, i32) {
    %c0_i32 = arith.constant 0 : i32
    %c0_i32_0 = arith.constant 0 : i32
    %c0_i32_1 = arith.constant 0 : i32
    return %c0_i32, %c0_i32_0 : i32, i32
  }
  func.func @transform_6(%arg0: i32) -> (i32, i32, i32) {
    %c0_i32 = arith.constant 0 : i32
    %c0_i32_0 = arith.constant 0 : i32
    %c0_i32_1 = arith.constant 0 : i32
    return %arg0, %c0_i32, %c0_i32_0 : i32, i32, i32
  }
}

</mosaic_0001>

<llo_original>
// kernel: inception_a_forward.1
$region0: #{inception_a_forward.1}
  #allocation0 [shape = 'u32[]', space=smem, size = 0x4, offset = 0x4, fixed_abs, tag = 'smem constant byte address 0x4 - core index']
  #allocation1 [shape = 'u32[144,128]{1,0:T(1,128)}', space=vmem, size = 0x12000, scoped, tag = 'internal scratch']
  #allocation2 [shape = 'f32[56,256]{1,0:T(8,128)}', space=vmem, size = 0xe000, scoped, tag = 'scratch operand']
  #allocation3 [shape = 'bf16[800,256]{1,0:T(8,128)(2,1)}', space=vmem, size = 0x64000, scoped, tag = 'scratch operand']
  #allocation4 [shape = 'bf16[216,256]{1,0:T(8,128)(2,1)}', space=vmem, size = 0x1b000, scoped, tag = 'scratch operand']
  %s0 = inlined_call_operand.vmem [shape: bf16[2,4,256], index: 0, kind: input, shape index: {}]
  %s1 = inlined_call_operand.vmem [shape: bf16[72,4], index: 1, kind: input, shape index: {}]
  %s2 = inlined_call_operand.vmem [shape: bf16[48,800], index: 2, kind: input, shape index: {}]
  %s3 = inlined_call_operand.vmem [shape: bf16[24,216], index: 3, kind: input, shape index: {}]
  %s4 = inlined_call_operand.vmem [shape: f32[144,1], index: 4, kind: input, shape index: {}]
  %s5 = inlined_call_operand.vmem [shape: f32[5,256], index: 5, kind: input, shape index: {}]
  %s6 = inlined_call_operand.vmem [shape: f32[2,88,256], index: 6, kind: output, shape index: {}]
  %s7 = sld [smem:[#allocation0]]
  $region57: #{inception_a_forward.1} parent=0
    _
  %s9 = ssub.s32 1, %s7
  %s10 = scalar_select 0, %s9, %s7
  loop: start=0, step=1, limit=4
  $region2: #{inception_a_forward.1} parent=0 // loop_pre_header
    _
  $region3: #{inception_a_forward.1} parent=0 // loop_header
    %s12 = sphi 0, %s16
    %p13 = scmp.ge.s32.totalorder %s12, 4
    %s22 = sphi 0, %s24
    %s25 = sphi 0, %s22
    %s26 = sphi 0, %s25
    %s42 = sphi 0, %s26
    %s46 = sphi 0, %s46
    %s48 = sphi 0, %s46
    %s49 = sphi 0, %s48
    %s63 = sphi 0, %s49
    %s67 = sphi 0, %s67
    %s69 = sphi 0, %s67
    %s70 = sphi 0, %s69
    %s84 = sphi 0, %s70
    %s88 = sphi 0, %s88
    %s90 = sphi 0, %s88
    %s91 = sphi 0, %s90
    %s105 = sphi 0, %s91
    %s109 = sphi 0, %s109
    %s111 = sphi 0, %s109
    %s112 = sphi 0, %s111
    %s126 = sphi 0, %s112
    %s130 = sphi 0, %s130
    %s132 = sphi 0, %s130
    %s133 = sphi 0, %s132
    %s147 = sphi 0, %s133
    %s153 = sphi 0, %s155
    %s156 = sphi 0, %s153
    %s157 = sphi 0, %s156
    %s173 = sphi 0, %s157
  $region4: #{inception_a_forward.1} parent=0 // loop_header_branch
    %15 = sbr.rel (%p13) target = $region8
  $region5: #{inception_a_forward.1} parent=0 // loop_body
    %s17 = ssub.s32 %s12, 1
    %s18 = ssub.s32 %s12, 2
    %s19 = sadd.s32 %s12, 1
    %s20 = ssub.s32 %s12, %s19
    %p21 = scmp.eq.s32.totalorder %s20, 0
    %s23 = sadd.s32 %s22, 1
    %s24 = scalar_select %p21, %s22, %s23
    %p27 = pneg %p21
    %p28 = scmp.eq.s32.totalorder %s12, 1
    %p29 = por %p27, %p28
    %p30 = scmp.ne.s32.totalorder %s22, %s25
    %p31 = scmp.eq.s32.totalorder %s12, 0
    %p32 = por %p30, %p31
    %p33 = scmp.ne.s32.totalorder %s22, %s25
    %p34 = scmp.eq.s32.totalorder %s17, 1
    %p35 = por %p33, %p34
    %p36 = scmp.ne.s32.totalorder %s25, %s26
    %p37 = scmp.eq.s32.totalorder %s17, 0
    %p38 = por %p36, %p37
    %p39 = scmp.ne.s32.totalorder %s25, %s26
    %p40 = scmp.eq.s32.totalorder %s18, 1
    %p41 = por %p39, %p40
    %p43 = scmp.ne.s32.totalorder %s26, %s42
    %p44 = scmp.eq.s32.totalorder %s18, 0
    %p45 = por %p43, %p44
    %s47 = sadd.s32 %s46, 1
    %p50 = scmp.eq.s32.totalorder %s12, 1
    %p51 = scmp.ne.s32.totalorder %s46, %s48
    %p52 = scmp.eq.s32.totalorder %s12, 0
    %p53 = por %p51, %p52
    %p54 = scmp.ne.s32.totalorder %s46, %s48
    %p55 = scmp.eq.s32.totalorder %s17, 1
    %p56 = por %p54, %p55
    %p57 = scmp.ne.s32.totalorder %s48, %s49
    %p58 = scmp.eq.s32.totalorder %s17, 0
    %p59 = por %p57, %p58
    %p60 = scmp.ne.s32.totalorder %s48, %s49
    %p61 = scmp.eq.s32.totalorder %s18, 1
    %p62 = por %p60, %p61
    %p64 = scmp.ne.s32.totalorder %s49, %s63
    %p65 = scmp.eq.s32.totalorder %s18, 0
    %p66 = por %p64, %p65
    %s68 = sadd.s32 %s67, 1
    %p71 = scmp.eq.s32.totalorder %s12, 1
    %p72 = scmp.ne.s32.totalorder %s67, %s69
    %p73 = scmp.eq.s32.totalorder %s12, 0
    %p74 = por %p72, %p73
    %p75 = scmp.ne.s32.totalorder %s67, %s69
    %p76 = scmp.eq.s32.totalorder %s17, 1
    %p77 = por %p75, %p76
    %p78 = scmp.ne.s32.totalorder %s69, %s70
    %p79 = scmp.eq.s32.totalorder %s17, 0
    %p80 = por %p78, %p79
    %p81 = scmp.ne.s32.totalorder %s69, %s70
    %p82 = scmp.eq.s32.totalorder %s18, 1
    %p83 = por %p81, %p82
    %p85 = scmp.ne.s32.totalorder %s70, %s84
    %p86 = scmp.eq.s32.totalorder %s18, 0
    %p87 = por %p85, %p86
    %s89 = sadd.s32 %s88, 1
    %p92 = scmp.eq.s32.totalorder %s12, 1
    %p93 = scmp.ne.s32.totalorder %s88, %s90
    %p94 = scmp.eq.s32.totalorder %s12, 0
    %p95 = por %p93, %p94
    %p96 = scmp.ne.s32.totalorder %s88, %s90
    %p97 = scmp.eq.s32.totalorder %s17, 1
    %p98 = por %p96, %p97
    %p99 = scmp.ne.s32.totalorder %s90, %s91
    %p100 = scmp.eq.s32.totalorder %s17, 0
    %p101 = por %p99, %p100
    %p102 = scmp.ne.s32.totalorder %s90, %s91
    %p103 = scmp.eq.s32.totalorder %s18, 1
    %p104 = por %p102, %p103
    %p106 = scmp.ne.s32.totalorder %s91, %s105
    %p107 = scmp.eq.s32.totalorder %s18, 0
    %p108 = por %p106, %p107
    %s110 = sadd.s32 %s109, 1
    %p113 = scmp.eq.s32.totalorder %s12, 1
    %p114 = scmp.ne.s32.totalorder %s109, %s111
    %p115 = scmp.eq.s32.totalorder %s12, 0
    %p116 = por %p114, %p115
    %p117 = scmp.ne.s32.totalorder %s109, %s111
    %p118 = scmp.eq.s32.totalorder %s17, 1
    %p119 = por %p117, %p118
    %p120 = scmp.ne.s32.totalorder %s111, %s112
    %p121 = scmp.eq.s32.totalorder %s17, 0
    %p122 = por %p120, %p121
    %p123 = scmp.ne.s32.totalorder %s111, %s112
    %p124 = scmp.eq.s32.totalorder %s18, 1
    %p125 = por %p123, %p124
    %p127 = scmp.ne.s32.totalorder %s112, %s126
    %p128 = scmp.eq.s32.totalorder %s18, 0
    %p129 = por %p127, %p128
    %s131 = sadd.s32 %s130, 1
    %p134 = scmp.eq.s32.totalorder %s12, 1
    %p135 = scmp.ne.s32.totalorder %s130, %s132
    %p136 = scmp.eq.s32.totalorder %s12, 0
    %p137 = por %p135, %p136
    %p138 = scmp.ne.s32.totalorder %s130, %s132
    %p139 = scmp.eq.s32.totalorder %s17, 1
    %p140 = por %p138, %p139
    %p141 = scmp.ne.s32.totalorder %s132, %s133
    %p142 = scmp.eq.s32.totalorder %s17, 0
    %p143 = por %p141, %p142
    %p144 = scmp.ne.s32.totalorder %s132, %s133
    %p145 = scmp.eq.s32.totalorder %s18, 1
    %p146 = por %p144, %p145
    %p148 = scmp.ne.s32.totalorder %s133, %s147
    %p149 = scmp.eq.s32.totalorder %s18, 0
    %p150 = por %p148, %p149
    %s151 = ssub.s32 %s12, %s19
    %p152 = scmp.eq.s32.totalorder %s151, 0
    %s154 = sadd.s32 %s153, 1
    %s155 = scalar_select %p152, %s153, %s154
    %p158 = pneg %p152
    %p159 = scmp.eq.s32.totalorder %s12, 1
    %p160 = por %p158, %p159
    %p161 = scmp.ne.s32.totalorder %s153, %s156
    %p162 = scmp.eq.s32.totalorder %s12, 0
    %p163 = por %p161, %p162
    %p164 = scmp.ne.s32.totalorder %s153, %s156
    %p165 = scmp.eq.s32.totalorder %s17, 1
    %p166 = por %p164, %p165
    %p167 = scmp.ne.s32.totalorder %s156, %s157
    %p168 = scmp.eq.s32.totalorder %s17, 0
    %p169 = por %p167, %p168
    %p170 = scmp.ne.s32.totalorder %s156, %s157
    %p171 = scmp.eq.s32.totalorder %s18, 1
    %p172 = por %p170, %p171
    %p174 = scmp.ne.s32.totalorder %s157, %s173
    %p175 = scmp.eq.s32.totalorder %s18, 0
    %p176 = por %p174, %p175
    %p177 = scmp.le.s32.totalorder 1, %s12
    %p178 = scmp.lt.s32.totalorder %s12, 3
    %p179 = pnand %p177, %p178
    %p180 = pneg %p179
    // Predicated region
    $region9: #{inception_a_forward.1} parent=5 // pred_check
      _
    $region10: #{inception_a_forward.1} parent=5 // pred_check_branch
      %182 = sbr.rel (%p179) target = $region12
    $region11: #{inception_a_forward.1} parent=5 // pred_region
      %s183 = ssub.s32 %s12, 1
      // Predicated region
      $region13: #{inception_a_forward.1} parent=11 // pred_check
        %p184 = pneg %p59
      $region14: #{inception_a_forward.1} parent=11 // pred_check_branch
        %186 = sbr.rel (%p184) target = $region16
      $region15: #{inception_a_forward.1} parent=11 // pred_region
        _
      $region16: #{inception_a_forward.1} parent=11 // pred_fallthru
        _
      // Predicated region
      $region17: #{inception_a_forward.1} parent=11 // pred_check
        %p187 = pneg %p80
      $region18: #{inception_a_forward.1} parent=11 // pred_check_branch
        %189 = sbr.rel (%p187) target = $region20
      $region19: #{inception_a_forward.1} parent=11 // pred_region
        _
      $region20: #{inception_a_forward.1} parent=11 // pred_fallthru
        _
      // Predicated region
      $region21: #{inception_a_forward.1} parent=11 // pred_check
        %p190 = pneg %p101
      $region22: #{inception_a_forward.1} parent=11 // pred_check_branch
        %192 = sbr.rel (%p190) target = $region24
      $region23: #{inception_a_forward.1} parent=11 // pred_region
        _
      $region24: #{inception_a_forward.1} parent=11 // pred_fallthru
        _
      // Predicated region
      $region25: #{inception_a_forward.1} parent=11 // pred_check
        %p193 = pneg %p122
      $region26: #{inception_a_forward.1} parent=11 // pred_check_branch
        %195 = sbr.rel (%p193) target = $region28
      $region27: #{inception_a_forward.1} parent=11 // pred_region
        _
      $region28: #{inception_a_forward.1} parent=11 // pred_fallthru
        _
      // Predicated region
      $region29: #{inception_a_forward.1} parent=11 // pred_check
        %p196 = pneg %p143
      $region30: #{inception_a_forward.1} parent=11 // pred_check_branch
        %198 = sbr.rel (%p196) target = $region32
      $region31: #{inception_a_forward.1} parent=11 // pred_region
        _
      $region32: #{inception_a_forward.1} parent=11 // pred_fallthru
        _
    $region12: #{inception_a_forward.1} parent=5 // pred_fallthru
      _
    %p199 = scmp.lt.s32.totalorder %s12, 2
    // Predicated region
    $region33: #{inception_a_forward.1} parent=5 // pred_check
      %p200 = pneg %p199
    $region34: #{inception_a_forward.1} parent=5 // pred_check_branch
      %202 = sbr.rel (%p200) target = $region36
    $region35: #{inception_a_forward.1} parent=5 // pred_region
      // Predicated region
      $region37: #{inception_a_forward.1} parent=35 // pred_check
        %p203 = pneg %p32
      $region38: #{inception_a_forward.1} parent=35 // pred_check_branch
        %205 = sbr.rel (%p203) target = $region40
      $region39: #{inception_a_forward.1} parent=35 // pred_region
        %p206 = scmp.lt.s32.totalorder %s12, 1
        %s207 = scalar_select %p206, %s12, 1
        %s208 = smul.addr %s207, 2
        %s209 = smul.addr %s208, 2
        %s210 = scalar_lea.vmem %s0, %s209
      $region40: #{inception_a_forward.1} parent=35 // pred_fallthru
        _
    $region36: #{inception_a_forward.1} parent=5 // pred_fallthru
      _
    %p211 = scmp.le.s32.totalorder 1, %s12
    %p212 = scmp.lt.s32.totalorder %s12, 3
    %p213 = pnand %p211, %p212
    %p214 = pneg %p213
    // Predicated region
    $region41: #{inception_a_forward.1} parent=5 // pred_check
      _
    $region42: #{inception_a_forward.1} parent=5 // pred_check_branch
      %216 = sbr.rel (%p213) target = $region44
    $region43: #{inception_a_forward.1} parent=5 // pred_region
      %s217 = ssub.s32 %s12, 1
      %p218 = scmp.lt.s32.totalorder %s17, 1
      %s219 = scalar_select %p218, %s17, 1
      %s220 = smul.addr %s219, 2
      %s221 = smul.addr %s220, 2
      %s222 = scalar_lea.vmem %s0, %s221
      %p223 = pneg %p38
      %p224 = pneg %p35
      %p225 = pneg %p59
      %p226 = pneg %p56
      %p227 = pneg %p80
      %p228 = pneg %p77
      %p229 = pneg %p101
      %p230 = pneg %p98
      %p231 = pneg %p122
      %p232 = pneg %p119
      %p233 = pneg %p143
      %p234 = pneg %p140
      %p235 = pneg %p169
      %p236 = pneg %p166
      %p237 = scmp.lt.s32.totalorder %s17, 1
      %s238 = scalar_select %p237, %s17, 1
      %s239 = smul.addr %s238, 22
      %s240 = smul.addr %s239, 8
      %s241 = scalar_lea.vmem %s6, %s240
      %p242 = scmp.lt.s32.totalorder %s17, 1
      %s243 = scalar_select %p242, %s17, 1
      %s244 = smul.addr %s243, 2
      %s245 = smul.addr %s244, 2
      %s246 = scalar_lea.vmem %s0, %s245
      %p247 = scmp.lt.s32.totalorder %s17, 1
      %s248 = scalar_select %p247, %s17, 1
      %s249 = smul.addr %s248, 22
      %s250 = smul.addr %s249, 8
      %s251 = scalar_lea.vmem %s6, %s250
      %v253 = vld [vmem:[%s4] sm:$0xff]
      %v254 = vld [vmem:[%s4 + $0x8] sm:$0xff]
      %v255 = vld [vmem:[%s4 + $0x10] sm:$0xff]
      %v256 = vld [vmem:[%s4 + $0x18] sm:$0xff]
      %v257 = vld [vmem:[%s4 + $0x20] sm:$0xff]
      %v258 = vld [vmem:[%s4 + $0x28] sm:$0xff]
      %v259 = vld [vmem:[%s4 + $0x30] sm:$0xff]
      %v260 = vld [vmem:[%s4 + $0x38] sm:$0xff]
      %v261 = vld [vmem:[%s4 + $0x40] sm:$0xff]
      %v262 = vld [vmem:[%s4 + $0x48] sm:$0xff]
      %v263 = vld [vmem:[%s4 + $0x50] sm:$0xff]
      %v264 = vld [vmem:[%s4 + $0x58] sm:$0xff]
      %v265 = vld [vmem:[%s4 + $0x60] sm:$0xff]
      %v266 = vld [vmem:[%s4 + $0x68] sm:$0xff]
      %v267 = vld [vmem:[%s4 + $0x70] sm:$0xff]
      %v268 = vld [vmem:[%s4 + $0x78] sm:$0xff]
      %v269 = vld [vmem:[%s4 + $0x80] sm:$0xff]
      %v270 = vld [vmem:[%s4 + $0x88] sm:$0xff]
      %v271 = vld [vmem:[%s1] sm:$0xf]
      %v272 = vld [vmem:[%s1 + $0x4] sm:$0xf]
      %v273 = vld [vmem:[%s1 + $0x8] sm:$0xf]
      %v274 = vld [vmem:[%s1 + $0xc] sm:$0xf]
      %v275 = vld [vmem:[%s1 + $0x10] sm:$0xf]
      %v276 = vld [vmem:[%s1 + $0x14] sm:$0xf]
      %v277 = vld [vmem:[%s1 + $0x18] sm:$0xf]
      %v278 = vld [vmem:[%s1 + $0x1c] sm:$0xf]
      %v279 = vld [vmem:[%s1 + $0x20] sm:$0xf]
      %v280 = vld [vmem:[%s246] sm:$0xf]
      %v290 = vunpack.c.l.b16 %v271
      %v291 = vunpack.c.l.b16 %v272
      %v292 = vunpack.c.l.b16 %v273
      %v293 = vunpack.c.l.b16 %v274
      %v294 = vunpack.c.l.b16 %v275
      %v295 = vunpack.c.l.b16 %v276
      %v296 = vunpack.c.l.b16 %v277
      %v297 = vunpack.c.l.b16 %v278
      %v298 = vunpack.c.l.b16 %v279
      %v299 = vpack.c.b16 %v291, %v290
      %v300 = vpack.c.b16 %v293, %v292
      %v301 = vpack.c.b16 %v295, %v294
      %v302 = vpack.c.b16 %v297, %v296
      %v303 = vpack.c.b16 %v298, %v298
      %v306 = vunpack.c.l.s4 1983009808
      %v307 = vunpack.c.0.s8 %v306
      %v308 = vlaneseq
      %v309 = vshrl.u32 %v308, 7
      %v310 = vsub.s32 %v307, %v309
      %v311 = vrot.slane %v280, %v310
      %v312 = vcombine.high %v311, %v311
      %vm313 = vcmask 31744
      %v315 = vsel %vm313, %v299, 0
      %v318 = vsel %vm313, %v300, 0
      %v321 = vsel %vm313, %v301, 0
      %v324 = vsel %vm313, %v302, 0
      %v327 = vsel %vm313, %v303, 0
      %vm329 = vcmask 1041408
      %v331 = vsel %vm329, %v311, 0
      %v334 = vsel %vm329, %v312, 0
      %336 = vmatprep.subr.bf16.mxu0 0
      %337 = vmatpush1.bf16.msra.mxu0 0
      %338 = vmatprep.subr.bf16.mxu0 0
      %339 = vmatpush1.bf16.msra.mxu0 0
      %340 = vmatprep.subr.bf16.mxu0 0
      %341 = vmatpush1.bf16.msra.mxu0 0
      %342 = vmatprep.subr.bf16.mxu0 0
      %343 = vmatpush1.bf16.msra.mxu0 0
      %344 = vmatprep.subr.bf16.mxu0 0
      %345 = vmatpush1.bf16.msra.mxu0 0
      %346 = vmatprep.subr.bf16.mxu0 0
      %347 = vmatpush1.bf16.msra.mxu0 0
      %348 = vmatprep.subr.bf16.mxu0 0
      %349 = vmatpush1.bf16.msra.mxu0 0
      %350 = vmatprep.subr.bf16.mxu0 %v334
      %351 = vmatpush1.bf16.msra.mxu0 %v331
      %352 = vmatprep.subr.bf16.mxu0 0
      %353 = vmatpush2.bf16.msra.mxu0 0
      %354 = vmatprep.subr.bf16.mxu0 0
      %355 = vmatpush2.bf16.msra.mxu0 0
      %356 = vmatprep.subr.bf16.mxu0 0
      %357 = vmatpush2.bf16.msra.mxu0 0
      %358 = vmatprep.subr.bf16.mxu0 0
      %359 = vmatpush2.bf16.msra.mxu0 0
      %360 = vmatprep.subr.bf16.mxu0 0
      %361 = vmatpush2.bf16.msra.mxu0 0
      %362 = vmatprep.subr.bf16.mxu0 0
      %363 = vmatpush2.bf16.msra.mxu0 0
      %364 = vmatprep.subr.bf16.mxu0 0
      %365 = vmatpush2.bf16.msra.mxu0 0
      %366 = vmatprep.subr.bf16.mxu0 0
      %367 = vmatpush2.bf16.msra.mxu0 0
      %368 = vmatprep.mubr.bf16.mxu0 0
      %369 = vmatmul.mubr.bf16.gmra.mxu0 %v315
      %v370 = vpop.f32.mrf.mxu0
      %v371 = vadd.f32 0.0, %v370
      %v372 = vpop.f32.mrf.mxu0
      %v373 = vadd.f32 0.0, %v372
      %v374 = vpop.f32.mrf.mxu0
      %v375 = vadd.f32 0.0, %v374
      %v376 = vpop.f32.mrf.mxu0
      %v377 = vadd.f32 0.0, %v376
      %378 = vmatprep.mubr.bf16.mxu0 0
      %379 = vmatmul.mubr.bf16.gmra.mxu0 %v318
      %v380 = vpop.f32.mrf.mxu0
      %v381 = vadd.f32 0.0, %v380
      %v382 = vpop.f32.mrf.mxu0
      %v383 = vadd.f32 0.0, %v382
      %v384 = vpop.f32.mrf.mxu0
      %v385 = vadd.f32 0.0, %v384
      %v386 = vpop.f32.mrf.mxu0
      %v387 = vadd.f32 0.0, %v386
      %388 = vmatprep.mubr.bf16.mxu0 0
      %389 = vmatmul.mubr.bf16.gmra.mxu0 %v321
      %v390 = vpop.f32.mrf.mxu0
      %v391 = vadd.f32 0.0, %v390
      %v392 = vpop.f32.mrf.mxu0
      %v393 = vadd.f32 0.0, %v392
      %v394 = vpop.f32.mrf.mxu0
      %v395 = vadd.f32 0.0, %v394
      %v396 = vpop.f32.mrf.mxu0
      %v397 = vadd.f32 0.0, %v396
      %398 = vmatprep.mubr.bf16.mxu0 0
      %399 = vmatmul.mubr.bf16.gmra.mxu0 %v324
      %v400 = vpop.f32.mrf.mxu0
      %v401 = vadd.f32 0.0, %v400
      %v402 = vpop.f32.mrf.mxu0
      %v403 = vadd.f32 0.0, %v402
      %v404 = vpop.f32.mrf.mxu0
      %v405 = vadd.f32 0.0, %v404
      %v406 = vpop.f32.mrf.mxu0
      %v407 = vadd.f32 0.0, %v406
      %408 = vmatprep.mubr.bf16.mxu0 0
      %409 = vmatmul.mubr.bf16.gmra.mxu0 %v327
      %v410 = vpop.f32.mrf.mxu0
      %v411 = vadd.f32 0.0, %v410
      %v412 = vpop.f32.mrf.mxu0
      %v413 = vadd.f32 0.0, %v412
      %v414 = vpop.f32.mrf.mxu0
      %v415 = vpop.f32.mrf.mxu0
      %416 = vdwg.mxu0
      %418 = vset.pattern.permute.xlu0 0
      %419 = vperm.xlu0 %418, %v253
      %v420 = vpop.permute.xlu0 %419
      %423 = vset.pattern.permute.xlu0 0
      %424 = vperm.xlu0 %423, %v254
      %v425 = vpop.permute.xlu0 %424
      %v427 = vadd.f32 %v371, %v420
      %v428 = vadd.f32 %v373, %v420
      %v429 = vadd.f32 %v375, %v425
      %v430 = vadd.f32 %v377, %v425
      %431 = vst [vmem:[%s251] sm:$0xff] %v427
      %432 = vst [vmem:[%s251 + $0x8] sm:$0xff] %v428
      %433 = vst [vmem:[%s251 + $0x10] sm:$0xff] %v429
      %434 = vst [vmem:[%s251 + $0x18] sm:$0xff] %v430
      %436 = vset.pattern.permute.xlu0 0
      %437 = vperm.xlu0 %436, %v255
      %v438 = vpop.permute.xlu0 %437
      %441 = vset.pattern.permute.xlu0 0
      %442 = vperm.xlu0 %441, %v256
      %v443 = vpop.permute.xlu0 %442
      %446 = vset.pattern.permute.xlu0 0
      %447 = vperm.xlu0 %446, %v257
      %v448 = vpop.permute.xlu0 %447
      %451 = vset.pattern.permute.xlu0 0
      %452 = vperm.xlu0 %451, %v258
      %v453 = vpop.permute.xlu0 %452
      %v455 = vadd.f32 %v381, %v438
      %v456 = vadd.f32 %v383, %v438
      %v457 = vadd.f32 %v385, %v443
      %v458 = vadd.f32 %v387, %v443
      %v459 = vadd.f32 %v391, %v448
      %v460 = vadd.f32 %v393, %v448
      %v461 = vadd.f32 %v395, %v453
      %v462 = vadd.f32 %v397, %v453
      %463 = vst [vmem:[#allocation2] sm:$0xff] %v455
      %464 = vst [vmem:[#allocation2 + $0x8] sm:$0xff] %v456
      %465 = vst [vmem:[#allocation2 + $0x10] sm:$0xff] %v457
      %466 = vst [vmem:[#allocation2 + $0x18] sm:$0xff] %v458
      %467 = vst [vmem:[#allocation2 + $0x20] sm:$0xff] %v459
      %468 = vst [vmem:[#allocation2 + $0x28] sm:$0xff] %v460
      %469 = vst [vmem:[#allocation2 + $0x30] sm:$0xff] %v461
      %470 = vst [vmem:[#allocation2 + $0x38] sm:$0xff] %v462
      %471 = vst [vmem:[#allocation2 + $0x40] sm:$0xff] %v401
      %472 = vst [vmem:[#allocation2 + $0x48] sm:$0xff] %v403
      %473 = vst [vmem:[#allocation2 + $0x50] sm:$0xff] %v405
      %474 = vst [vmem:[#allocation2 + $0x58] sm:$0xff] %v407
      %475 = vst [vmem:[#allocation2 + $0x60] sm:$0xff] %v411
      %476 = vst [vmem:[#allocation2 + $0x68] sm:$0xff] %v413
      %v477 = vld [vmem:[%s5] ss:$8 sm:$0x3]
      %s478 = scalar_lea.vmem %s5, 1
      %v479 = vld [vmem:[%s478] ss:$8 sm:$0x3]
      %s480 = scalar_lea.vmem %s5, 3
      %v481 = vld [vmem:[%s480] ss:$8 sm:$0x3]
      %s482 = scalar_lea.vmem %s5, 4
      %v483 = vld [vmem:[%s482] ss:$8 sm:$0x3]
      %v485 = vlaneseq
      %v486 = vshrl.u32 %v485, 7
      %v487 = vsub.s32 0, %v486
      %v488 = vrot.slane %v477, %v487
      %v489 = vlaneseq
      %v490 = vshrl.u32 %v489, 7
      %v491 = vsub.s32 1, %v490
      %v492 = vrot.slane %v477, %v491
      %v495 = vpack.c.bf16 %v488, %v488
      %v496 = vpack.c.bf16 %v492, %v492
      %v498 = vlaneseq
      %v499 = vshrl.u32 %v498, 7
      %v500 = vsub.s32 0, %v499
      %v501 = vrot.slane %v479, %v500
      %v502 = vlaneseq
      %v503 = vshrl.u32 %v502, 7
      %v504 = vsub.s32 1, %v503
      %v505 = vrot.slane %v479, %v504
      %v508 = vpack.c.bf16 %v501, %v501
      %v509 = vpack.c.bf16 %v505, %v505
      %v511 = vlaneseq
      %v512 = vshrl.u32 %v511, 7
      %v513 = vsub.s32 0, %v512
      %v514 = vrot.slane %v481, %v513
      %v515 = vlaneseq
      %v516 = vshrl.u32 %v515, 7
      %v517 = vsub.s32 1, %v516
      %v518 = vrot.slane %v481, %v517
      %v521 = vpack.c.bf16 %v514, %v514
      %v522 = vpack.c.bf16 %v518, %v518
      %v524 = vlaneseq
      %v525 = vshrl.u32 %v524, 7
      %v526 = vsub.s32 0, %v525
      %v527 = vrot.slane %v483, %v526
      %v528 = vlaneseq
      %v529 = vshrl.u32 %v528, 7
      %v530 = vsub.s32 1, %v529
      %v531 = vrot.slane %v483, %v530
      %v534 = vpack.c.bf16 %v527, %v527
      %v535 = vpack.c.bf16 %v531, %v531
      %v536 = vld [vmem:[#allocation2] sm:$0xff]
      %v537 = vld [vmem:[#allocation2 + $0x8] sm:$0xff]
      %v538 = vld [vmem:[#allocation2 + $0x10] sm:$0xff]
      %v539 = vld [vmem:[#allocation2 + $0x18] sm:$0xff]
      %v540 = vld [vmem:[#allocation2 + $0x20] sm:$0xff]
      %v541 = vld [vmem:[#allocation2 + $0x28] sm:$0xff]
      %v542 = vld [vmem:[#allocation2 + $0x30] sm:$0xff]
      %v543 = vld [vmem:[#allocation2 + $0x38] sm:$0xff]
      %v544 = vpack.c.bf16 %v538, %v536
      %v545 = vpack.c.bf16 %v539, %v537
      %v546 = vpack.c.bf16 %v542, %v540
      %v547 = vpack.c.bf16 %v543, %v541
      %552 = vrot.lane.b32.xlu0 %v544, 2
      %v553 = vpop.permute.xlu0 %552
      %554 = vrot.lane.b32.xlu0 %v545, 2
      %v555 = vpop.permute.xlu0 %554
      %556 = vrot.lane.b32.xlu0 %v546, 2
      %v557 = vpop.permute.xlu0 %556
      %558 = vrot.lane.b32.xlu0 %v547, 2
      %v559 = vpop.permute.xlu0 %558
      %vm560 = vcmask 15360
      %v561 = vsel %vm560, %v553, %v555
      %v562 = vsel %vm560, %v557, %v559
      %vm565 = vcmask 15360
      %v568 = vsel %vm565, 0, %v553
      %v571 = vsel %vm565, 0, %v557
      %v574 = vpack.i.b16 %v495, %v495
      %v576 = vlaneseq
      %v577 = vshrl.u32 %v576, 7
      %v578 = vsub.s32 0, %v577
      %v579 = vrot.slane %v574, %v578
      %v581 = vpack.i.b16 %v496, %v496
      %v583 = vlaneseq
      %v584 = vshrl.u32 %v583, 7
      %v585 = vsub.s32 0, %v584
      %v586 = vrot.slane %v581, %v585
      %v587 = vmul.bf16 %v568, %v579
      %v588 = vmul.bf16 %v561, %v586
      %v589 = vmul.bf16 %v571, %v579
      %v590 = vmul.bf16 %v562, %v586
      %591 = vrot.lane.b32.xlu0 %v544, 1
      %v592 = vpop.permute.xlu0 %591
      %593 = vrot.lane.b32.xlu0 %v545, 1
      %v594 = vpop.permute.xlu0 %593
      %595 = vrot.lane.b32.xlu0 %v546, 1
      %v596 = vpop.permute.xlu0 %595
      %597 = vrot.lane.b32.xlu0 %v547, 1
      %v598 = vpop.permute.xlu0 %597
      %vm599 = vcmask 7168
      %v600 = vsel %vm599, %v592, %v594
      %v601 = vsel %vm599, %v596, %v598
      %vm604 = vcmask 7168
      %v606 = vsel %vm604, 0, %v592
      %v609 = vsel %vm604, 0, %v596
      %v612 = vpack.i.b16 %v508, %v508
      %v614 = vlaneseq
      %v615 = vshrl.u32 %v614, 7
      %v616 = vsub.s32 0, %v615
      %v617 = vrot.slane %v612, %v616
      %v619 = vpack.i.b16 %v509, %v509
      %v621 = vlaneseq
      %v622 = vshrl.u32 %v621, 7
      %v623 = vsub.s32 0, %v622
      %v624 = vrot.slane %v619, %v623
      %v625 = vmul.bf16 %v606, %v617
      %v626 = vmul.bf16 %v600, %v624
      %v627 = vmul.bf16 %v609, %v617
      %v628 = vmul.bf16 %v601, %v624
      %629 = vrot.lane.b32.xlu0 %v544, 127
      %v630 = vpop.permute.xlu0 %629
      %631 = vrot.lane.b32.xlu0 %v545, 127
      %v632 = vpop.permute.xlu0 %631
      %633 = vrot.lane.b32.xlu0 %v546, 127
      %v634 = vpop.permute.xlu0 %633
      %635 = vrot.lane.b32.xlu0 %v547, 127
      %v636 = vpop.permute.xlu0 %635
      %vm637 = vcmask 1039360
      %v638 = vsel %vm637, %v630, %v632
      %v639 = vsel %vm637, %v634, %v636
      %vm642 = vcmask 1039360
      %v644 = vsel %vm642, %v632, 0
      %v647 = vsel %vm642, %v636, 0
      %v650 = vpack.i.b16 %v521, %v521
      %v652 = vlaneseq
      %v653 = vshrl.u32 %v652, 7
      %v654 = vsub.s32 0, %v653
      %v655 = vrot.slane %v650, %v654
      %v657 = vpack.i.b16 %v522, %v522
      %v659 = vlaneseq
      %v660 = vshrl.u32 %v659, 7
      %v661 = vsub.s32 0, %v660
      %v662 = vrot.slane %v657, %v661
      %v663 = vmul.bf16 %v638, %v655
      %v664 = vmul.bf16 %v644, %v662
      %v665 = vmul.bf16 %v639, %v655
      %v666 = vmul.bf16 %v647, %v662
      %667 = vrot.lane.b32.xlu0 %v544, 126
      %v668 = vpop.permute.xlu0 %667
      %669 = vrot.lane.b32.xlu0 %v545, 126
      %v670 = vpop.permute.xlu0 %669
      %671 = vrot.lane.b32.xlu0 %v546, 126
      %v672 = vpop.permute.xlu0 %671
      %673 = vrot.lane.b32.xlu0 %v547, 126
      %v674 = vpop.permute.xlu0 %673
      %vm675 = vcmask 1031168
      %v676 = vsel %vm675, %v668, %v670
      %v677 = vsel %vm675, %v672, %v674
      %vm680 = vcmask 1031168
      %v682 = vsel %vm680, %v670, 0
      %v685 = vsel %vm680, %v674, 0
      %v688 = vpack.i.b16 %v534, %v534
      %v690 = vlaneseq
      %v691 = vshrl.u32 %v690, 7
      %v692 = vsub.s32 0, %v691
      %v693 = vrot.slane %v688, %v692
      %v695 = vpack.i.b16 %v535, %v535
      %v697 = vlaneseq
      %v698 = vshrl.u32 %v697, 7
      %v699 = vsub.s32 0, %v698
      %v700 = vrot.slane %v695, %v699
      %v701 = vmul.bf16 %v676, %v693
      %v702 = vmul.bf16 %v682, %v700
      %v703 = vmul.bf16 %v677, %v693
      %v704 = vmul.bf16 %v685, %v700
      %709 = vrot.lane.b32.xlu0 %v587, 32
      %v710 = vpop.permute.xlu0 %709
      %711 = vrot.lane.b32.xlu0 %v588, 32
      %v712 = vpop.permute.xlu0 %711
      %713 = vrot.lane.b32.xlu0 %v589, 32
      %v714 = vpop.permute.xlu0 %713
      %715 = vrot.lane.b32.xlu0 %v590, 32
      %v716 = vpop.permute.xlu0 %715
      %vm717 = vcmask 261120
      %v718 = vsel %vm717, %v710, %v712
      %v719 = vsel %vm717, %v714, %v716
      %vm720 = vcmask 261120
      %v722 = vsel %vm720, 0, %v710
      %v724 = vsel %vm720, 0, %v714
      %v727 = vunpack.c.l.b16 %v722
      %v728 = vunpack.c.l.b16 %v718
      %v729 = vunpack.c.h.b16 %v722
      %v730 = vunpack.c.h.b16 %v718
      %v731 = vunpack.c.l.b16 %v724
      %v732 = vunpack.c.l.b16 %v719
      %v733 = vunpack.c.h.b16 %v724
      %v734 = vunpack.c.h.b16 %v719
      %v735 = vpack.c.b16 %v728, %v727
      %v736 = vpack.c.b16 %v730, %v729
      %v737 = vpack.c.b16 %v732, %v731
      %v738 = vpack.c.b16 %v734, %v733
      %743 = vst [vmem:[#allocation3] sm:$0xff] %v735
      %744 = vst [vmem:[#allocation3 + $0x8] sm:$0xff] %v736
      %745 = vst [vmem:[#allocation3 + $0x10] sm:$0xff] %v737
      %746 = vst [vmem:[#allocation3 + $0x18] sm:$0xff] %v738
      %751 = vrot.lane.b32.xlu0 %v625, 32
      %v752 = vpop.permute.xlu0 %751
      %753 = vrot.lane.b32.xlu0 %v626, 32
      %v754 = vpop.permute.xlu0 %753
      %755 = vrot.lane.b32.xlu0 %v627, 32
      %v756 = vpop.permute.xlu0 %755
      %757 = vrot.lane.b32.xlu0 %v628, 32
      %v758 = vpop.permute.xlu0 %757
      %v759 = vsel %vm717, %v752, %v754
      %v760 = vsel %vm717, %v756, %v758
      %v762 = vsel %vm720, 0, %v752
      %v764 = vsel %vm720, 0, %v756
      %v767 = vunpack.c.l.b16 %v762
      %v768 = vunpack.c.l.b16 %v759
      %v769 = vunpack.c.h.b16 %v762
      %v770 = vunpack.c.h.b16 %v759
      %v771 = vunpack.c.l.b16 %v764
      %v772 = vunpack.c.l.b16 %v760
      %v773 = vunpack.c.h.b16 %v764
      %v774 = vunpack.c.h.b16 %v760
      %v775 = vpack.c.b16 %v768, %v767
      %v776 = vpack.c.b16 %v770, %v769
      %v777 = vpack.c.b16 %v772, %v771
      %v778 = vpack.c.b16 %v774, %v773
      %783 = vst [vmem:[#allocation3 + $0x20] sm:$0xff] %v775
      %784 = vst [vmem:[#allocation3 + $0x28] sm:$0xff] %v776
      %785 = vst [vmem:[#allocation3 + $0x30] sm:$0xff] %v777
      %786 = vst [vmem:[#allocation3 + $0x38] sm:$0xff] %v778
      %787 = vrot.lane.b32.xlu0 %v544, 32
      %v788 = vpop.permute.xlu0 %787
      %789 = vrot.lane.b32.xlu0 %v545, 32
      %v790 = vpop.permute.xlu0 %789
      %791 = vrot.lane.b32.xlu0 %v546, 32
      %v792 = vpop.permute.xlu0 %791
      %793 = vrot.lane.b32.xlu0 %v547, 32
      %v794 = vpop.permute.xlu0 %793
      %v795 = vsel %vm717, %v788, %v790
      %v796 = vsel %vm717, %v792, %v794
      %v798 = vsel %vm720, 0, %v788
      %v800 = vsel %vm720, 0, %v792
      %v803 = vunpack.c.l.b16 %v798
      %v804 = vunpack.c.l.b16 %v795
      %v805 = vunpack.c.h.b16 %v798
      %v806 = vunpack.c.h.b16 %v795
      %v807 = vunpack.c.l.b16 %v800
      %v808 = vunpack.c.l.b16 %v796
      %v809 = vunpack.c.h.b16 %v800
      %v810 = vunpack.c.h.b16 %v796
      %v811 = vpack.c.b16 %v804, %v803
      %v812 = vpack.c.b16 %v806, %v805
      %v813 = vpack.c.b16 %v808, %v807
      %v814 = vpack.c.b16 %v810, %v809
      %819 = vst [vmem:[#allocation3 + $0x40] sm:$0xff] %v811
      %820 = vst [vmem:[#allocation3 + $0x48] sm:$0xff] %v812
      %821 = vst [vmem:[#allocation3 + $0x50] sm:$0xff] %v813
      %822 = vst [vmem:[#allocation3 + $0x58] sm:$0xff] %v814
      %827 = vrot.lane.b32.xlu0 %v663, 32
      %v828 = vpop.permute.xlu0 %827
      %829 = vrot.lane.b32.xlu0 %v664, 32
      %v830 = vpop.permute.xlu0 %829
      %831 = vrot.lane.b32.xlu0 %v665, 32
      %v832 = vpop.permute.xlu0 %831
      %833 = vrot.lane.b32.xlu0 %v666, 32
      %v834 = vpop.permute.xlu0 %833
      %v835 = vsel %vm717, %v828, %v830
      %v836 = vsel %vm717, %v832, %v834
      %v838 = vsel %vm720, 0, %v828
      %v840 = vsel %vm720, 0, %v832
      %v843 = vunpack.c.l.b16 %v838
      %v844 = vunpack.c.l.b16 %v835
      %v845 = vunpack.c.h.b16 %v838
      %v846 = vunpack.c.h.b16 %v835
      %v847 = vunpack.c.l.b16 %v840
      %v848 = vunpack.c.l.b16 %v836
      %v849 = vunpack.c.h.b16 %v840
      %v850 = vunpack.c.h.b16 %v836
      %v851 = vpack.c.b16 %v844, %v843
      %v852 = vpack.c.b16 %v846, %v845
      %v853 = vpack.c.b16 %v848, %v847
      %v854 = vpack.c.b16 %v850, %v849
      %859 = vst [vmem:[#allocation3 + $0x60] sm:$0xff] %v851
      %860 = vst [vmem:[#allocation3 + $0x68] sm:$0xff] %v852
      %861 = vst [vmem:[#allocation3 + $0x70] sm:$0xff] %v853
      %862 = vst [vmem:[#allocation3 + $0x78] sm:$0xff] %v854
      %867 = vrot.lane.b32.xlu0 %v701, 32
      %v868 = vpop.permute.xlu0 %867
      %869 = vrot.lane.b32.xlu0 %v702, 32
      %v870 = vpop.permute.xlu0 %869
      %871 = vrot.lane.b32.xlu0 %v703, 32
      %v872 = vpop.permute.xlu0 %871
      %873 = vrot.lane.b32.xlu0 %v704, 32
      %v874 = vpop.permute.xlu0 %873
      %v875 = vsel %vm717, %v868, %v870
      %v876 = vsel %vm717, %v872, %v874
      %v878 = vsel %vm720, 0, %v868
      %v880 = vsel %vm720, 0, %v872
      %v883 = vunpack.c.l.b16 %v878
      %v884 = vunpack.c.l.b16 %v875
      %v885 = vunpack.c.h.b16 %v878
      %v886 = vunpack.c.h.b16 %v875
      %v887 = vunpack.c.l.b16 %v880
      %v888 = vunpack.c.l.b16 %v876
      %v889 = vunpack.c.h.b16 %v880
      %v890 = vunpack.c.h.b16 %v876
      %v891 = vpack.c.b16 %v884, %v883
      %v892 = vpack.c.b16 %v886, %v885
      %v893 = vpack.c.b16 %v888, %v887
      %v894 = vpack.c.b16 %v890, %v889
      %899 = vst [vmem:[#allocation3 + $0x80] sm:$0xff] %v891
      %900 = vst [vmem:[#allocation3 + $0x88] sm:$0xff] %v892
      %901 = vst [vmem:[#allocation3 + $0x90] sm:$0xff] %v893
      %902 = vst [vmem:[#allocation3 + $0x98] sm:$0xff] %v894
      %903 = vrot.lane.b32.xlu0 %v587, 16
      %v904 = vpop.permute.xlu0 %903
      %905 = vrot.lane.b32.xlu0 %v588, 16
      %v906 = vpop.permute.xlu0 %905
      %907 = vrot.lane.b32.xlu0 %v589, 16
      %v908 = vpop.permute.xlu0 %907
      %909 = vrot.lane.b32.xlu0 %v590, 16
      %v910 = vpop.permute.xlu0 %909
      %vm911 = vcmask 130048
      %v912 = vsel %vm911, %v904, %v906
      %v913 = vsel %vm911, %v908, %v910
      %vm914 = vcmask 130048
      %v916 = vsel %vm914, 0, %v904
      %v918 = vsel %vm914, 0, %v908
      %v921 = vunpack.c.l.b16 %v916
      %v922 = vunpack.c.l.b16 %v912
      %v923 = vunpack.c.h.b16 %v916
      %v924 = vunpack.c.h.b16 %v912
      %v925 = vunpack.c.l.b16 %v918
      %v926 = vunpack.c.l.b16 %v913
      %v927 = vunpack.c.h.b16 %v918
      %v928 = vunpack.c.h.b16 %v913
      %v929 = vpack.c.b16 %v922, %v921
      %v930 = vpack.c.b16 %v924, %v923
      %v931 = vpack.c.b16 %v926, %v925
      %v932 = vpack.c.b16 %v928, %v927
      %937 = vst [vmem:[#allocation3 + $0xa0] sm:$0xff] %v929
      %938 = vst [vmem:[#allocation3 + $0xa8] sm:$0xff] %v930
      %939 = vst [vmem:[#allocation3 + $0xb0] sm:$0xff] %v931
      %940 = vst [vmem:[#allocation3 + $0xb8] sm:$0xff] %v932
      %941 = vrot.lane.b32.xlu0 %v625, 16
      %v942 = vpop.permute.xlu0 %941
      %943 = vrot.lane.b32.xlu0 %v626, 16
      %v944 = vpop.permute.xlu0 %943
      %945 = vrot.lane.b32.xlu0 %v627, 16
      %v946 = vpop.permute.xlu0 %945
      %947 = vrot.lane.b32.xlu0 %v628, 16
      %v948 = vpop.permute.xlu0 %947
      %v949 = vsel %vm911, %v942, %v944
      %v950 = vsel %vm911, %v946, %v948
      %v952 = vsel %vm914, 0, %v942
      %v954 = vsel %vm914, 0, %v946
      %v957 = vunpack.c.l.b16 %v952
      %v958 = vunpack.c.l.b16 %v949
      %v959 = vunpack.c.h.b16 %v952
      %v960 = vunpack.c.h.b16 %v949
      %v961 = vunpack.c.l.b16 %v954
      %v962 = vunpack.c.l.b16 %v950
      %v963 = vunpack.c.h.b16 %v954
      %v964 = vunpack.c.h.b16 %v950
      %v965 = vpack.c.b16 %v958, %v957
      %v966 = vpack.c.b16 %v960, %v959
      %v967 = vpack.c.b16 %v962, %v961
      %v968 = vpack.c.b16 %v964, %v963
      %973 = vst [vmem:[#allocation3 + $0xc0] sm:$0xff] %v965
      %974 = vst [vmem:[#allocation3 + $0xc8] sm:$0xff] %v966
      %975 = vst [vmem:[#allocation3 + $0xd0] sm:$0xff] %v967
      %976 = vst [vmem:[#allocation3 + $0xd8] sm:$0xff] %v968
      %977 = vrot.lane.b32.xlu0 %v544, 16
      %v978 = vpop.permute.xlu0 %977
      %979 = vrot.lane.b32.xlu0 %v545, 16
      %v980 = vpop.permute.xlu0 %979
      %981 = vrot.lane.b32.xlu0 %v546, 16
      %v982 = vpop.permute.xlu0 %981
      %983 = vrot.lane.b32.xlu0 %v547, 16
      %v984 = vpop.permute.xlu0 %983
      %v985 = vsel %vm911, %v978, %v980
      %v986 = vsel %vm911, %v982, %v984
      %v988 = vsel %vm914, 0, %v978
      %v990 = vsel %vm914, 0, %v982
      %v993 = vunpack.c.l.b16 %v988
      %v994 = vunpack.c.l.b16 %v985
      %v995 = vunpack.c.h.b16 %v988
      %v996 = vunpack.c.h.b16 %v985
      %v997 = vunpack.c.l.b16 %v990
      %v998 = vunpack.c.l.b16 %v986
      %v999 = vunpack.c.h.b16 %v990
      %v1000 = vunpack.c.h.b16 %v986
      %v1001 = vpack.c.b16 %v994, %v993
      %v1002 = vpack.c.b16 %v996, %v995
      %v1003 = vpack.c.b16 %v998, %v997
      %v1004 = vpack.c.b16 %v1000, %v999
      %1009 = vst [vmem:[#allocation3 + $0xe0] sm:$0xff] %v1001
      %1010 = vst [vmem:[#allocation3 + $0xe8] sm:$0xff] %v1002
      %1011 = vst [vmem:[#allocation3 + $0xf0] sm:$0xff] %v1003
      %1012 = vst [vmem:[#allocation3 + $0xf8] sm:$0xff] %v1004
      %1013 = vrot.lane.b32.xlu0 %v663, 16
      %v1014 = vpop.permute.xlu0 %1013
      %1015 = vrot.lane.b32.xlu0 %v664, 16
      %v1016 = vpop.permute.xlu0 %1015
      %1017 = vrot.lane.b32.xlu0 %v665, 16
      %v1018 = vpop.permute.xlu0 %1017
      %1019 = vrot.lane.b32.xlu0 %v666, 16
      %v1020 = vpop.permute.xlu0 %1019
      %v1021 = vsel %vm911, %v1014, %v1016
      %v1022 = vsel %vm911, %v1018, %v1020
      %v1024 = vsel %vm914, 0, %v1014
      %v1026 = vsel %vm914, 0, %v1018
      %v1029 = vunpack.c.l.b16 %v1024
      %v1030 = vunpack.c.l.b16 %v1021
      %v1031 = vunpack.c.h.b16 %v1024
      %v1032 = vunpack.c.h.b16 %v1021
      %v1033 = vunpack.c.l.b16 %v1026
      %v1034 = vunpack.c.l.b16 %v1022
      %v1035 = vunpack.c.h.b16 %v1026
      %v1036 = vunpack.c.h.b16 %v1022
      %v1037 = vpack.c.b16 %v1030, %v1029
      %v1038 = vpack.c.b16 %v1032, %v1031
      %v1039 = vpack.c.b16 %v1034, %v1033
      %v1040 = vpack.c.b16 %v1036, %v1035
      %1045 = vst [vmem:[#allocation3 + $0x100] sm:$0xff] %v1037
      %1046 = vst [vmem:[#allocation3 + $0x108] sm:$0xff] %v1038
      %1047 = vst [vmem:[#allocation3 + $0x110] sm:$0xff] %v1039
      %1048 = vst [vmem:[#allocation3 + $0x118] sm:$0xff] %v1040
      %1049 = vrot.lane.b32.xlu0 %v701, 16
      %v1050 = vpop.permute.xlu0 %1049
      %1051 = vrot.lane.b32.xlu0 %v702, 16
      %v1052 = vpop.permute.xlu0 %1051
      %1053 = vrot.lane.b32.xlu0 %v703, 16
      %v1054 = vpop.permute.xlu0 %1053
      %1055 = vrot.lane.b32.xlu0 %v704, 16
      %v1056 = vpop.permute.xlu0 %1055
      %v1057 = vsel %vm911, %v1050, %v1052
      %v1058 = vsel %vm911, %v1054, %v1056
      %v1060 = vsel %vm914, 0, %v1050
      %v1062 = vsel %vm914, 0, %v1054
      %v1065 = vunpack.c.l.b16 %v1060
      %v1066 = vunpack.c.l.b16 %v1057
      %v1067 = vunpack.c.h.b16 %v1060
      %v1068 = vunpack.c.h.b16 %v1057
      %v1069 = vunpack.c.l.b16 %v1062
      %v1070 = vunpack.c.l.b16 %v1058
      %v1071 = vunpack.c.h.b16 %v1062
      %v1072 = vunpack.c.h.b16 %v1058
      %v1073 = vpack.c.b16 %v1066, %v1065
      %v1074 = vpack.c.b16 %v1068, %v1067
      %v1075 = vpack.c.b16 %v1070, %v1069
      %v1076 = vpack.c.b16 %v1072, %v1071
      %1081 = vst [vmem:[#allocation3 + $0x120] sm:$0xff] %v1073
      %1082 = vst [vmem:[#allocation3 + $0x128] sm:$0xff] %v1074
      %1083 = vst [vmem:[#allocation3 + $0x130] sm:$0xff] %v1075
      %1084 = vst [vmem:[#allocation3 + $0x138] sm:$0xff] %v1076
      %v1085 = vunpack.c.l.b16 %v587
      %v1086 = vunpack.c.l.b16 %v588
      %v1087 = vunpack.c.h.b16 %v587
      %v1088 = vunpack.c.h.b16 %v588
      %v1089 = vunpack.c.l.b16 %v589
      %v1090 = vunpack.c.l.b16 %v590
      %v1091 = vunpack.c.h.b16 %v589
      %v1092 = vunpack.c.h.b16 %v590
      %v1093 = vpack.c.b16 %v1086, %v1085
      %v1094 = vpack.c.b16 %v1088, %v1087
      %v1095 = vpack.c.b16 %v1090, %v1089
      %v1096 = vpack.c.b16 %v1092, %v1091
      %1101 = vst [vmem:[#allocation3 + $0x140] sm:$0xff] %v1093
      %1102 = vst [vmem:[#allocation3 + $0x148] sm:$0xff] %v1094
      %1103 = vst [vmem:[#allocation3 + $0x150] sm:$0xff] %v1095
      %1104 = vst [vmem:[#allocation3 + $0x158] sm:$0xff] %v1096
      %v1105 = vunpack.c.l.b16 %v625
      %v1106 = vunpack.c.l.b16 %v626
      %v1107 = vunpack.c.h.b16 %v625
      %v1108 = vunpack.c.h.b16 %v626
      %v1109 = vunpack.c.l.b16 %v627
      %v1110 = vunpack.c.l.b16 %v628
      %v1111 = vunpack.c.h.b16 %v627
      %v1112 = vunpack.c.h.b16 %v628
      %v1113 = vpack.c.b16 %v1106, %v1105
      %v1114 = vpack.c.b16 %v1108, %v1107
      %v1115 = vpack.c.b16 %v1110, %v1109
      %v1116 = vpack.c.b16 %v1112, %v1111
      %1121 = vst [vmem:[#allocation3 + $0x160] sm:$0xff] %v1113
      %1122 = vst [vmem:[#allocation3 + $0x168] sm:$0xff] %v1114
      %1123 = vst [vmem:[#allocation3 + $0x170] sm:$0xff] %v1115
      %1124 = vst [vmem:[#allocation3 + $0x178] sm:$0xff] %v1116
      %v1125 = vunpack.c.l.b16 %v544
      %v1126 = vunpack.c.l.b16 %v545
      %v1127 = vunpack.c.h.b16 %v544
      %v1128 = vunpack.c.h.b16 %v545
      %v1129 = vunpack.c.l.b16 %v546
      %v1130 = vunpack.c.l.b16 %v547
      %v1131 = vunpack.c.h.b16 %v546
      %v1132 = vunpack.c.h.b16 %v547
      %v1133 = vpack.c.b16 %v1126, %v1125
      %v1134 = vpack.c.b16 %v1128, %v1127
      %v1135 = vpack.c.b16 %v1130, %v1129
      %v1136 = vpack.c.b16 %v1132, %v1131
      %1141 = vst [vmem:[#allocation3 + $0x180] sm:$0xff] %v1133
      %1142 = vst [vmem:[#allocation3 + $0x188] sm:$0xff] %v1134
      %1143 = vst [vmem:[#allocation3 + $0x190] sm:$0xff] %v1135
      %1144 = vst [vmem:[#allocation3 + $0x198] sm:$0xff] %v1136
      %v1145 = vunpack.c.l.b16 %v663
      %v1146 = vunpack.c.l.b16 %v664
      %v1147 = vunpack.c.h.b16 %v663
      %v1148 = vunpack.c.h.b16 %v664
      %v1149 = vunpack.c.l.b16 %v665
      %v1150 = vunpack.c.l.b16 %v666
      %v1151 = vunpack.c.h.b16 %v665
      %v1152 = vunpack.c.h.b16 %v666
      %v1153 = vpack.c.b16 %v1146, %v1145
      %v1154 = vpack.c.b16 %v1148, %v1147
      %v1155 = vpack.c.b16 %v1150, %v1149
      %v1156 = vpack.c.b16 %v1152, %v1151
      %1161 = vst [vmem:[#allocation3 + $0x1a0] sm:$0xff] %v1153
      %1162 = vst [vmem:[#allocation3 + $0x1a8] sm:$0xff] %v1154
      %1163 = vst [vmem:[#allocation3 + $0x1b0] sm:$0xff] %v1155
      %1164 = vst [vmem:[#allocation3 + $0x1b8] sm:$0xff] %v1156
      %v1165 = vunpack.c.l.b16 %v701
      %v1166 = vunpack.c.l.b16 %v702
      %v1167 = vunpack.c.h.b16 %v701
      %v1168 = vunpack.c.h.b16 %v702
      %v1169 = vunpack.c.l.b16 %v703
      %v1170 = vunpack.c.l.b16 %v704
      %v1171 = vunpack.c.h.b16 %v703
      %v1172 = vunpack.c.h.b16 %v704
      %v1173 = vpack.c.b16 %v1166, %v1165
      %v1174 = vpack.c.b16 %v1168, %v1167
      %v1175 = vpack.c.b16 %v1170, %v1169
      %v1176 = vpack.c.b16 %v1172, %v1171
      %1181 = vst [vmem:[#allocation3 + $0x1c0] sm:$0xff] %v1173
      %1182 = vst [vmem:[#allocation3 + $0x1c8] sm:$0xff] %v1174
      %1183 = vst [vmem:[#allocation3 + $0x1d0] sm:$0xff] %v1175
      %1184 = vst [vmem:[#allocation3 + $0x1d8] sm:$0xff] %v1176
      %1185 = vrot.lane.b32.xlu0 %v587, 112
      %v1186 = vpop.permute.xlu0 %1185
      %1187 = vrot.lane.b32.xlu0 %v588, 112
      %v1188 = vpop.permute.xlu0 %1187
      %1189 = vrot.lane.b32.xlu0 %v589, 112
      %v1190 = vpop.permute.xlu0 %1189
      %1191 = vrot.lane.b32.xlu0 %v590, 112
      %v1192 = vpop.permute.xlu0 %1191
      %vm1193 = vcmask 916480
      %v1194 = vsel %vm1193, %v1186, %v1188
      %v1195 = vsel %vm1193, %v1190, %v1192
      %vm1196 = vcmask 916480
      %v1198 = vsel %vm1196, %v1188, 0
      %v1200 = vsel %vm1196, %v1192, 0
      %v1203 = vunpack.c.l.b16 %v1194
      %v1204 = vunpack.c.l.b16 %v1198
      %v1205 = vunpack.c.h.b16 %v1194
      %v1206 = vunpack.c.h.b16 %v1198
      %v1207 = vunpack.c.l.b16 %v1195
      %v1208 = vunpack.c.l.b16 %v1200
      %v1209 = vunpack.c.h.b16 %v1195
      %v1210 = vunpack.c.h.b16 %v1200
      %v1211 = vpack.c.b16 %v1204, %v1203
      %v1212 = vpack.c.b16 %v1206, %v1205
      %v1213 = vpack.c.b16 %v1208, %v1207
      %v1214 = vpack.c.b16 %v1210, %v1209
      %1219 = vst [vmem:[#allocation3 + $0x1e0] sm:$0xff] %v1211
      %1220 = vst [vmem:[#allocation3 + $0x1e8] sm:$0xff] %v1212
      %1221 = vst [vmem:[#allocation3 + $0x1f0] sm:$0xff] %v1213
      %1222 = vst [vmem:[#allocation3 + $0x1f8] sm:$0xff] %v1214
      %1223 = vrot.lane.b32.xlu0 %v625, 112
      %v1224 = vpop.permute.xlu0 %1223
      %1225 = vrot.lane.b32.xlu0 %v626, 112
      %v1226 = vpop.permute.xlu0 %1225
      %1227 = vrot.lane.b32.xlu0 %v627, 112
      %v1228 = vpop.permute.xlu0 %1227
      %1229 = vrot.lane.b32.xlu0 %v628, 112
      %v1230 = vpop.permute.xlu0 %1229
      %v1231 = vsel %vm1193, %v1224, %v1226
      %v1232 = vsel %vm1193, %v1228, %v1230
      %v1234 = vsel %vm1196, %v1226, 0
      %v1236 = vsel %vm1196, %v1230, 0
      %v1239 = vunpack.c.l.b16 %v1231
      %v1240 = vunpack.c.l.b16 %v1234
      %v1241 = vunpack.c.h.b16 %v1231
      %v1242 = vunpack.c.h.b16 %v1234
      %v1243 = vunpack.c.l.b16 %v1232
      %v1244 = vunpack.c.l.b16 %v1236
      %v1245 = vunpack.c.h.b16 %v1232
      %v1246 = vunpack.c.h.b16 %v1236
      %v1247 = vpack.c.b16 %v1240, %v1239
      %v1248 = vpack.c.b16 %v1242, %v1241
      %v1249 = vpack.c.b16 %v1244, %v1243
      %v1250 = vpack.c.b16 %v1246, %v1245
      %1255 = vst [vmem:[#allocation3 + $0x200] sm:$0xff] %v1247
      %1256 = vst [vmem:[#allocation3 + $0x208] sm:$0xff] %v1248
      %1257 = vst [vmem:[#allocation3 + $0x210] sm:$0xff] %v1249
      %1258 = vst [vmem:[#allocation3 + $0x218] sm:$0xff] %v1250
      %1259 = vrot.lane.b32.xlu0 %v544, 112
      %v1260 = vpop.permute.xlu0 %1259
      %1261 = vrot.lane.b32.xlu0 %v545, 112
      %v1262 = vpop.permute.xlu0 %1261
      %1263 = vrot.lane.b32.xlu0 %v546, 112
      %v1264 = vpop.permute.xlu0 %1263
      %1265 = vrot.lane.b32.xlu0 %v547, 112
      %v1266 = vpop.permute.xlu0 %1265
      %v1267 = vsel %vm1193, %v1260, %v1262
      %v1268 = vsel %vm1193, %v1264, %v1266
      %v1270 = vsel %vm1196, %v1262, 0
      %v1272 = vsel %vm1196, %v1266, 0
      %v1275 = vunpack.c.l.b16 %v1267
      %v1276 = vunpack.c.l.b16 %v1270
      %v1277 = vunpack.c.h.b16 %v1267
      %v1278 = vunpack.c.h.b16 %v1270
      %v1279 = vunpack.c.l.b16 %v1268
      %v1280 = vunpack.c.l.b16 %v1272
      %v1281 = vunpack.c.h.b16 %v1268
      %v1282 = vunpack.c.h.b16 %v1272
      %v1283 = vpack.c.b16 %v1276, %v1275
      %v1284 = vpack.c.b16 %v1278, %v1277
      %v1285 = vpack.c.b16 %v1280, %v1279
      %v1286 = vpack.c.b16 %v1282, %v1281
      %1291 = vst [vmem:[#allocation3 + $0x220] sm:$0xff] %v1283
      %1292 = vst [vmem:[#allocation3 + $0x228] sm:$0xff] %v1284
      %1293 = vst [vmem:[#allocation3 + $0x230] sm:$0xff] %v1285
      %1294 = vst [vmem:[#allocation3 + $0x238] sm:$0xff] %v1286
      %1295 = vrot.lane.b32.xlu0 %v663, 112
      %v1296 = vpop.permute.xlu0 %1295
      %1297 = vrot.lane.b32.xlu0 %v664, 112
      %v1298 = vpop.permute.xlu0 %1297
      %1299 = vrot.lane.b32.xlu0 %v665, 112
      %v1300 = vpop.permute.xlu0 %1299
      %1301 = vrot.lane.b32.xlu0 %v666, 112
      %v1302 = vpop.permute.xlu0 %1301
      %v1303 = vsel %vm1193, %v1296, %v1298
      %v1304 = vsel %vm1193, %v1300, %v1302
      %v1306 = vsel %vm1196, %v1298, 0
      %v1308 = vsel %vm1196, %v1302, 0
      %v1311 = vunpack.c.l.b16 %v1303
      %v1312 = vunpack.c.l.b16 %v1306
      %v1313 = vunpack.c.h.b16 %v1303
      %v1314 = vunpack.c.h.b16 %v1306
      %v1315 = vunpack.c.l.b16 %v1304
      %v1316 = vunpack.c.l.b16 %v1308
      %v1317 = vunpack.c.h.b16 %v1304
      %v1318 = vunpack.c.h.b16 %v1308
      %v1319 = vpack.c.b16 %v1312, %v1311
      %v1320 = vpack.c.b16 %v1314, %v1313
      %v1321 = vpack.c.b16 %v1316, %v1315
      %v1322 = vpack.c.b16 %v1318, %v1317
      %1327 = vst [vmem:[#allocation3 + $0x240] sm:$0xff] %v1319
      %1328 = vst [vmem:[#allocation3 + $0x248] sm:$0xff] %v1320
      %1329 = vst [vmem:[#allocation3 + $0x250] sm:$0xff] %v1321
      %1330 = vst [vmem:[#allocation3 + $0x258] sm:$0xff] %v1322
      %1331 = vrot.lane.b32.xlu0 %v701, 112
      %v1332 = vpop.permute.xlu0 %1331
      %1333 = vrot.lane.b32.xlu0 %v702, 112
      %v1334 = vpop.permute.xlu0 %1333
      %1335 = vrot.lane.b32.xlu0 %v703, 112
      %v1336 = vpop.permute.xlu0 %1335
      %1337 = vrot.lane.b32.xlu0 %v704, 112
      %v1338 = vpop.permute.xlu0 %1337
      %v1339 = vsel %vm1193, %v1332, %v1334
      %v1340 = vsel %vm1193, %v1336, %v1338
      %v1342 = vsel %vm1196, %v1334, 0
      %v1344 = vsel %vm1196, %v1338, 0
      %v1347 = vunpack.c.l.b16 %v1339
      %v1348 = vunpack.c.l.b16 %v1342
      %v1349 = vunpack.c.h.b16 %v1339
      %v1350 = vunpack.c.h.b16 %v1342
      %v1351 = vunpack.c.l.b16 %v1340
      %v1352 = vunpack.c.l.b16 %v1344
      %v1353 = vunpack.c.h.b16 %v1340
      %v1354 = vunpack.c.h.b16 %v1344
      %v1355 = vpack.c.b16 %v1348, %v1347
      %v1356 = vpack.c.b16 %v1350, %v1349
      %v1357 = vpack.c.b16 %v1352, %v1351
      %v1358 = vpack.c.b16 %v1354, %v1353
      %1363 = vst [vmem:[#allocation3 + $0x260] sm:$0xff] %v1355
      %1364 = vst [vmem:[#allocation3 + $0x268] sm:$0xff] %v1356
      %1365 = vst [vmem:[#allocation3 + $0x270] sm:$0xff] %v1357
      %1366 = vst [vmem:[#allocation3 + $0x278] sm:$0xff] %v1358
      %1367 = vrot.lane.b32.xlu0 %v587, 96
      %v1368 = vpop.permute.xlu0 %1367
      %1369 = vrot.lane.b32.xlu0 %v588, 96
      %v1370 = vpop.permute.xlu0 %1369
      %1371 = vrot.lane.b32.xlu0 %v589, 96
      %v1372 = vpop.permute.xlu0 %1371
      %1373 = vrot.lane.b32.xlu0 %v590, 96
      %v1374 = vpop.permute.xlu0 %1373
      %vm1375 = vcmask 785408
      %v1376 = vsel %vm1375, %v1368, %v1370
      %v1377 = vsel %vm1375, %v1372, %v1374
      %vm1378 = vcmask 785408
      %v1380 = vsel %vm1378, %v1370, 0
      %v1382 = vsel %vm1378, %v1374, 0
      %v1385 = vunpack.c.l.b16 %v1376
      %v1386 = vunpack.c.l.b16 %v1380
      %v1387 = vunpack.c.h.b16 %v1376
      %v1388 = vunpack.c.h.b16 %v1380
      %v1389 = vunpack.c.l.b16 %v1377
      %v1390 = vunpack.c.l.b16 %v1382
      %v1391 = vunpack.c.h.b16 %v1377
      %v1392 = vunpack.c.h.b16 %v1382
      %v1393 = vpack.c.b16 %v1386, %v1385
      %v1394 = vpack.c.b16 %v1388, %v1387
      %v1395 = vpack.c.b16 %v1390, %v1389
      %v1396 = vpack.c.b16 %v1392, %v1391
      %1401 = vst [vmem:[#allocation3 + $0x280] sm:$0xff] %v1393
      %1402 = vst [vmem:[#allocation3 + $0x288] sm:$0xff] %v1394
      %1403 = vst [vmem:[#allocation3 + $0x290] sm:$0xff] %v1395
      %1404 = vst [vmem:[#allocation3 + $0x298] sm:$0xff] %v1396
      %1405 = vrot.lane.b32.xlu0 %v625, 96
      %v1406 = vpop.permute.xlu0 %1405
      %1407 = vrot.lane.b32.xlu0 %v626, 96
      %v1408 = vpop.permute.xlu0 %1407
      %1409 = vrot.lane.b32.xlu0 %v627, 96
      %v1410 = vpop.permute.xlu0 %1409
      %1411 = vrot.lane.b32.xlu0 %v628, 96
      %v1412 = vpop.permute.xlu0 %1411
      %v1413 = vsel %vm1375, %v1406, %v1408
      %v1414 = vsel %vm1375, %v1410, %v1412
      %v1416 = vsel %vm1378, %v1408, 0
      %v1418 = vsel %vm1378, %v1412, 0
      %v1421 = vunpack.c.l.b16 %v1413
      %v1422 = vunpack.c.l.b16 %v1416
      %v1423 = vunpack.c.h.b16 %v1413
      %v1424 = vunpack.c.h.b16 %v1416
      %v1425 = vunpack.c.l.b16 %v1414
      %v1426 = vunpack.c.l.b16 %v1418
      %v1427 = vunpack.c.h.b16 %v1414
      %v1428 = vunpack.c.h.b16 %v1418
      %v1429 = vpack.c.b16 %v1422, %v1421
      %v1430 = vpack.c.b16 %v1424, %v1423
      %v1431 = vpack.c.b16 %v1426, %v1425
      %v1432 = vpack.c.b16 %v1428, %v1427
      %1437 = vst [vmem:[#allocation3 + $0x2a0] sm:$0xff] %v1429
      %1438 = vst [vmem:[#allocation3 + $0x2a8] sm:$0xff] %v1430
      %1439 = vst [vmem:[#allocation3 + $0x2b0] sm:$0xff] %v1431
      %1440 = vst [vmem:[#allocation3 + $0x2b8] sm:$0xff] %v1432
      %1441 = vrot.lane.b32.xlu0 %v544, 96
      %v1442 = vpop.permute.xlu0 %1441
      %1443 = vrot.lane.b32.xlu0 %v545, 96
      %v1444 = vpop.permute.xlu0 %1443
      %1445 = vrot.lane.b32.xlu0 %v546, 96
      %v1446 = vpop.permute.xlu0 %1445
      %1447 = vrot.lane.b32.xlu0 %v547, 96
      %v1448 = vpop.permute.xlu0 %1447
      %v1449 = vsel %vm1375, %v1442, %v1444
      %v1450 = vsel %vm1375, %v1446, %v1448
      %v1452 = vsel %vm1378, %v1444, 0
      %v1454 = vsel %vm1378, %v1448, 0
      %v1457 = vunpack.c.l.b16 %v1449
      %v1458 = vunpack.c.l.b16 %v1452
      %v1459 = vunpack.c.h.b16 %v1449
      %v1460 = vunpack.c.h.b16 %v1452
      %v1461 = vunpack.c.l.b16 %v1450
      %v1462 = vunpack.c.l.b16 %v1454
      %v1463 = vunpack.c.h.b16 %v1450
      %v1464 = vunpack.c.h.b16 %v1454
      %v1465 = vpack.c.b16 %v1458, %v1457
      %v1466 = vpack.c.b16 %v1460, %v1459
      %v1467 = vpack.c.b16 %v1462, %v1461
      %v1468 = vpack.c.b16 %v1464, %v1463
      %1473 = vst [vmem:[#allocation3 + $0x2c0] sm:$0xff] %v1465
      %1474 = vst [vmem:[#allocation3 + $0x2c8] sm:$0xff] %v1466
      %1475 = vst [vmem:[#allocation3 + $0x2d0] sm:$0xff] %v1467
      %1476 = vst [vmem:[#allocation3 + $0x2d8] sm:$0xff] %v1468
      %1477 = vrot.lane.b32.xlu0 %v663, 96
      %v1478 = vpop.permute.xlu0 %1477
      %1479 = vrot.lane.b32.xlu0 %v664, 96
      %v1480 = vpop.permute.xlu0 %1479
      %1481 = vrot.lane.b32.xlu0 %v665, 96
      %v1482 = vpop.permute.xlu0 %1481
      %1483 = vrot.lane.b32.xlu0 %v666, 96
      %v1484 = vpop.permute.xlu0 %1483
      %v1485 = vsel %vm1375, %v1478, %v1480
      %v1486 = vsel %vm1375, %v1482, %v1484
      %v1488 = vsel %vm1378, %v1480, 0
      %v1490 = vsel %vm1378, %v1484, 0
      %v1493 = vunpack.c.l.b16 %v1485
      %v1494 = vunpack.c.l.b16 %v1488
      %v1495 = vunpack.c.h.b16 %v1485
      %v1496 = vunpack.c.h.b16 %v1488
      %v1497 = vunpack.c.l.b16 %v1486
      %v1498 = vunpack.c.l.b16 %v1490
      %v1499 = vunpack.c.h.b16 %v1486
      %v1500 = vunpack.c.h.b16 %v1490
      %v1501 = vpack.c.b16 %v1494, %v1493
      %v1502 = vpack.c.b16 %v1496, %v1495
      %v1503 = vpack.c.b16 %v1498, %v1497
      %v1504 = vpack.c.b16 %v1500, %v1499
      %1509 = vst [vmem:[#allocation3 + $0x2e0] sm:$0xff] %v1501
      %1510 = vst [vmem:[#allocation3 + $0x2e8] sm:$0xff] %v1502
      %1511 = vst [vmem:[#allocation3 + $0x2f0] sm:$0xff] %v1503
      %1512 = vst [vmem:[#allocation3 + $0x2f8] sm:$0xff] %v1504
      %1513 = vrot.lane.b32.xlu0 %v701, 96
      %v1514 = vpop.permute.xlu0 %1513
      %1515 = vrot.lane.b32.xlu0 %v702, 96
      %v1516 = vpop.permute.xlu0 %1515
      %1517 = vrot.lane.b32.xlu0 %v703, 96
      %v1518 = vpop.permute.xlu0 %1517
      %1519 = vrot.lane.b32.xlu0 %v704, 96
      %v1520 = vpop.permute.xlu0 %1519
      %v1521 = vsel %vm1375, %v1514, %v1516
      %v1522 = vsel %vm1375, %v1518, %v1520
      %v1524 = vsel %vm1378, %v1516, 0
      %v1526 = vsel %vm1378, %v1520, 0
      %v1529 = vunpack.c.l.b16 %v1521
      %v1530 = vunpack.c.l.b16 %v1524
      %v1531 = vunpack.c.h.b16 %v1521
      %v1532 = vunpack.c.h.b16 %v1524
      %v1533 = vunpack.c.l.b16 %v1522
      %v1534 = vunpack.c.l.b16 %v1526
      %v1535 = vunpack.c.h.b16 %v1522
      %v1536 = vunpack.c.h.b16 %v1526
      %v1537 = vpack.c.b16 %v1530, %v1529
      %v1538 = vpack.c.b16 %v1532, %v1531
      %v1539 = vpack.c.b16 %v1534, %v1533
      %v1540 = vpack.c.b16 %v1536, %v1535
      %1545 = vst [vmem:[#allocation3 + $0x300] sm:$0xff] %v1537
      %1546 = vst [vmem:[#allocation3 + $0x308] sm:$0xff] %v1538
      %1547 = vst [vmem:[#allocation3 + $0x310] sm:$0xff] %v1539
      %1548 = vst [vmem:[#allocation3 + $0x318] sm:$0xff] %v1540
      %v1549 = vld [vmem:[%s2] sm:$0xff]
      %v1550 = vld [vmem:[%s2 + $0x8] sm:$0xff]
      %v1551 = vld [vmem:[%s2 + $0x10] sm:$0xff]
      %v1552 = vld [vmem:[%s2 + $0x18] sm:$0xf]
      %v1553 = vld [vmem:[%s2 + $0x1c] sm:$0xff]
      %v1554 = vld [vmem:[%s2 + $0x24] sm:$0xff]
      %v1555 = vld [vmem:[%s2 + $0x2c] sm:$0xff]
      %v1556 = vld [vmem:[%s2 + $0x34] sm:$0xf]
      %v1557 = vld [vmem:[%s2 + $0x38] sm:$0xff]
      %v1558 = vld [vmem:[%s2 + $0x40] sm:$0xff]
      %v1559 = vld [vmem:[%s2 + $0x48] sm:$0xff]
      %v1560 = vld [vmem:[%s2 + $0x50] sm:$0xf]
      %v1561 = vld [vmem:[%s2 + $0x54] sm:$0xff]
      %v1562 = vld [vmem:[%s2 + $0x5c] sm:$0xff]
      %v1563 = vld [vmem:[%s2 + $0x64] sm:$0xff]
      %v1564 = vld [vmem:[%s2 + $0x6c] sm:$0xf]
      %v1565 = vld [vmem:[%s2 + $0x70] sm:$0xff]
      %v1566 = vld [vmem:[%s2 + $0x78] sm:$0xff]
      %v1567 = vld [vmem:[%s2 + $0x80] sm:$0xff]
      %v1568 = vld [vmem:[%s2 + $0x88] sm:$0xf]
      %v1569 = vld [vmem:[%s2 + $0x8c] sm:$0xff]
      %v1570 = vld [vmem:[%s2 + $0x94] sm:$0xff]
      %v1571 = vld [vmem:[%s2 + $0x9c] sm:$0xff]
      %v1572 = vld [vmem:[%s2 + $0xa4] sm:$0xf]
      %v1573 = vld [vmem:[#allocation3] sm:$0xff]
      %v1574 = vld [vmem:[#allocation3 + $0x8] sm:$0xff]
      %v1575 = vld [vmem:[#allocation3 + $0x10] sm:$0xff]
      %v1576 = vld [vmem:[#allocation3 + $0x18] sm:$0xff]
      %v1577 = vld [vmem:[#allocation3 + $0x20] sm:$0xff]
      %v1578 = vld [vmem:[#allocation3 + $0x28] sm:$0xff]
      %v1579 = vld [vmem:[#allocation3 + $0x30] sm:$0xff]
      %v1580 = vld [vmem:[#allocation3 + $0x38] sm:$0xff]
      %v1581 = vld [vmem:[#allocation3 + $0x40] sm:$0xff]
      %v1582 = vld [vmem:[#allocation3 + $0x48] sm:$0xff]
      %v1583 = vld [vmem:[#allocation3 + $0x50] sm:$0xff]
      %v1584 = vld [vmem:[#allocation3 + $0x58] sm:$0xff]
      %v1585 = vld [vmem:[#allocation3 + $0x60] sm:$0xff]
      %v1586 = vld [vmem:[#allocation3 + $0x68] sm:$0xff]
      %v1587 = vld [vmem:[#allocation3 + $0x70] sm:$0xff]
      %v1588 = vld [vmem:[#allocation3 + $0x78] sm:$0xff]
      %v1589 = vld [vmem:[#allocation3 + $0x80] sm:$0xff]
      %v1590 = vld [vmem:[#allocation3 + $0x88] sm:$0xff]
      %v1591 = vld [vmem:[#allocation3 + $0x90] sm:$0xff]
      %v1592 = vld [vmem:[#allocation3 + $0x98] sm:$0xff]
      %v1593 = vld [vmem:[#allocation3 + $0xa0] sm:$0xff]
      %v1594 = vld [vmem:[#allocation3 + $0xa8] sm:$0xff]
      %v1595 = vld [vmem:[#allocation3 + $0xb0] sm:$0xff]
      %v1596 = vld [vmem:[#allocation3 + $0xb8] sm:$0xff]
      %v1597 = vld [vmem:[#allocation3 + $0xc0] sm:$0xff]
      %v1598 = vld [vmem:[#allocation3 + $0xc8] sm:$0xff]
      %v1599 = vld [vmem:[#allocation3 + $0xd0] sm:$0xff]
      %v1600 = vld [vmem:[#allocation3 + $0xd8] sm:$0xff]
      %v1601 = vld [vmem:[#allocation3 + $0xe0] sm:$0xff]
      %v1602 = vld [vmem:[#allocation3 + $0xe8] sm:$0xff]
      %v1603 = vld [vmem:[#allocation3 + $0xf0] sm:$0xff]
      %v1604 = vld [vmem:[#allocation3 + $0xf8] sm:$0xff]
      %v1605 = vld [vmem:[#allocation3 + $0x100] sm:$0xff]
      %v1606 = vld [vmem:[#allocation3 + $0x108] sm:$0xff]
      %v1607 = vld [vmem:[#allocation3 + $0x110] sm:$0xff]
      %v1608 = vld [vmem:[#allocation3 + $0x118] sm:$0xff]
      %v1609 = vld [vmem:[#allocation3 + $0x120] sm:$0xff]
      %v1610 = vld [vmem:[#allocation3 + $0x128] sm:$0xff]
      %v1611 = vld [vmem:[#allocation3 + $0x130] sm:$0xff]
      %v1612 = vld [vmem:[#allocation3 + $0x138] sm:$0xff]
      %v1613 = vld [vmem:[#allocation3 + $0x140] sm:$0xff]
      %v1614 = vld [vmem:[#allocation3 + $0x148] sm:$0xff]
      %v1615 = vld [vmem:[#allocation3 + $0x150] sm:$0xff]
      %v1616 = vld [vmem:[#allocation3 + $0x158] sm:$0xff]
      %v1617 = vld [vmem:[#allocation3 + $0x160] sm:$0xff]
      %v1618 = vld [vmem:[#allocation3 + $0x168] sm:$0xff]
      %v1619 = vld [vmem:[#allocation3 + $0x170] sm:$0xff]
      %v1620 = vld [vmem:[#allocation3 + $0x178] sm:$0xff]
      %v1621 = vld [vmem:[#allocation3 + $0x180] sm:$0xff]
      %v1622 = vld [vmem:[#allocation3 + $0x188] sm:$0xff]
      %v1623 = vld [vmem:[#allocation3 + $0x190] sm:$0xff]
      %v1624 = vld [vmem:[#allocation3 + $0x198] sm:$0xff]
      %v1625 = vld [vmem:[#allocation3 + $0x1a0] sm:$0xff]
      %v1626 = vld [vmem:[#allocation3 + $0x1a8] sm:$0xff]
      %v1627 = vld [vmem:[#allocation3 + $0x1b0] sm:$0xff]
      %v1628 = vld [vmem:[#allocation3 + $0x1b8] sm:$0xff]
      %v1629 = vld [vmem:[#allocation3 + $0x1c0] sm:$0xff]
      %v1630 = vld [vmem:[#allocation3 + $0x1c8] sm:$0xff]
      %v1631 = vld [vmem:[#allocation3 + $0x1d0] sm:$0xff]
      %v1632 = vld [vmem:[#allocation3 + $0x1d8] sm:$0xff]
      %v1633 = vld [vmem:[#allocation3 + $0x1e0] sm:$0xff]
      %v1634 = vld [vmem:[#allocation3 + $0x1e8] sm:$0xff]
      %v1635 = vld [vmem:[#allocation3 + $0x1f0] sm:$0xff]
      %v1636 = vld [vmem:[#allocation3 + $0x1f8] sm:$0xff]
      %v1637 = vld [vmem:[#allocation3 + $0x200] sm:$0xff]
      %v1638 = vld [vmem:[#allocation3 + $0x208] sm:$0xff]
      %v1639 = vld [vmem:[#allocation3 + $0x210] sm:$0xff]
      %v1640 = vld [vmem:[#allocation3 + $0x218] sm:$0xff]
      %v1641 = vld [vmem:[#allocation3 + $0x220] sm:$0xff]
      %v1642 = vld [vmem:[#allocation3 + $0x228] sm:$0xff]
      %v1643 = vld [vmem:[#allocation3 + $0x230] sm:$0xff]
      %v1644 = vld [vmem:[#allocation3 + $0x238] sm:$0xff]
      %v1645 = vld [vmem:[#allocation3 + $0x240] sm:$0xff]
      %v1646 = vld [vmem:[#allocation3 + $0x248] sm:$0xff]
      %v1647 = vld [vmem:[#allocation3 + $0x250] sm:$0xff]
      %v1648 = vld [vmem:[#allocation3 + $0x258] sm:$0xff]
      %v1649 = vld [vmem:[#allocation3 + $0x260] sm:$0xff]
      %v1650 = vld [vmem:[#allocation3 + $0x268] sm:$0xff]
      %v1651 = vld [vmem:[#allocation3 + $0x270] sm:$0xff]
      %v1652 = vld [vmem:[#allocation3 + $0x278] sm:$0xff]
      %v1653 = vld [vmem:[#allocation3 + $0x280] sm:$0xff]
      %v1654 = vld [vmem:[#allocation3 + $0x288] sm:$0xff]
      %v1655 = vld [vmem:[#allocation3 + $0x290] sm:$0xff]
      %v1656 = vld [vmem:[#allocation3 + $0x298] sm:$0xff]
      %v1657 = vld [vmem:[#allocation3 + $0x2a0] sm:$0xff]
      %v1658 = vld [vmem:[#allocation3 + $0x2a8] sm:$0xff]
      %v1659 = vld [vmem:[#allocation3 + $0x2b0] sm:$0xff]
      %v1660 = vld [vmem:[#allocation3 + $0x2b8] sm:$0xff]
      %v1661 = vld [vmem:[#allocation3 + $0x2c0] sm:$0xff]
      %v1662 = vld [vmem:[#allocation3 + $0x2c8] sm:$0xff]
      %v1663 = vld [vmem:[#allocation3 + $0x2d0] sm:$0xff]
      %v1664 = vld [vmem:[#allocation3 + $0x2d8] sm:$0xff]
      %v1665 = vld [vmem:[#allocation3 + $0x2e0] sm:$0xff]
      %v1666 = vld [vmem:[#allocation3 + $0x2e8] sm:$0xff]
      %v1667 = vld [vmem:[#allocation3 + $0x2f0] sm:$0xff]
      %v1668 = vld [vmem:[#allocation3 + $0x2f8] sm:$0xff]
      %v1669 = vld [vmem:[#allocation3 + $0x300] sm:$0xff]
      %v1670 = vld [vmem:[#allocation3 + $0x308] sm:$0xff]
      %v1671 = vld [vmem:[#allocation3 + $0x310] sm:$0xff]
      %v1672 = vld [vmem:[#allocation3 + $0x318] sm:$0xff]
      %v1697 = vunpack.c.l.b16 %v1549
      %v1698 = vunpack.c.h.b16 %v1549
      %v1699 = vunpack.c.l.b16 %v1550
      %v1700 = vunpack.c.h.b16 %v1550
      %v1701 = vunpack.c.l.b16 %v1551
      %v1702 = vunpack.c.h.b16 %v1551
      %v1703 = vunpack.c.l.b16 %v1552
      %v1704 = vunpack.c.l.b16 %v1553
      %v1705 = vunpack.c.h.b16 %v1553
      %v1706 = vunpack.c.l.b16 %v1554
      %v1707 = vunpack.c.h.b16 %v1554
      %v1708 = vunpack.c.l.b16 %v1555
      %v1709 = vunpack.c.h.b16 %v1555
      %v1710 = vunpack.c.l.b16 %v1556
      %v1711 = vunpack.c.l.b16 %v1557
      %v1712 = vunpack.c.h.b16 %v1557
      %v1713 = vunpack.c.l.b16 %v1558
      %v1714 = vunpack.c.h.b16 %v1558
      %v1715 = vunpack.c.l.b16 %v1559
      %v1716 = vunpack.c.h.b16 %v1559
      %v1717 = vunpack.c.l.b16 %v1560
      %v1718 = vunpack.c.l.b16 %v1561
      %v1719 = vunpack.c.h.b16 %v1561
      %v1720 = vunpack.c.l.b16 %v1562
      %v1721 = vunpack.c.h.b16 %v1562
      %v1722 = vunpack.c.l.b16 %v1563
      %v1723 = vunpack.c.h.b16 %v1563
      %v1724 = vunpack.c.l.b16 %v1564
      %v1725 = vunpack.c.l.b16 %v1565
      %v1726 = vunpack.c.h.b16 %v1565
      %v1727 = vunpack.c.l.b16 %v1566
      %v1728 = vunpack.c.h.b16 %v1566
      %v1729 = vunpack.c.l.b16 %v1567
      %v1730 = vunpack.c.h.b16 %v1567
      %v1731 = vunpack.c.l.b16 %v1568
      %v1732 = vunpack.c.l.b16 %v1569
      %v1733 = vunpack.c.h.b16 %v1569
      %v1734 = vunpack.c.l.b16 %v1570
      %v1735 = vunpack.c.h.b16 %v1570
      %v1736 = vunpack.c.l.b16 %v1571
      %v1737 = vunpack.c.h.b16 %v1571
      %v1738 = vunpack.c.l.b16 %v1572
      %v1739 = vpack.c.b16 %v1704, %v1697
      %v1740 = vpack.c.b16 %v1705, %v1698
      %v1741 = vpack.c.b16 %v1706, %v1699
      %v1742 = vpack.c.b16 %v1707, %v1700
      %v1743 = vpack.c.b16 %v1708, %v1701
      %v1744 = vpack.c.b16 %v1709, %v1702
      %v1745 = vpack.c.b16 %v1710, %v1703
      %v1746 = vpack.c.b16 %v1718, %v1711
      %v1747 = vpack.c.b16 %v1719, %v1712
      %v1748 = vpack.c.b16 %v1720, %v1713
      %v1749 = vpack.c.b16 %v1721, %v1714
      %v1750 = vpack.c.b16 %v1722, %v1715
      %v1751 = vpack.c.b16 %v1723, %v1716
      %v1752 = vpack.c.b16 %v1724, %v1717
      %v1753 = vpack.c.b16 %v1732, %v1725
      %v1754 = vpack.c.b16 %v1733, %v1726
      %v1755 = vpack.c.b16 %v1734, %v1727
      %v1756 = vpack.c.b16 %v1735, %v1728
      %v1757 = vpack.c.b16 %v1736, %v1729
      %v1758 = vpack.c.b16 %v1737, %v1730
      %v1759 = vpack.c.b16 %v1738, %v1731
      %v1878 = vunpack.c.l.b16 %v1573
      %v1879 = vunpack.c.h.b16 %v1573
      %v1880 = vunpack.c.l.b16 %v1574
      %v1881 = vunpack.c.h.b16 %v1574
      %v1882 = vunpack.c.l.b16 %v1575
      %v1883 = vunpack.c.h.b16 %v1575
      %v1884 = vunpack.c.l.b16 %v1576
      %v1885 = vunpack.c.h.b16 %v1576
      %v1886 = vunpack.c.l.b16 %v1577
      %v1887 = vunpack.c.h.b16 %v1577
      %v1888 = vunpack.c.l.b16 %v1578
      %v1889 = vunpack.c.h.b16 %v1578
      %v1890 = vunpack.c.l.b16 %v1579
      %v1891 = vunpack.c.h.b16 %v1579
      %v1892 = vunpack.c.l.b16 %v1580
      %v1893 = vunpack.c.h.b16 %v1580
      %v1894 = vunpack.c.l.b16 %v1581
      %v1895 = vunpack.c.h.b16 %v1581
      %v1896 = vunpack.c.l.b16 %v1582
      %v1897 = vunpack.c.h.b16 %v1582
      %v1898 = vunpack.c.l.b16 %v1583
      %v1899 = vunpack.c.h.b16 %v1583
      %v1900 = vunpack.c.l.b16 %v1584
      %v1901 = vunpack.c.h.b16 %v1584
      %v1902 = vunpack.c.l.b16 %v1585
      %v1903 = vunpack.c.h.b16 %v1585
      %v1904 = vunpack.c.l.b16 %v1586
      %v1905 = vunpack.c.h.b16 %v1586
      %v1906 = vunpack.c.l.b16 %v1587
      %v1907 = vunpack.c.h.b16 %v1587
      %v1908 = vunpack.c.l.b16 %v1588
      %v1909 = vunpack.c.h.b16 %v1588
      %v1910 = vunpack.c.l.b16 %v1589
      %v1911 = vunpack.c.h.b16 %v1589
      %v1912 = vunpack.c.l.b16 %v1590
      %v1913 = vunpack.c.h.b16 %v1590
      %v1914 = vunpack.c.l.b16 %v1591
      %v1915 = vunpack.c.h.b16 %v1591
      %v1916 = vunpack.c.l.b16 %v1592
      %v1917 = vunpack.c.h.b16 %v1592
      %v1918 = vunpack.c.l.b16 %v1593
      %v1919 = vunpack.c.h.b16 %v1593
      %v1920 = vunpack.c.l.b16 %v1594
      %v1921 = vunpack.c.h.b16 %v1594
      %v1922 = vunpack.c.l.b16 %v1595
      %v1923 = vunpack.c.h.b16 %v1595
      %v1924 = vunpack.c.l.b16 %v1596
      %v1925 = vunpack.c.h.b16 %v1596
      %v1926 = vunpack.c.l.b16 %v1597
      %v1927 = vunpack.c.h.b16 %v1597
      %v1928 = vunpack.c.l.b16 %v1598
      %v1929 = vunpack.c.h.b16 %v1598
      %v1930 = vunpack.c.l.b16 %v1599
      %v1931 = vunpack.c.h.b16 %v1599
      %v1932 = vunpack.c.l.b16 %v1600
      %v1933 = vunpack.c.h.b16 %v1600
      %v1934 = vunpack.c.l.b16 %v1601
      %v1935 = vunpack.c.h.b16 %v1601
      %v1936 = vunpack.c.l.b16 %v1602
      %v1937 = vunpack.c.h.b16 %v1602
      %v1938 = vunpack.c.l.b16 %v1603
      %v1939 = vunpack.c.h.b16 %v1603
      %v1940 = vunpack.c.l.b16 %v1604
      %v1941 = vunpack.c.h.b16 %v1604
      %v1942 = vunpack.c.l.b16 %v1605
      %v1943 = vunpack.c.h.b16 %v1605
      %v1944 = vunpack.c.l.b16 %v1606
      %v1945 = vunpack.c.h.b16 %v1606
      %v1946 = vunpack.c.l.b16 %v1607
      %v1947 = vunpack.c.h.b16 %v1607
      %v1948 = vunpack.c.l.b16 %v1608
      %v1949 = vunpack.c.h.b16 %v1608
      %v1950 = vunpack.c.l.b16 %v1609
      %v1951 = vunpack.c.h.b16 %v1609
      %v1952 = vunpack.c.l.b16 %v1610
      %v1953 = vunpack.c.h.b16 %v1610
      %v1954 = vunpack.c.l.b16 %v1611
      %v1955 = vunpack.c.h.b16 %v1611
      %v1956 = vunpack.c.l.b16 %v1612
      %v1957 = vunpack.c.h.b16 %v1612
      %v1958 = vunpack.c.l.b16 %v1613
      %v1959 = vunpack.c.h.b16 %v1613
      %v1960 = vunpack.c.l.b16 %v1614
      %v1961 = vunpack.c.h.b16 %v1614
      %v1962 = vunpack.c.l.b16 %v1615
      %v1963 = vunpack.c.h.b16 %v1615
      %v1964 = vunpack.c.l.b16 %v1616
      %v1965 = vunpack.c.h.b16 %v1616
      %v1966 = vunpack.c.l.b16 %v1617
      %v1967 = vunpack.c.h.b16 %v1617
      %v1968 = vunpack.c.l.b16 %v1618
      %v1969 = vunpack.c.h.b16 %v1618
      %v1970 = vunpack.c.l.b16 %v1619
      %v1971 = vunpack.c.h.b16 %v1619
      %v1972 = vunpack.c.l.b16 %v1620
      %v1973 = vunpack.c.h.b16 %v1620
      %v1974 = vunpack.c.l.b16 %v1621
      %v1975 = vunpack.c.h.b16 %v1621
      %v1976 = vunpack.c.l.b16 %v1622
      %v1977 = vunpack.c.h.b16 %v1622
      %v1978 = vunpack.c.l.b16 %v1623
      %v1979 = vunpack.c.h.b16 %v1623
      %v1980 = vunpack.c.l.b16 %v1624
      %v1981 = vunpack.c.h.b16 %v1624
      %v1982 = vunpack.c.l.b16 %v1625
      %v1983 = vunpack.c.h.b16 %v1625
      %v1984 = vunpack.c.l.b16 %v1626
      %v1985 = vunpack.c.h.b16 %v1626
      %v1986 = vunpack.c.l.b16 %v1627
      %v1987 = vunpack.c.h.b16 %v1627
      %v1988 = vunpack.c.l.b16 %v1628
      %v1989 = vunpack.c.h.b16 %v1628
      %v1990 = vunpack.c.l.b16 %v1629
      %v1991 = vunpack.c.h.b16 %v1629
      %v1992 = vunpack.c.l.b16 %v1630
      %v1993 = vunpack.c.h.b16 %v1630
      %v1994 = vunpack.c.l.b16 %v1631
      %v1995 = vunpack.c.h.b16 %v1631
      %v1996 = vunpack.c.l.b16 %v1632
      %v1997 = vunpack.c.h.b16 %v1632
      %v1998 = vunpack.c.l.b16 %v1633
      %v1999 = vunpack.c.h.b16 %v1633
      %v2000 = vunpack.c.l.b16 %v1634
      %v2001 = vunpack.c.h.b16 %v1634
      %v2002 = vunpack.c.l.b16 %v1635
      %v2003 = vunpack.c.h.b16 %v1635
      %v2004 = vunpack.c.l.b16 %v1636
      %v2005 = vunpack.c.h.b16 %v1636
      %v2006 = vunpack.c.l.b16 %v1637
      %v2007 = vunpack.c.h.b16 %v1637
      %v2008 = vunpack.c.l.b16 %v1638
      %v2009 = vunpack.c.h.b16 %v1638
      %v2010 = vunpack.c.l.b16 %v1639
      %v2011 = vunpack.c.h.b16 %v1639
      %v2012 = vunpack.c.l.b16 %v1640
      %v2013 = vunpack.c.h.b16 %v1640
      %v2014 = vunpack.c.l.b16 %v1641
      %v2015 = vunpack.c.h.b16 %v1641
      %v2016 = vunpack.c.l.b16 %v1642
      %v2017 = vunpack.c.h.b16 %v1642
      %v2018 = vunpack.c.l.b16 %v1643
      %v2019 = vunpack.c.h.b16 %v1643
      %v2020 = vunpack.c.l.b16 %v1644
      %v2021 = vunpack.c.h.b16 %v1644
      %v2022 = vunpack.c.l.b16 %v1645
      %v2023 = vunpack.c.h.b16 %v1645
      %v2024 = vunpack.c.l.b16 %v1646
      %v2025 = vunpack.c.h.b16 %v1646
      %v2026 = vunpack.c.l.b16 %v1647
      %v2027 = vunpack.c.h.b16 %v1647
      %v2028 = vunpack.c.l.b16 %v1648
      %v2029 = vunpack.c.h.b16 %v1648
      %v2030 = vunpack.c.l.b16 %v1649
      %v2031 = vunpack.c.h.b16 %v1649
      %v2032 = vunpack.c.l.b16 %v1650
      %v2033 = vunpack.c.h.b16 %v1650
      %v2034 = vunpack.c.l.b16 %v1651
      %v2035 = vunpack.c.h.b16 %v1651
      %v2036 = vunpack.c.l.b16 %v1652
      %v2037 = vunpack.c.h.b16 %v1652
      %v2038 = vunpack.c.l.b16 %v1653
      %v2039 = vunpack.c.h.b16 %v1653
      %v2040 = vunpack.c.l.b16 %v1654
      %v2041 = vunpack.c.h.b16 %v1654
      %v2042 = vunpack.c.l.b16 %v1655
      %v2043 = vunpack.c.h.b16 %v1655
      %v2044 = vunpack.c.l.b16 %v1656
      %v2045 = vunpack.c.h.b16 %v1656
      %v2046 = vunpack.c.l.b16 %v1657
      %v2047 = vunpack.c.h.b16 %v1657
      %v2048 = vunpack.c.l.b16 %v1658
      %v2049 = vunpack.c.h.b16 %v1658
      %v2050 = vunpack.c.l.b16 %v1659
      %v2051 = vunpack.c.h.b16 %v1659
      %v2052 = vunpack.c.l.b16 %v1660
      %v2053 = vunpack.c.h.b16 %v1660
      %v2054 = vunpack.c.l.b16 %v1661
      %v2055 = vunpack.c.h.b16 %v1661
      %v2056 = vunpack.c.l.b16 %v1662
      %v2057 = vunpack.c.h.b16 %v1662
      %v2058 = vunpack.c.l.b16 %v1663
      %v2059 = vunpack.c.h.b16 %v1663
      %v2060 = vunpack.c.l.b16 %v1664
      %v2061 = vunpack.c.h.b16 %v1664
      %v2062 = vunpack.c.l.b16 %v1665
      %v2063 = vunpack.c.h.b16 %v1665
      %v2064 = vunpack.c.l.b16 %v1666
      %v2065 = vunpack.c.h.b16 %v1666
      %v2066 = vunpack.c.l.b16 %v1667
      %v2067 = vunpack.c.h.b16 %v1667
      %v2068 = vunpack.c.l.b16 %v1668
      %v2069 = vunpack.c.h.b16 %v1668
      %v2070 = vunpack.c.l.b16 %v1669
      %v2071 = vunpack.c.h.b16 %v1669
      %v2072 = vunpack.c.l.b16 %v1670
      %v2073 = vunpack.c.h.b16 %v1670
      %v2074 = vunpack.c.l.b16 %v1671
      %v2075 = vunpack.c.h.b16 %v1671
      %v2076 = vunpack.c.l.b16 %v1672
      %v2077 = vunpack.c.h.b16 %v1672
      %v2078 = vpack.c.b16 %v1880, %v1878
      %v2079 = vpack.c.b16 %v1881, %v1879
      %v2080 = vpack.c.b16 %v1884, %v1882
      %v2081 = vpack.c.b16 %v1885, %v1883
      %v2082 = vpack.c.b16 %v1888, %v1886
      %v2083 = vpack.c.b16 %v1889, %v1887
      %v2084 = vpack.c.b16 %v1892, %v1890
      %v2085 = vpack.c.b16 %v1893, %v1891
      %v2086 = vpack.c.b16 %v1896, %v1894
      %v2087 = vpack.c.b16 %v1897, %v1895
      %v2088 = vpack.c.b16 %v1900, %v1898
      %v2089 = vpack.c.b16 %v1901, %v1899
      %v2090 = vpack.c.b16 %v1904, %v1902
      %v2091 = vpack.c.b16 %v1905, %v1903
      %v2092 = vpack.c.b16 %v1908, %v1906
      %v2093 = vpack.c.b16 %v1909, %v1907
      %v2094 = vpack.c.b16 %v1912, %v1910
      %v2095 = vpack.c.b16 %v1913, %v1911
      %v2096 = vpack.c.b16 %v1916, %v1914
      %v2097 = vpack.c.b16 %v1917, %v1915
      %v2098 = vpack.c.b16 %v1920, %v1918
      %v2099 = vpack.c.b16 %v1921, %v1919
      %v2100 = vpack.c.b16 %v1924, %v1922
      %v2101 = vpack.c.b16 %v1925, %v1923
      %v2102 = vpack.c.b16 %v1928, %v1926
      %v2103 = vpack.c.b16 %v1929, %v1927
      %v2104 = vpack.c.b16 %v1932, %v1930
      %v2105 = vpack.c.b16 %v1933, %v1931
      %v2106 = vpack.c.b16 %v1936, %v1934
      %v2107 = vpack.c.b16 %v1937, %v1935
      %v2108 = vpack.c.b16 %v1940, %v1938
      %v2109 = vpack.c.b16 %v1941, %v1939
      %v2110 = vpack.c.b16 %v1944, %v1942
      %v2111 = vpack.c.b16 %v1945, %v1943
      %v2112 = vpack.c.b16 %v1948, %v1946
      %v2113 = vpack.c.b16 %v1949, %v1947
      %v2114 = vpack.c.b16 %v1952, %v1950
      %v2115 = vpack.c.b16 %v1953, %v1951
      %v2116 = vpack.c.b16 %v1956, %v1954
      %v2117 = vpack.c.b16 %v1957, %v1955
      %v2118 = vpack.c.b16 %v1960, %v1958
      %v2119 = vpack.c.b16 %v1961, %v1959
      %v2120 = vpack.c.b16 %v1964, %v1962
      %v2121 = vpack.c.b16 %v1965, %v1963
      %v2122 = vpack.c.b16 %v1968, %v1966
      %v2123 = vpack.c.b16 %v1969, %v1967
      %v2124 = vpack.c.b16 %v1972, %v1970
      %v2125 = vpack.c.b16 %v1973, %v1971
      %v2126 = vpack.c.b16 %v1976, %v1974
      %v2127 = vpack.c.b16 %v1977, %v1975
      %v2128 = vpack.c.b16 %v1980, %v1978
      %v2129 = vpack.c.b16 %v1981, %v1979
      %v2130 = vpack.c.b16 %v1984, %v1982
      %v2131 = vpack.c.b16 %v1985, %v1983
      %v2132 = vpack.c.b16 %v1988, %v1986
      %v2133 = vpack.c.b16 %v1989, %v1987
      %v2134 = vpack.c.b16 %v1992, %v1990
      %v2135 = vpack.c.b16 %v1993, %v1991
      %v2136 = vpack.c.b16 %v1996, %v1994
      %v2137 = vpack.c.b16 %v1997, %v1995
      %v2138 = vpack.c.b16 %v2000, %v1998
      %v2139 = vpack.c.b16 %v2001, %v1999
      %v2140 = vpack.c.b16 %v2004, %v2002
      %v2141 = vpack.c.b16 %v2005, %v2003
      %v2142 = vpack.c.b16 %v2008, %v2006
      %v2143 = vpack.c.b16 %v2009, %v2007
      %v2144 = vpack.c.b16 %v2012, %v2010
      %v2145 = vpack.c.b16 %v2013, %v2011
      %v2146 = vpack.c.b16 %v2016, %v2014
      %v2147 = vpack.c.b16 %v2017, %v2015
      %v2148 = vpack.c.b16 %v2020, %v2018
      %v2149 = vpack.c.b16 %v2021, %v2019
      %v2150 = vpack.c.b16 %v2024, %v2022
      %v2151 = vpack.c.b16 %v2025, %v2023
      %v2152 = vpack.c.b16 %v2028, %v2026
      %v2153 = vpack.c.b16 %v2029, %v2027
      %v2154 = vpack.c.b16 %v2032, %v2030
      %v2155 = vpack.c.b16 %v2033, %v2031
      %v2156 = vpack.c.b16 %v2036, %v2034
      %v2157 = vpack.c.b16 %v2037, %v2035
      %v2158 = vpack.c.b16 %v2040, %v2038
      %v2159 = vpack.c.b16 %v2041, %v2039
      %v2160 = vpack.c.b16 %v2044, %v2042
      %v2161 = vpack.c.b16 %v2045, %v2043
      %v2162 = vpack.c.b16 %v2048, %v2046
      %v2163 = vpack.c.b16 %v2049, %v2047
      %v2164 = vpack.c.b16 %v2052, %v2050
      %v2165 = vpack.c.b16 %v2053, %v2051
      %v2166 = vpack.c.b16 %v2056, %v2054
      %v2167 = vpack.c.b16 %v2057, %v2055
      %v2168 = vpack.c.b16 %v2060, %v2058
      %v2169 = vpack.c.b16 %v2061, %v2059
      %v2170 = vpack.c.b16 %v2064, %v2062
      %v2171 = vpack.c.b16 %v2065, %v2063
      %v2172 = vpack.c.b16 %v2068, %v2066
      %v2173 = vpack.c.b16 %v2069, %v2067
      %v2174 = vpack.c.b16 %v2072, %v2070
      %v2175 = vpack.c.b16 %v2073, %v2071
      %v2176 = vpack.c.b16 %v2076, %v2074
      %v2177 = vpack.c.b16 %v2077, %v2075
      %v2279 = vsel %vm720, %v1745, 0
      %v2282 = vsel %vm720, %v1752, 0
      %v2285 = vsel %vm720, %v1759, 0
      %2287 = vmatprep.subr.bf16.mxu0 %v2093
      %2288 = vmatpush1.bf16.msra.mxu0 %v2092
      %2289 = vmatprep.subr.bf16.mxu0 %v2091
      %2290 = vmatpush1.bf16.msra.mxu0 %v2090
      %2291 = vmatprep.subr.bf16.mxu0 %v2089
      %2292 = vmatpush1.bf16.msra.mxu0 %v2088
      %2293 = vmatprep.subr.bf16.mxu0 %v2087
      %2294 = vmatpush1.bf16.msra.mxu0 %v2086
      %2295 = vmatprep.subr.bf16.mxu0 %v2085
      %2296 = vmatpush1.bf16.msra.mxu0 %v2084
      %2297 = vmatprep.subr.bf16.mxu0 %v2083
      %2298 = vmatpush1.bf16.msra.mxu0 %v2082
      %2299 = vmatprep.subr.bf16.mxu0 %v2081
      %2300 = vmatpush1.bf16.msra.mxu0 %v2080
      %2301 = vmatprep.subr.bf16.mxu0 %v2079
      %2302 = vmatpush1.bf16.msra.mxu0 %v2078
      %2303 = vmatprep.subr.bf16.mxu0 %v2109
      %2304 = vmatpush2.bf16.msra.mxu0 %v2108
      %2305 = vmatprep.subr.bf16.mxu0 %v2107
      %2306 = vmatpush2.bf16.msra.mxu0 %v2106
      %2307 = vmatprep.subr.bf16.mxu0 %v2105
      %2308 = vmatpush2.bf16.msra.mxu0 %v2104
      %2309 = vmatprep.subr.bf16.mxu0 %v2103
      %2310 = vmatpush2.bf16.msra.mxu0 %v2102
      %2311 = vmatprep.subr.bf16.mxu0 %v2101
      %2312 = vmatpush2.bf16.msra.mxu0 %v2100
      %2313 = vmatprep.subr.bf16.mxu0 %v2099
      %2314 = vmatpush2.bf16.msra.mxu0 %v2098
      %2315 = vmatprep.subr.bf16.mxu0 %v2097
      %2316 = vmatpush2.bf16.msra.mxu0 %v2096
      %2317 = vmatprep.subr.bf16.mxu0 %v2095
      %2318 = vmatpush2.bf16.msra.mxu0 %v2094
      %2319 = vmatprep.mubr.bf16.mxu0 %v1740
      %2320 = vmatmul.mubr.bf16.gmra.mxu0 %v1739
      %v2321 = vpop.f32.mrf.mxu0
      %v2322 = vadd.f32 0.0, %v2321
      %v2323 = vpop.f32.mrf.mxu0
      %v2324 = vadd.f32 0.0, %v2323
      %v2325 = vpop.f32.mrf.mxu0
      %v2326 = vadd.f32 0.0, %v2325
      %v2327 = vpop.f32.mrf.mxu0
      %v2328 = vadd.f32 0.0, %v2327
      %2329 = vmatprep.mubr.bf16.mxu0 %v1747
      %2330 = vmatmul.mubr.bf16.gmra.mxu0 %v1746
      %v2331 = vpop.f32.mrf.mxu0
      %v2332 = vadd.f32 0.0, %v2331
      %v2333 = vpop.f32.mrf.mxu0
      %v2334 = vadd.f32 0.0, %v2333
      %v2335 = vpop.f32.mrf.mxu0
      %v2336 = vadd.f32 0.0, %v2335
      %v2337 = vpop.f32.mrf.mxu0
      %v2338 = vadd.f32 0.0, %v2337
      %2339 = vmatprep.mubr.bf16.mxu0 %v1754
      %2340 = vmatmul.mubr.bf16.gmra.mxu0 %v1753
      %v2341 = vpop.f32.mrf.mxu0
      %v2342 = vadd.f32 0.0, %v2341
      %v2343 = vpop.f32.mrf.mxu0
      %v2344 = vadd.f32 0.0, %v2343
      %v2345 = vpop.f32.mrf.mxu0
      %v2346 = vadd.f32 0.0, %v2345
      %v2347 = vpop.f32.mrf.mxu0
      %v2348 = vadd.f32 0.0, %v2347
      %2349 = vdwg.mxu0
      %2350 = vmatprep.subr.bf16.mxu0 %v2125
      %2351 = vmatpush1.bf16.msra.mxu0 %v2124
      %2352 = vmatprep.subr.bf16.mxu0 %v2123
      %2353 = vmatpush1.bf16.msra.mxu0 %v2122
      %2354 = vmatprep.subr.bf16.mxu0 %v2121
      %2355 = vmatpush1.bf16.msra.mxu0 %v2120
      %2356 = vmatprep.subr.bf16.mxu0 %v2119
      %2357 = vmatpush1.bf16.msra.mxu0 %v2118
      %2358 = vmatprep.subr.bf16.mxu0 %v2117
      %2359 = vmatpush1.bf16.msra.mxu0 %v2116
      %2360 = vmatprep.subr.bf16.mxu0 %v2115
      %2361 = vmatpush1.bf16.msra.mxu0 %v2114
      %2362 = vmatprep.subr.bf16.mxu0 %v2113
      %2363 = vmatpush1.bf16.msra.mxu0 %v2112
      %2364 = vmatprep.subr.bf16.mxu0 %v2111
      %2365 = vmatpush1.bf16.msra.mxu0 %v2110
      %2366 = vmatprep.subr.bf16.mxu0 %v2141
      %2367 = vmatpush2.bf16.msra.mxu0 %v2140
      %2368 = vmatprep.subr.bf16.mxu0 %v2139
      %2369 = vmatpush2.bf16.msra.mxu0 %v2138
      %2370 = vmatprep.subr.bf16.mxu0 %v2137
      %2371 = vmatpush2.bf16.msra.mxu0 %v2136
      %2372 = vmatprep.subr.bf16.mxu0 %v2135
      %2373 = vmatpush2.bf16.msra.mxu0 %v2134
      %2374 = vmatprep.subr.bf16.mxu0 %v2133
      %2375 = vmatpush2.bf16.msra.mxu0 %v2132
      %2376 = vmatprep.subr.bf16.mxu0 %v2131
      %2377 = vmatpush2.bf16.msra.mxu0 %v2130
      %2378 = vmatprep.subr.bf16.mxu0 %v2129
      %2379 = vmatpush2.bf16.msra.mxu0 %v2128
      %2380 = vmatprep.subr.bf16.mxu0 %v2127
      %2381 = vmatpush2.bf16.msra.mxu0 %v2126
      %2382 = vmatprep.mubr.bf16.mxu0 %v1742
      %2383 = vmatmul.mubr.bf16.gmra.mxu0 %v1741
      %v2384 = vpop.f32.mrf.mxu0
      %v2385 = vadd.f32 %v2322, %v2384
      %v2386 = vpop.f32.mrf.mxu0
      %v2387 = vadd.f32 %v2324, %v2386
      %v2388 = vpop.f32.mrf.mxu0
      %v2389 = vadd.f32 %v2326, %v2388
      %v2390 = vpop.f32.mrf.mxu0
      %v2391 = vadd.f32 %v2328, %v2390
      %2392 = vmatprep.mubr.bf16.mxu0 %v1749
      %2393 = vmatmul.mubr.bf16.gmra.mxu0 %v1748
      %v2394 = vpop.f32.mrf.mxu0
      %v2395 = vadd.f32 %v2332, %v2394
      %v2396 = vpop.f32.mrf.mxu0
      %v2397 = vadd.f32 %v2334, %v2396
      %v2398 = vpop.f32.mrf.mxu0
      %v2399 = vadd.f32 %v2336, %v2398
      %v2400 = vpop.f32.mrf.mxu0
      %v2401 = vadd.f32 %v2338, %v2400
      %2402 = vmatprep.mubr.bf16.mxu0 %v1756
      %2403 = vmatmul.mubr.bf16.gmra.mxu0 %v1755
      %v2404 = vpop.f32.mrf.mxu0
      %v2405 = vadd.f32 %v2342, %v2404
      %v2406 = vpop.f32.mrf.mxu0
      %v2407 = vadd.f32 %v2344, %v2406
      %v2408 = vpop.f32.mrf.mxu0
      %v2409 = vadd.f32 %v2346, %v2408
      %v2410 = vpop.f32.mrf.mxu0
      %v2411 = vadd.f32 %v2348, %v2410
      %2412 = vdwg.mxu0
      %2413 = vmatprep.subr.bf16.mxu0 %v2157
      %2414 = vmatpush1.bf16.msra.mxu0 %v2156
      %2415 = vmatprep.subr.bf16.mxu0 %v2155
      %2416 = vmatpush1.bf16.msra.mxu0 %v2154
      %2417 = vmatprep.subr.bf16.mxu0 %v2153
      %2418 = vmatpush1.bf16.msra.mxu0 %v2152
      %2419 = vmatprep.subr.bf16.mxu0 %v2151
      %2420 = vmatpush1.bf16.msra.mxu0 %v2150
      %2421 = vmatprep.subr.bf16.mxu0 %v2149
      %2422 = vmatpush1.bf16.msra.mxu0 %v2148
      %2423 = vmatprep.subr.bf16.mxu0 %v2147
      %2424 = vmatpush1.bf16.msra.mxu0 %v2146
      %2425 = vmatprep.subr.bf16.mxu0 %v2145
      %2426 = vmatpush1.bf16.msra.mxu0 %v2144
      %2427 = vmatprep.subr.bf16.mxu0 %v2143
      %2428 = vmatpush1.bf16.msra.mxu0 %v2142
      %2429 = vmatprep.subr.bf16.mxu0 %v2173
      %2430 = vmatpush2.bf16.msra.mxu0 %v2172
      %2431 = vmatprep.subr.bf16.mxu0 %v2171
      %2432 = vmatpush2.bf16.msra.mxu0 %v2170
      %2433 = vmatprep.subr.bf16.mxu0 %v2169
      %2434 = vmatpush2.bf16.msra.mxu0 %v2168
      %2435 = vmatprep.subr.bf16.mxu0 %v2167
      %2436 = vmatpush2.bf16.msra.mxu0 %v2166
      %2437 = vmatprep.subr.bf16.mxu0 %v2165
      %2438 = vmatpush2.bf16.msra.mxu0 %v2164
      %2439 = vmatprep.subr.bf16.mxu0 %v2163
      %2440 = vmatpush2.bf16.msra.mxu0 %v2162
      %2441 = vmatprep.subr.bf16.mxu0 %v2161
      %2442 = vmatpush2.bf16.msra.mxu0 %v2160
      %2443 = vmatprep.subr.bf16.mxu0 %v2159
      %2444 = vmatpush2.bf16.msra.mxu0 %v2158
      %2445 = vmatprep.mubr.bf16.mxu0 %v1744
      %2446 = vmatmul.mubr.bf16.gmra.mxu0 %v1743
      %v2447 = vpop.f32.mrf.mxu0
      %v2448 = vadd.f32 %v2385, %v2447
      %v2449 = vpop.f32.mrf.mxu0
      %v2450 = vadd.f32 %v2387, %v2449
      %v2451 = vpop.f32.mrf.mxu0
      %v2452 = vadd.f32 %v2389, %v2451
      %v2453 = vpop.f32.mrf.mxu0
      %v2454 = vadd.f32 %v2391, %v2453
      %2455 = vmatprep.mubr.bf16.mxu0 %v1751
      %2456 = vmatmul.mubr.bf16.gmra.mxu0 %v1750
      %v2457 = vpop.f32.mrf.mxu0
      %v2458 = vadd.f32 %v2395, %v2457
      %v2459 = vpop.f32.mrf.mxu0
      %v2460 = vadd.f32 %v2397, %v2459
      %v2461 = vpop.f32.mrf.mxu0
      %v2462 = vadd.f32 %v2399, %v2461
      %v2463 = vpop.f32.mrf.mxu0
      %v2464 = vadd.f32 %v2401, %v2463
      %2465 = vmatprep.mubr.bf16.mxu0 %v1758
      %2466 = vmatmul.mubr.bf16.gmra.mxu0 %v1757
      %v2467 = vpop.f32.mrf.mxu0
      %v2468 = vadd.f32 %v2405, %v2467
      %v2469 = vpop.f32.mrf.mxu0
      %v2470 = vadd.f32 %v2407, %v2469
      %v2471 = vpop.f32.mrf.mxu0
      %v2472 = vadd.f32 %v2409, %v2471
      %v2473 = vpop.f32.mrf.mxu0
      %v2474 = vadd.f32 %v2411, %v2473
      %2475 = vdwg.mxu0
      %2476 = vmatprep.subr.bf16.mxu0 0
      %2477 = vmatpush1.bf16.msra.mxu0 0
      %2478 = vmatprep.subr.bf16.mxu0 0
      %2479 = vmatpush1.bf16.msra.mxu0 0
      %2480 = vmatprep.subr.bf16.mxu0 0
      %2481 = vmatpush1.bf16.msra.mxu0 0
      %2482 = vmatprep.subr.bf16.mxu0 0
      %2483 = vmatpush1.bf16.msra.mxu0 0
      %2484 = vmatprep.subr.bf16.mxu0 0
      %2485 = vmatpush1.bf16.msra.mxu0 0
      %2486 = vmatprep.subr.bf16.mxu0 0
      %2487 = vmatpush1.bf16.msra.mxu0 0
      %2488 = vmatprep.subr.bf16.mxu0 %v2177
      %2489 = vmatpush1.bf16.msra.mxu0 %v2176
      %2490 = vmatprep.subr.bf16.mxu0 %v2175
      %2491 = vmatpush1.bf16.msra.mxu0 %v2174
      %2492 = vmatprep.subr.bf16.mxu0 0
      %2493 = vmatpush2.bf16.msra.mxu0 0
      %2494 = vmatprep.subr.bf16.mxu0 0
      %2495 = vmatpush2.bf16.msra.mxu0 0
      %2496 = vmatprep.subr.bf16.mxu0 0
      %2497 = vmatpush2.bf16.msra.mxu0 0
      %2498 = vmatprep.subr.bf16.mxu0 0
      %2499 = vmatpush2.bf16.msra.mxu0 0
      %2500 = vmatprep.subr.bf16.mxu0 0
      %2501 = vmatpush2.bf16.msra.mxu0 0
      %2502 = vmatprep.subr.bf16.mxu0 0
      %2503 = vmatpush2.bf16.msra.mxu0 0
      %2504 = vmatprep.subr.bf16.mxu0 0
      %2505 = vmatpush2.bf16.msra.mxu0 0
      %2506 = vmatprep.subr.bf16.mxu0 0
      %2507 = vmatpush2.bf16.msra.mxu0 0
      %2508 = vmatprep.mubr.bf16.mxu0 0
      %2509 = vmatmul.mubr.bf16.gmra.mxu0 %v2279
      %v2510 = vpop.f32.mrf.mxu0
      %v2511 = vadd.f32 %v2448, %v2510
      %v2512 = vpop.f32.mrf.mxu0
      %v2513 = vadd.f32 %v2450, %v2512
      %v2514 = vpop.f32.mrf.mxu0
      %v2515 = vadd.f32 %v2452, %v2514
      %v2516 = vpop.f32.mrf.mxu0
      %v2517 = vadd.f32 %v2454, %v2516
      %2518 = vmatprep.mubr.bf16.mxu0 0
      %2519 = vmatmul.mubr.bf16.gmra.mxu0 %v2282
      %v2520 = vpop.f32.mrf.mxu0
      %v2521 = vadd.f32 %v2458, %v2520
      %v2522 = vpop.f32.mrf.mxu0
      %v2523 = vadd.f32 %v2460, %v2522
      %v2524 = vpop.f32.mrf.mxu0
      %v2525 = vadd.f32 %v2462, %v2524
      %v2526 = vpop.f32.mrf.mxu0
      %v2527 = vadd.f32 %v2464, %v2526
      %2528 = vmatprep.mubr.bf16.mxu0 0
      %2529 = vmatmul.mubr.bf16.gmra.mxu0 %v2285
      %v2530 = vpop.f32.mrf.mxu0
      %v2531 = vadd.f32 %v2468, %v2530
      %v2532 = vpop.f32.mrf.mxu0
      %v2533 = vadd.f32 %v2470, %v2532
      %v2534 = vpop.f32.mrf.mxu0
      %v2535 = vadd.f32 %v2472, %v2534
      %v2536 = vpop.f32.mrf.mxu0
      %v2537 = vadd.f32 %v2474, %v2536
      %2538 = vdwg.mxu0
      %2540 = vset.pattern.permute.xlu0 0
      %2541 = vperm.xlu0 %2540, %v259
      %v2542 = vpop.permute.xlu0 %2541
      %2545 = vset.pattern.permute.xlu0 0
      %2546 = vperm.xlu0 %2545, %v260
      %v2547 = vpop.permute.xlu0 %2546
      %2550 = vset.pattern.permute.xlu0 0
      %2551 = vperm.xlu0 %2550, %v261
      %v2552 = vpop.permute.xlu0 %2551
      %v2554 = vadd.f32 %v2511, %v2542
      %v2555 = vadd.f32 %v2513, %v2542
      %v2556 = vadd.f32 %v2515, %v2547
      %v2557 = vadd.f32 %v2517, %v2547
      %v2558 = vadd.f32 %v2521, %v2552
      %v2559 = vadd.f32 %v2523, %v2552
      %2560 = vst [vmem:[%s251 + $0x20] sm:$0xff] %v2554
      %2561 = vst [vmem:[%s251 + $0x28] sm:$0xff] %v2555
      %2562 = vst [vmem:[%s251 + $0x30] sm:$0xff] %v2556
      %2563 = vst [vmem:[%s251 + $0x38] sm:$0xff] %v2557
      %2564 = vst [vmem:[%s251 + $0x40] sm:$0xff] %v2558
      %2565 = vst [vmem:[%s251 + $0x48] sm:$0xff] %v2559
      %2567 = vset.pattern.permute.xlu0 0
      %2568 = vperm.xlu0 %2567, %v262
      %v2569 = vpop.permute.xlu0 %2568
      %2572 = vset.pattern.permute.xlu0 0
      %2573 = vperm.xlu0 %2572, %v263
      %v2574 = vpop.permute.xlu0 %2573
      %2577 = vset.pattern.permute.xlu0 0
      %2578 = vperm.xlu0 %2577, %v264
      %v2579 = vpop.permute.xlu0 %2578
      %v2581 = vadd.f32 %v2525, %v2569
      %v2582 = vadd.f32 %v2527, %v2569
      %v2583 = vadd.f32 %v2531, %v2574
      %v2584 = vadd.f32 %v2533, %v2574
      %v2585 = vadd.f32 %v2535, %v2579
      %v2586 = vadd.f32 %v2537, %v2579
      %v2587 = vpack.c.bf16 %v2583, %v2581
      %v2588 = vpack.c.bf16 %v2584, %v2582
      %v2589 = vpack.c.bf16 %v2585, %v2585
      %v2590 = vpack.c.bf16 %v2586, %v2586
      %2595 = vrot.lane.b32.xlu0 %v2587, 1
      %v2596 = vpop.permute.xlu0 %2595
      %2597 = vrot.lane.b32.xlu0 %v2588, 1
      %v2598 = vpop.permute.xlu0 %2597
      %2599 = vrot.lane.b32.xlu0 %v2589, 1
      %v2600 = vpop.permute.xlu0 %2599
      %2601 = vrot.lane.b32.xlu0 %v2590, 1
      %v2602 = vpop.permute.xlu0 %2601
      %v2603 = vsel %vm599, %v2596, %v2598
      %v2604 = vsel %vm599, %v2600, %v2602
      %v2608 = vsel %vm604, 0, %v2596
      %v2611 = vsel %vm604, 0, %v2600
      %v2613 = vmul.bf16 %v2608, %v617
      %v2614 = vmul.bf16 %v2603, %v624
      %v2615 = vmul.bf16 %v2611, %v617
      %v2616 = vmul.bf16 %v2604, %v624
      %2617 = vrot.lane.b32.xlu0 %v2587, 127
      %v2618 = vpop.permute.xlu0 %2617
      %2619 = vrot.lane.b32.xlu0 %v2588, 127
      %v2620 = vpop.permute.xlu0 %2619
      %2621 = vrot.lane.b32.xlu0 %v2589, 127
      %v2622 = vpop.permute.xlu0 %2621
      %2623 = vrot.lane.b32.xlu0 %v2590, 127
      %v2624 = vpop.permute.xlu0 %2623
      %v2625 = vsel %vm637, %v2618, %v2620
      %v2626 = vsel %vm637, %v2622, %v2624
      %v2630 = vsel %vm642, %v2620, 0
      %v2633 = vsel %vm642, %v2624, 0
      %v2635 = vmul.bf16 %v2625, %v655
      %v2636 = vmul.bf16 %v2630, %v662
      %v2637 = vmul.bf16 %v2626, %v655
      %v2638 = vmul.bf16 %v2633, %v662
      %2643 = vrot.lane.b32.xlu0 %v2613, 16
      %v2644 = vpop.permute.xlu0 %2643
      %2645 = vrot.lane.b32.xlu0 %v2614, 16
      %v2646 = vpop.permute.xlu0 %2645
      %2647 = vrot.lane.b32.xlu0 %v2615, 16
      %v2648 = vpop.permute.xlu0 %2647
      %2649 = vrot.lane.b32.xlu0 %v2616, 16
      %v2650 = vpop.permute.xlu0 %2649
      %v2651 = vsel %vm911, %v2644, %v2646
      %v2652 = vsel %vm911, %v2648, %v2650
      %v2654 = vsel %vm914, 0, %v2644
      %v2656 = vsel %vm914, 0, %v2648
      %v2659 = vunpack.c.l.b16 %v2654
      %v2660 = vunpack.c.l.b16 %v2651
      %v2661 = vunpack.c.h.b16 %v2654
      %v2662 = vunpack.c.h.b16 %v2651
      %v2663 = vunpack.c.l.b16 %v2656
      %v2664 = vunpack.c.l.b16 %v2652
      %v2665 = vpack.c.b16 %v2660, %v2659
      %v2666 = vpack.c.b16 %v2662, %v2661
      %v2667 = vpack.c.b16 %v2664, %v2663
      %2671 = vst [vmem:[#allocation4] sm:$0xff] %v2665
      %2672 = vst [vmem:[#allocation4 + $0x8] sm:$0xff] %v2666
      %2673 = vst [vmem:[#allocation4 + $0x10] sm:$0xff] %v2667
      %2674 = vrot.lane.b32.xlu0 %v2587, 16
      %v2675 = vpop.permute.xlu0 %2674
      %2676 = vrot.lane.b32.xlu0 %v2588, 16
      %v2677 = vpop.permute.xlu0 %2676
      %2678 = vrot.lane.b32.xlu0 %v2589, 16
      %v2679 = vpop.permute.xlu0 %2678
      %2680 = vrot.lane.b32.xlu0 %v2590, 16
      %v2681 = vpop.permute.xlu0 %2680
      %v2682 = vsel %vm911, %v2675, %v2677
      %v2683 = vsel %vm911, %v2679, %v2681
      %v2685 = vsel %vm914, 0, %v2675
      %v2687 = vsel %vm914, 0, %v2679
      %v2690 = vunpack.c.l.b16 %v2685
      %v2691 = vunpack.c.l.b16 %v2682
      %v2692 = vunpack.c.h.b16 %v2685
      %v2693 = vunpack.c.h.b16 %v2682
      %v2694 = vunpack.c.l.b16 %v2687
      %v2695 = vunpack.c.l.b16 %v2683
      %v2696 = vpack.c.b16 %v2691, %v2690
      %v2697 = vpack.c.b16 %v2693, %v2692
      %v2698 = vpack.c.b16 %v2695, %v2694
      %2702 = vst [vmem:[#allocation4 + $0x18] sm:$0xff] %v2696
      %2703 = vst [vmem:[#allocation4 + $0x20] sm:$0xff] %v2697
      %2704 = vst [vmem:[#allocation4 + $0x28] sm:$0xff] %v2698
      %2709 = vrot.lane.b32.xlu0 %v2635, 16
      %v2710 = vpop.permute.xlu0 %2709
      %2711 = vrot.lane.b32.xlu0 %v2636, 16
      %v2712 = vpop.permute.xlu0 %2711
      %2713 = vrot.lane.b32.xlu0 %v2637, 16
      %v2714 = vpop.permute.xlu0 %2713
      %2715 = vrot.lane.b32.xlu0 %v2638, 16
      %v2716 = vpop.permute.xlu0 %2715
      %v2717 = vsel %vm911, %v2710, %v2712
      %v2718 = vsel %vm911, %v2714, %v2716
      %v2720 = vsel %vm914, 0, %v2710
      %v2722 = vsel %vm914, 0, %v2714
      %v2725 = vunpack.c.l.b16 %v2720
      %v2726 = vunpack.c.l.b16 %v2717
      %v2727 = vunpack.c.h.b16 %v2720
      %v2728 = vunpack.c.h.b16 %v2717
      %v2729 = vunpack.c.l.b16 %v2722
      %v2730 = vunpack.c.l.b16 %v2718
      %v2731 = vpack.c.b16 %v2726, %v2725
      %v2732 = vpack.c.b16 %v2728, %v2727
      %v2733 = vpack.c.b16 %v2730, %v2729
      %2737 = vst [vmem:[#allocation4 + $0x30] sm:$0xff] %v2731
      %2738 = vst [vmem:[#allocation4 + $0x38] sm:$0xff] %v2732
      %2739 = vst [vmem:[#allocation4 + $0x40] sm:$0xff] %v2733
      %v2740 = vunpack.c.l.b16 %v2613
      %v2741 = vunpack.c.l.b16 %v2614
      %v2742 = vunpack.c.h.b16 %v2613
      %v2743 = vunpack.c.h.b16 %v2614
      %v2744 = vunpack.c.l.b16 %v2615
      %v2745 = vunpack.c.l.b16 %v2616
      %v2746 = vpack.c.b16 %v2741, %v2740
      %v2747 = vpack.c.b16 %v2743, %v2742
      %v2748 = vpack.c.b16 %v2745, %v2744
      %2752 = vst [vmem:[#allocation4 + $0x48] sm:$0xff] %v2746
      %2753 = vst [vmem:[#allocation4 + $0x50] sm:$0xff] %v2747
      %2754 = vst [vmem:[#allocation4 + $0x58] sm:$0xff] %v2748
      %v2755 = vunpack.c.l.b16 %v2587
      %v2756 = vunpack.c.l.b16 %v2588
      %v2757 = vunpack.c.h.b16 %v2587
      %v2758 = vunpack.c.h.b16 %v2588
      %v2759 = vunpack.c.l.b16 %v2589
      %v2760 = vunpack.c.l.b16 %v2590
      %v2761 = vpack.c.b16 %v2756, %v2755
      %v2762 = vpack.c.b16 %v2758, %v2757
      %v2763 = vpack.c.b16 %v2760, %v2759
      %2767 = vst [vmem:[#allocation4 + $0x60] sm:$0xff] %v2761
      %2768 = vst [vmem:[#allocation4 + $0x68] sm:$0xff] %v2762
      %2769 = vst [vmem:[#allocation4 + $0x70] sm:$0xff] %v2763
      %v2770 = vunpack.c.l.b16 %v2635
      %v2771 = vunpack.c.l.b16 %v2636
      %v2772 = vunpack.c.h.b16 %v2635
      %v2773 = vunpack.c.h.b16 %v2636
      %v2774 = vunpack.c.l.b16 %v2637
      %v2775 = vunpack.c.l.b16 %v2638
      %v2776 = vpack.c.b16 %v2771, %v2770
      %v2777 = vpack.c.b16 %v2773, %v2772
      %v2778 = vpack.c.b16 %v2775, %v2774
      %2782 = vst [vmem:[#allocation4 + $0x78] sm:$0xff] %v2776
      %2783 = vst [vmem:[#allocation4 + $0x80] sm:$0xff] %v2777
      %2784 = vst [vmem:[#allocation4 + $0x88] sm:$0xff] %v2778
      %2785 = vrot.lane.b32.xlu0 %v2613, 112
      %v2786 = vpop.permute.xlu0 %2785
      %2787 = vrot.lane.b32.xlu0 %v2614, 112
      %v2788 = vpop.permute.xlu0 %2787
      %2789 = vrot.lane.b32.xlu0 %v2615, 112
      %v2790 = vpop.permute.xlu0 %2789
      %2791 = vrot.lane.b32.xlu0 %v2616, 112
      %v2792 = vpop.permute.xlu0 %2791
      %v2793 = vsel %vm1193, %v2786, %v2788
      %v2794 = vsel %vm1193, %v2790, %v2792
      %v2796 = vsel %vm1196, %v2788, 0
      %v2798 = vsel %vm1196, %v2792, 0
      %v2801 = vunpack.c.l.b16 %v2793
      %v2802 = vunpack.c.l.b16 %v2796
      %v2803 = vunpack.c.h.b16 %v2793
      %v2804 = vunpack.c.h.b16 %v2796
      %v2805 = vunpack.c.l.b16 %v2794
      %v2806 = vunpack.c.l.b16 %v2798
      %v2807 = vpack.c.b16 %v2802, %v2801
      %v2808 = vpack.c.b16 %v2804, %v2803
      %v2809 = vpack.c.b16 %v2806, %v2805
      %2813 = vst [vmem:[#allocation4 + $0x90] sm:$0xff] %v2807
      %2814 = vst [vmem:[#allocation4 + $0x98] sm:$0xff] %v2808
      %2815 = vst [vmem:[#allocation4 + $0xa0] sm:$0xff] %v2809
      %2816 = vrot.lane.b32.xlu0 %v2587, 112
      %v2817 = vpop.permute.xlu0 %2816
      %2818 = vrot.lane.b32.xlu0 %v2588, 112
      %v2819 = vpop.permute.xlu0 %2818
      %2820 = vrot.lane.b32.xlu0 %v2589, 112
      %v2821 = vpop.permute.xlu0 %2820
      %2822 = vrot.lane.b32.xlu0 %v2590, 112
      %v2823 = vpop.permute.xlu0 %2822
      %v2824 = vsel %vm1193, %v2817, %v2819
      %v2825 = vsel %vm1193, %v2821, %v2823
      %v2827 = vsel %vm1196, %v2819, 0
      %v2829 = vsel %vm1196, %v2823, 0
      %v2832 = vunpack.c.l.b16 %v2824
      %v2833 = vunpack.c.l.b16 %v2827
      %v2834 = vunpack.c.h.b16 %v2824
      %v2835 = vunpack.c.h.b16 %v2827
      %v2836 = vunpack.c.l.b16 %v2825
      %v2837 = vunpack.c.l.b16 %v2829
      %v2838 = vpack.c.b16 %v2833, %v2832
      %v2839 = vpack.c.b16 %v2835, %v2834
      %v2840 = vpack.c.b16 %v2837, %v2836
      %2844 = vst [vmem:[#allocation4 + $0xa8] sm:$0xff] %v2838
      %2845 = vst [vmem:[#allocation4 + $0xb0] sm:$0xff] %v2839
      %2846 = vst [vmem:[#allocation4 + $0xb8] sm:$0xff] %v2840
      %2847 = vrot.lane.b32.xlu0 %v2635, 112
      %v2848 = vpop.permute.xlu0 %2847
      %2849 = vrot.lane.b32.xlu0 %v2636, 112
      %v2850 = vpop.permute.xlu0 %2849
      %2851 = vrot.lane.b32.xlu0 %v2637, 112
      %v2852 = vpop.permute.xlu0 %2851
      %2853 = vrot.lane.b32.xlu0 %v2638, 112
      %v2854 = vpop.permute.xlu0 %2853
      %v2855 = vsel %vm1193, %v2848, %v2850
      %v2856 = vsel %vm1193, %v2852, %v2854
      %v2858 = vsel %vm1196, %v2850, 0
      %v2860 = vsel %vm1196, %v2854, 0
      %v2863 = vunpack.c.l.b16 %v2855
      %v2864 = vunpack.c.l.b16 %v2858
      %v2865 = vunpack.c.h.b16 %v2855
      %v2866 = vunpack.c.h.b16 %v2858
      %v2867 = vunpack.c.l.b16 %v2856
      %v2868 = vunpack.c.l.b16 %v2860
      %v2869 = vpack.c.b16 %v2864, %v2863
      %v2870 = vpack.c.b16 %v2866, %v2865
      %v2871 = vpack.c.b16 %v2868, %v2867
      %2875 = vst [vmem:[#allocation4 + $0xc0] sm:$0xff] %v2869
      %2876 = vst [vmem:[#allocation4 + $0xc8] sm:$0xff] %v2870
      %2877 = vst [vmem:[#allocation4 + $0xd0] sm:$0xff] %v2871
      %v2878 = vld [vmem:[%s3] sm:$0xff]
      %v2879 = vld [vmem:[%s3 + $0x8] sm:$0xff]
      %v2880 = vld [vmem:[%s3 + $0x10] sm:$0xff]
      %v2881 = vld [vmem:[#allocation4] sm:$0xff]
      %v2882 = vld [vmem:[#allocation4 + $0x8] sm:$0xff]
      %v2883 = vld [vmem:[#allocation4 + $0x10] sm:$0xff]
      %v2884 = vld [vmem:[#allocation4 + $0x18] sm:$0xff]
      %v2885 = vld [vmem:[#allocation4 + $0x20] sm:$0xff]
      %v2886 = vld [vmem:[#allocation4 + $0x28] sm:$0xff]
      %v2887 = vld [vmem:[#allocation4 + $0x30] sm:$0xff]
      %v2888 = vld [vmem:[#allocation4 + $0x38] sm:$0xff]
      %v2889 = vld [vmem:[#allocation4 + $0x40] sm:$0xff]
      %v2890 = vld [vmem:[#allocation4 + $0x48] sm:$0xff]
      %v2891 = vld [vmem:[#allocation4 + $0x50] sm:$0xff]
      %v2892 = vld [vmem:[#allocation4 + $0x58] sm:$0xff]
      %v2893 = vld [vmem:[#allocation4 + $0x60] sm:$0xff]
      %v2894 = vld [vmem:[#allocation4 + $0x68] sm:$0xff]
      %v2895 = vld [vmem:[#allocation4 + $0x70] sm:$0xff]
      %v2896 = vld [vmem:[#allocation4 + $0x78] sm:$0xff]
      %v2897 = vld [vmem:[#allocation4 + $0x80] sm:$0xff]
      %v2898 = vld [vmem:[#allocation4 + $0x88] sm:$0xff]
      %v2899 = vld [vmem:[#allocation4 + $0x90] sm:$0xff]
      %v2900 = vld [vmem:[#allocation4 + $0x98] sm:$0xff]
      %v2901 = vld [vmem:[#allocation4 + $0xa0] sm:$0xff]
      %v2902 = vld [vmem:[#allocation4 + $0xa8] sm:$0xff]
      %v2903 = vld [vmem:[#allocation4 + $0xb0] sm:$0xff]
      %v2904 = vld [vmem:[#allocation4 + $0xb8] sm:$0xff]
      %v2905 = vld [vmem:[#allocation4 + $0xc0] sm:$0xff]
      %v2906 = vld [vmem:[#allocation4 + $0xc8] sm:$0xff]
      %v2907 = vld [vmem:[#allocation4 + $0xd0] sm:$0xff]
      %2909 = vset.pattern.permute.xlu0 0
      %2910 = vperm.xlu0 %2909, %v265
      %v2911 = vpop.permute.xlu0 %2910
      %2914 = vset.pattern.permute.xlu0 0
      %2915 = vperm.xlu0 %2914, %v266
      %v2916 = vpop.permute.xlu0 %2915
      %2919 = vset.pattern.permute.xlu0 0
      %2920 = vperm.xlu0 %2919, %v267
      %v2921 = vpop.permute.xlu0 %2920
      %v2926 = vunpack.c.l.b16 %v2878
      %v2927 = vunpack.c.h.b16 %v2878
      %v2928 = vunpack.c.l.b16 %v2879
      %v2929 = vunpack.c.h.b16 %v2879
      %v2930 = vunpack.c.l.b16 %v2880
      %v2931 = vunpack.c.h.b16 %v2880
      %v2932 = vpack.c.b16 %v2928, %v2926
      %v2933 = vpack.c.b16 %v2929, %v2927
      %v2934 = vpack.c.b16 %v2930, %v2930
      %v2935 = vpack.c.b16 %v2931, %v2931
      %v2965 = vunpack.c.l.b16 %v2881
      %v2966 = vunpack.c.h.b16 %v2881
      %v2967 = vunpack.c.l.b16 %v2882
      %v2968 = vunpack.c.h.b16 %v2882
      %v2969 = vunpack.c.l.b16 %v2883
      %v2970 = vunpack.c.h.b16 %v2883
      %v2971 = vunpack.c.l.b16 %v2884
      %v2972 = vunpack.c.h.b16 %v2884
      %v2973 = vunpack.c.l.b16 %v2885
      %v2974 = vunpack.c.h.b16 %v2885
      %v2975 = vunpack.c.l.b16 %v2886
      %v2976 = vunpack.c.h.b16 %v2886
      %v2977 = vunpack.c.l.b16 %v2887
      %v2978 = vunpack.c.h.b16 %v2887
      %v2979 = vunpack.c.l.b16 %v2888
      %v2980 = vunpack.c.h.b16 %v2888
      %v2981 = vunpack.c.l.b16 %v2889
      %v2982 = vunpack.c.h.b16 %v2889
      %v2983 = vunpack.c.l.b16 %v2890
      %v2984 = vunpack.c.h.b16 %v2890
      %v2985 = vunpack.c.l.b16 %v2891
      %v2986 = vunpack.c.h.b16 %v2891
      %v2987 = vunpack.c.l.b16 %v2892
      %v2988 = vunpack.c.h.b16 %v2892
      %v2989 = vunpack.c.l.b16 %v2893
      %v2990 = vunpack.c.h.b16 %v2893
      %v2991 = vunpack.c.l.b16 %v2894
      %v2992 = vunpack.c.h.b16 %v2894
      %v2993 = vunpack.c.l.b16 %v2895
      %v2994 = vunpack.c.h.b16 %v2895
      %v2995 = vunpack.c.l.b16 %v2896
      %v2996 = vunpack.c.h.b16 %v2896
      %v2997 = vunpack.c.l.b16 %v2897
      %v2998 = vunpack.c.h.b16 %v2897
      %v2999 = vunpack.c.l.b16 %v2898
      %v3000 = vunpack.c.h.b16 %v2898
      %v3001 = vunpack.c.l.b16 %v2899
      %v3002 = vunpack.c.h.b16 %v2899
      %v3003 = vunpack.c.l.b16 %v2900
      %v3004 = vunpack.c.h.b16 %v2900
      %v3005 = vunpack.c.l.b16 %v2901
      %v3006 = vunpack.c.h.b16 %v2901
      %v3007 = vunpack.c.l.b16 %v2902
      %v3008 = vunpack.c.h.b16 %v2902
      %v3009 = vunpack.c.l.b16 %v2903
      %v3010 = vunpack.c.h.b16 %v2903
      %v3011 = vunpack.c.l.b16 %v2904
      %v3012 = vunpack.c.h.b16 %v2904
      %v3013 = vunpack.c.l.b16 %v2905
      %v3014 = vunpack.c.h.b16 %v2905
      %v3015 = vunpack.c.l.b16 %v2906
      %v3016 = vunpack.c.h.b16 %v2906
      %v3017 = vunpack.c.l.b16 %v2907
      %v3018 = vunpack.c.h.b16 %v2907
      %v3019 = vpack.c.b16 %v2967, %v2965
      %v3020 = vpack.c.b16 %v2968, %v2966
      %v3021 = vpack.c.b16 %v2971, %v2969
      %v3022 = vpack.c.b16 %v2972, %v2970
      %v3023 = vpack.c.b16 %v2975, %v2973
      %v3024 = vpack.c.b16 %v2976, %v2974
      %v3025 = vpack.c.b16 %v2979, %v2977
      %v3026 = vpack.c.b16 %v2980, %v2978
      %v3027 = vpack.c.b16 %v2983, %v2981
      %v3028 = vpack.c.b16 %v2984, %v2982
      %v3029 = vpack.c.b16 %v2987, %v2985
      %v3030 = vpack.c.b16 %v2988, %v2986
      %v3031 = vpack.c.b16 %v2991, %v2989
      %v3032 = vpack.c.b16 %v2992, %v2990
      %v3033 = vpack.c.b16 %v2995, %v2993
      %v3034 = vpack.c.b16 %v2996, %v2994
      %v3035 = vpack.c.b16 %v2999, %v2997
      %v3036 = vpack.c.b16 %v3000, %v2998
      %v3037 = vpack.c.b16 %v3003, %v3001
      %v3038 = vpack.c.b16 %v3004, %v3002
      %v3039 = vpack.c.b16 %v3007, %v3005
      %v3040 = vpack.c.b16 %v3008, %v3006
      %v3041 = vpack.c.b16 %v3011, %v3009
      %v3042 = vpack.c.b16 %v3012, %v3010
      %v3043 = vpack.c.b16 %v3015, %v3013
      %v3044 = vpack.c.b16 %v3016, %v3014
      %v3045 = vpack.c.b16 %v3017, %v3017
      %v3046 = vpack.c.b16 %v3018, %v3018
      %vm3073 = vcmask 719872
      %v3075 = vsel %vm3073, %v2933, 0
      %v3078 = vsel %vm3073, %v2935, 0
      %vm3080 = vcmask 1043456
      %v3082 = vsel %vm3080, %v3045, 0
      %v3085 = vsel %vm3080, %v3046, 0
      %3087 = vmatprep.subr.bf16.mxu0 %v3034
      %3088 = vmatpush1.bf16.msra.mxu0 %v3033
      %3089 = vmatprep.subr.bf16.mxu0 %v3032
      %3090 = vmatpush1.bf16.msra.mxu0 %v3031
      %3091 = vmatprep.subr.bf16.mxu0 %v3030
      %3092 = vmatpush1.bf16.msra.mxu0 %v3029
      %3093 = vmatprep.subr.bf16.mxu0 %v3028
      %3094 = vmatpush1.bf16.msra.mxu0 %v3027
      %3095 = vmatprep.subr.bf16.mxu0 %v3026
      %3096 = vmatpush1.bf16.msra.mxu0 %v3025
      %3097 = vmatprep.subr.bf16.mxu0 %v3024
      %3098 = vmatpush1.bf16.msra.mxu0 %v3023
      %3099 = vmatprep.subr.bf16.mxu0 %v3022
      %3100 = vmatpush1.bf16.msra.mxu0 %v3021
      %3101 = vmatprep.subr.bf16.mxu0 %v3020
      %3102 = vmatpush1.bf16.msra.mxu0 %v3019
      %3103 = vmatprep.subr.bf16.mxu0 0
      %3104 = vmatpush2.bf16.msra.mxu0 0
      %3105 = vmatprep.subr.bf16.mxu0 0
      %3106 = vmatpush2.bf16.msra.mxu0 0
      %3107 = vmatprep.subr.bf16.mxu0 %v3085
      %3108 = vmatpush2.bf16.msra.mxu0 %v3082
      %3109 = vmatprep.subr.bf16.mxu0 %v3044
      %3110 = vmatpush2.bf16.msra.mxu0 %v3043
      %3111 = vmatprep.subr.bf16.mxu0 %v3042
      %3112 = vmatpush2.bf16.msra.mxu0 %v3041
      %3113 = vmatprep.subr.bf16.mxu0 %v3040
      %3114 = vmatpush2.bf16.msra.mxu0 %v3039
      %3115 = vmatprep.subr.bf16.mxu0 %v3038
      %3116 = vmatpush2.bf16.msra.mxu0 %v3037
      %3117 = vmatprep.subr.bf16.mxu0 %v3036
      %3118 = vmatpush2.bf16.msra.mxu0 %v3035
      %3119 = vmatprep.mubr.bf16.mxu0 %v3075
      %3120 = vmatmul.mubr.bf16.gmra.mxu0 %v2932
      %v3121 = vpop.f32.mrf.mxu0
      %v3122 = vadd.f32 %v2911, %v3121
      %v3123 = vpop.f32.mrf.mxu0
      %v3124 = vadd.f32 %v2911, %v3123
      %v3125 = vpop.f32.mrf.mxu0
      %v3126 = vadd.f32 %v2916, %v3125
      %v3127 = vpop.f32.mrf.mxu0
      %v3128 = vadd.f32 %v2916, %v3127
      %3129 = vmatprep.mubr.bf16.mxu0 %v3078
      %3130 = vmatmul.mubr.bf16.gmra.mxu0 %v2934
      %v3131 = vpop.f32.mrf.mxu0
      %v3132 = vadd.f32 %v2921, %v3131
      %v3133 = vpop.f32.mrf.mxu0
      %v3134 = vadd.f32 %v2921, %v3133
      %v3135 = vpop.f32.mrf.mxu0
      %v3136 = vpop.f32.mrf.mxu0
      %3137 = vdwg.mxu0
      %3138 = vst [vmem:[%s251 + $0x50] sm:$0xff] %v3122
      %3139 = vst [vmem:[%s251 + $0x58] sm:$0xff] %v3124
      %3140 = vst [vmem:[%s251 + $0x60] sm:$0xff] %v3126
      %3141 = vst [vmem:[%s251 + $0x68] sm:$0xff] %v3128
      %3142 = vst [vmem:[%s251 + $0x70] sm:$0xff] %v3132
      %3143 = vst [vmem:[%s251 + $0x78] sm:$0xff] %v3134
      %v3144 = vld [vmem:[#allocation2 + $0x40] sm:$0xff]
      %v3145 = vld [vmem:[#allocation2 + $0x48] sm:$0xff]
      %v3146 = vld [vmem:[#allocation2 + $0x50] sm:$0xff]
      %v3147 = vld [vmem:[#allocation2 + $0x58] sm:$0xff]
      %v3148 = vld [vmem:[#allocation2 + $0x60] sm:$0xff]
      %v3149 = vld [vmem:[#allocation2 + $0x68] sm:$0xff]
      %3156 = vrot.lane.b32.xlu0 %v3144, 1
      %v3157 = vpop.permute.xlu0 %3156
      %3158 = vrot.lane.b32.xlu0 %v3145, 1
      %v3159 = vpop.permute.xlu0 %3158
      %3160 = vrot.lane.b32.xlu0 %v3146, 1
      %v3161 = vpop.permute.xlu0 %3160
      %3162 = vrot.lane.b32.xlu0 %v3147, 1
      %v3163 = vpop.permute.xlu0 %3162
      %3164 = vrot.lane.b32.xlu0 %v3148, 1
      %v3165 = vpop.permute.xlu0 %3164
      %3166 = vrot.lane.b32.xlu0 %v3149, 1
      %v3167 = vpop.permute.xlu0 %3166
      %v3168 = vsel %vm604, %v3157, %v3159
      %v3169 = vsel %vm604, %v3161, %v3163
      %v3170 = vsel %vm604, %v3165, %v3167
      %v3177 = vsel %vm604, 0.0, %v3157
      %v3178 = vsel %vm604, 0.0, %v3161
      %v3179 = vsel %vm604, 0.0, %v3165
      %v3180 = vmul.f32 %v3177, %v501
      %v3181 = vmul.f32 %v3168, %v505
      %v3182 = vmul.f32 %v3178, %v501
      %v3183 = vmul.f32 %v3169, %v505
      %v3184 = vmul.f32 %v3179, %v501
      %v3185 = vmul.f32 %v3170, %v505
      %3186 = vrot.lane.b32.xlu0 %v3144, 127
      %v3187 = vpop.permute.xlu0 %3186
      %3188 = vrot.lane.b32.xlu0 %v3145, 127
      %v3189 = vpop.permute.xlu0 %3188
      %3190 = vrot.lane.b32.xlu0 %v3146, 127
      %v3191 = vpop.permute.xlu0 %3190
      %3192 = vrot.lane.b32.xlu0 %v3147, 127
      %v3193 = vpop.permute.xlu0 %3192
      %3194 = vrot.lane.b32.xlu0 %v3148, 127
      %v3195 = vpop.permute.xlu0 %3194
      %3196 = vrot.lane.b32.xlu0 %v3149, 127
      %v3197 = vpop.permute.xlu0 %3196
      %v3198 = vsel %vm642, %v3187, %v3189
      %v3199 = vsel %vm642, %v3191, %v3193
      %v3200 = vsel %vm642, %v3195, %v3197
      %v3207 = vsel %vm642, %v3189, 0.0
      %v3208 = vsel %vm642, %v3193, 0.0
      %v3209 = vsel %vm642, %v3197, 0.0
      %v3210 = vmul.f32 %v3198, %v514
      %v3211 = vmul.f32 %v3207, %v518
      %v3212 = vmul.f32 %v3199, %v514
      %v3213 = vmul.f32 %v3208, %v518
      %v3214 = vmul.f32 %v3200, %v514
      %v3215 = vmul.f32 %v3209, %v518
      %3222 = vrot.lane.b32.xlu0 %v3180, 16
      %v3223 = vpop.permute.xlu0 %3222
      %3224 = vrot.lane.b32.xlu0 %v3181, 16
      %v3225 = vpop.permute.xlu0 %3224
      %3226 = vrot.lane.b32.xlu0 %v3182, 16
      %v3227 = vpop.permute.xlu0 %3226
      %3228 = vrot.lane.b32.xlu0 %v3183, 16
      %v3229 = vpop.permute.xlu0 %3228
      %3230 = vrot.lane.b32.xlu0 %v3184, 16
      %v3231 = vpop.permute.xlu0 %3230
      %3232 = vrot.lane.b32.xlu0 %v3185, 16
      %v3233 = vpop.permute.xlu0 %3232
      %v3234 = vsel %vm914, %v3223, %v3225
      %v3235 = vsel %vm914, %v3227, %v3229
      %v3236 = vsel %vm914, %v3231, %v3233
      %v3243 = vsel %vm914, 0.0, %v3223
      %v3244 = vsel %vm914, 0.0, %v3227
      %v3245 = vsel %vm914, 0.0, %v3231
      %3246 = vrot.lane.b32.xlu0 %v3144, 16
      %v3247 = vpop.permute.xlu0 %3246
      %3248 = vrot.lane.b32.xlu0 %v3145, 16
      %v3249 = vpop.permute.xlu0 %3248
      %3250 = vrot.lane.b32.xlu0 %v3146, 16
      %v3251 = vpop.permute.xlu0 %3250
      %3252 = vrot.lane.b32.xlu0 %v3147, 16
      %v3253 = vpop.permute.xlu0 %3252
      %3254 = vrot.lane.b32.xlu0 %v3148, 16
      %v3255 = vpop.permute.xlu0 %3254
      %3256 = vrot.lane.b32.xlu0 %v3149, 16
      %v3257 = vpop.permute.xlu0 %3256
      %v3258 = vsel %vm914, %v3247, %v3249
      %v3259 = vsel %vm914, %v3251, %v3253
      %v3260 = vsel %vm914, %v3255, %v3257
      %v3267 = vsel %vm914, 0.0, %v3247
      %v3268 = vsel %vm914, 0.0, %v3251
      %v3269 = vsel %vm914, 0.0, %v3255
      %v3270 = vadd.f32 %v3243, %v3267
      %v3271 = vadd.f32 %v3234, %v3258
      %v3272 = vadd.f32 %v3244, %v3268
      %v3273 = vadd.f32 %v3235, %v3259
      %v3274 = vadd.f32 %v3245, %v3269
      %v3275 = vadd.f32 %v3236, %v3260
      %3282 = vrot.lane.b32.xlu0 %v3210, 16
      %v3283 = vpop.permute.xlu0 %3282
      %3284 = vrot.lane.b32.xlu0 %v3211, 16
      %v3285 = vpop.permute.xlu0 %3284
      %3286 = vrot.lane.b32.xlu0 %v3212, 16
      %v3287 = vpop.permute.xlu0 %3286
      %3288 = vrot.lane.b32.xlu0 %v3213, 16
      %v3289 = vpop.permute.xlu0 %3288
      %3290 = vrot.lane.b32.xlu0 %v3214, 16
      %v3291 = vpop.permute.xlu0 %3290
      %3292 = vrot.lane.b32.xlu0 %v3215, 16
      %v3293 = vpop.permute.xlu0 %3292
      %v3294 = vsel %vm914, %v3283, %v3285
      %v3295 = vsel %vm914, %v3287, %v3289
      %v3296 = vsel %vm914, %v3291, %v3293
      %v3303 = vsel %vm914, 0.0, %v3283
      %v3304 = vsel %vm914, 0.0, %v3287
      %v3305 = vsel %vm914, 0.0, %v3291
      %v3306 = vadd.f32 %v3270, %v3303
      %v3307 = vadd.f32 %v3271, %v3294
      %v3308 = vadd.f32 %v3272, %v3304
      %v3309 = vadd.f32 %v3273, %v3295
      %v3310 = vadd.f32 %v3274, %v3305
      %v3311 = vadd.f32 %v3275, %v3296
      %v3312 = vadd.f32 %v3306, %v3180
      %v3313 = vadd.f32 %v3307, %v3181
      %v3314 = vadd.f32 %v3308, %v3182
      %v3315 = vadd.f32 %v3309, %v3183
      %v3316 = vadd.f32 %v3310, %v3184
      %v3317 = vadd.f32 %v3311, %v3185
      %v3318 = vadd.f32 %v3312, %v3144
      %v3319 = vadd.f32 %v3313, %v3145
      %v3320 = vadd.f32 %v3314, %v3146
      %v3321 = vadd.f32 %v3315, %v3147
      %v3322 = vadd.f32 %v3316, %v3148
      %v3323 = vadd.f32 %v3317, %v3149
      %v3324 = vadd.f32 %v3318, %v3210
      %v3325 = vadd.f32 %v3319, %v3211
      %v3326 = vadd.f32 %v3320, %v3212
      %v3327 = vadd.f32 %v3321, %v3213
      %v3328 = vadd.f32 %v3322, %v3214
      %v3329 = vadd.f32 %v3323, %v3215
      %3330 = vrot.lane.b32.xlu0 %v3180, 112
      %v3331 = vpop.permute.xlu0 %3330
      %3332 = vrot.lane.b32.xlu0 %v3181, 112
      %v3333 = vpop.permute.xlu0 %3332
      %3334 = vrot.lane.b32.xlu0 %v3182, 112
      %v3335 = vpop.permute.xlu0 %3334
      %3336 = vrot.lane.b32.xlu0 %v3183, 112
      %v3337 = vpop.permute.xlu0 %3336
      %3338 = vrot.lane.b32.xlu0 %v3184, 112
      %v3339 = vpop.permute.xlu0 %3338
      %3340 = vrot.lane.b32.xlu0 %v3185, 112
      %v3341 = vpop.permute.xlu0 %3340
      %v3342 = vsel %vm1196, %v3331, %v3333
      %v3343 = vsel %vm1196, %v3335, %v3337
      %v3344 = vsel %vm1196, %v3339, %v3341
      %v3351 = vsel %vm1196, %v3333, 0.0
      %v3352 = vsel %vm1196, %v3337, 0.0
      %v3353 = vsel %vm1196, %v3341, 0.0
      %v3354 = vadd.f32 %v3324, %v3342
      %v3355 = vadd.f32 %v3325, %v3351
      %v3356 = vadd.f32 %v3326, %v3343
      %v3357 = vadd.f32 %v3327, %v3352
      %v3358 = vadd.f32 %v3328, %v3344
      %v3359 = vadd.f32 %v3329, %v3353
      %3360 = vrot.lane.b32.xlu0 %v3144, 112
      %v3361 = vpop.permute.xlu0 %3360
      %3362 = vrot.lane.b32.xlu0 %v3145, 112
      %v3363 = vpop.permute.xlu0 %3362
      %3364 = vrot.lane.b32.xlu0 %v3146, 112
      %v3365 = vpop.permute.xlu0 %3364
      %3366 = vrot.lane.b32.xlu0 %v3147, 112
      %v3367 = vpop.permute.xlu0 %3366
      %3368 = vrot.lane.b32.xlu0 %v3148, 112
      %v3369 = vpop.permute.xlu0 %3368
      %3370 = vrot.lane.b32.xlu0 %v3149, 112
      %v3371 = vpop.permute.xlu0 %3370
      %v3372 = vsel %vm1196, %v3361, %v3363
      %v3373 = vsel %vm1196, %v3365, %v3367
      %v3374 = vsel %vm1196, %v3369, %v3371
      %v3381 = vsel %vm1196, %v3363, 0.0
      %v3382 = vsel %vm1196, %v3367, 0.0
      %v3383 = vsel %vm1196, %v3371, 0.0
      %v3384 = vadd.f32 %v3354, %v3372
      %v3385 = vadd.f32 %v3355, %v3381
      %v3386 = vadd.f32 %v3356, %v3373
      %v3387 = vadd.f32 %v3357, %v3382
      %v3388 = vadd.f32 %v3358, %v3374
      %v3389 = vadd.f32 %v3359, %v3383
      %3390 = vrot.lane.b32.xlu0 %v3210, 112
      %v3391 = vpop.permute.xlu0 %3390
      %3392 = vrot.lane.b32.xlu0 %v3211, 112
      %v3393 = vpop.permute.xlu0 %3392
      %3394 = vrot.lane.b32.xlu0 %v3212, 112
      %v3395 = vpop.permute.xlu0 %3394
      %3396 = vrot.lane.b32.xlu0 %v3213, 112
      %v3397 = vpop.permute.xlu0 %3396
      %3398 = vrot.lane.b32.xlu0 %v3214, 112
      %v3399 = vpop.permute.xlu0 %3398
      %3400 = vrot.lane.b32.xlu0 %v3215, 112
      %v3401 = vpop.permute.xlu0 %3400
      %v3402 = vsel %vm1196, %v3391, %v3393
      %v3403 = vsel %vm1196, %v3395, %v3397
      %v3404 = vsel %vm1196, %v3399, %v3401
      %v3411 = vsel %vm1196, %v3393, 0.0
      %v3412 = vsel %vm1196, %v3397, 0.0
      %v3413 = vsel %vm1196, %v3401, 0.0
      %v3414 = vadd.f32 %v3384, %v3402
      %v3415 = vadd.f32 %v3385, %v3411
      %v3416 = vadd.f32 %v3386, %v3403
      %v3417 = vadd.f32 %v3387, %v3412
      %v3418 = vadd.f32 %v3388, %v3404
      %v3419 = vadd.f32 %v3389, %v3413
      %3421 = vset.pattern.permute.xlu0 0
      %3422 = vperm.xlu0 %3421, %v268
      %v3423 = vpop.permute.xlu0 %3422
      %3426 = vset.pattern.permute.xlu0 0
      %3427 = vperm.xlu0 %3426, %v269
      %v3428 = vpop.permute.xlu0 %3427
      %3431 = vset.pattern.permute.xlu0 0
      %3432 = vperm.xlu0 %3431, %v270
      %v3433 = vpop.permute.xlu0 %3432
      %v3435 = vadd.f32 %v3414, %v3423
      %v3436 = vadd.f32 %v3415, %v3423
      %v3437 = vadd.f32 %v3416, %v3428
      %v3438 = vadd.f32 %v3417, %v3428
      %v3439 = vadd.f32 %v3418, %v3433
      %v3440 = vadd.f32 %v3419, %v3433
      %3441 = vst [vmem:[%s251 + $0x80] sm:$0xff] %v3435
      %3442 = vst [vmem:[%s251 + $0x88] sm:$0xff] %v3436
      %3443 = vst [vmem:[%s251 + $0x90] sm:$0xff] %v3437
      %3444 = vst [vmem:[%s251 + $0x98] sm:$0xff] %v3438
      %3445 = vst [vmem:[%s251 + $0xa0] sm:$0xff] %v3439
      %3446 = vst [vmem:[%s251 + $0xa8] sm:$0xff] %v3440
      %p3447 = scmp.lt.s32.totalorder %s17, 1
      %s3448 = scalar_select %p3447, %s17, 1
      %s3449 = smul.addr %s3448, 22
      %s3450 = smul.addr %s3449, 8
      %s3451 = scalar_lea.vmem %s6, %s3450
      // Predicated region
      $region45: #{inception_a_forward.1} parent=43 // pred_check
        %p3452 = pneg %p166
      $region46: #{inception_a_forward.1} parent=43 // pred_check_branch
        %3454 = sbr.rel (%p3452) target = $region48
      $region47: #{inception_a_forward.1} parent=43 // pred_region
        _
      $region48: #{inception_a_forward.1} parent=43 // pred_fallthru
        _
    $region44: #{inception_a_forward.1} parent=5 // pred_fallthru
      _
    %p3455 = scmp.le.s32.totalorder 2, %s12
    // Predicated region
    $region49: #{inception_a_forward.1} parent=5 // pred_check
      %p3456 = pneg %p3455
    $region50: #{inception_a_forward.1} parent=5 // pred_check_branch
      %3458 = sbr.rel (%p3456) target = $region52
    $region51: #{inception_a_forward.1} parent=5 // pred_region
      %s3459 = ssub.s32 %s12, 2
      // Predicated region
      $region53: #{inception_a_forward.1} parent=51 // pred_check
        %p3460 = pneg %p172
      $region54: #{inception_a_forward.1} parent=51 // pred_check_branch
        %3462 = sbr.rel (%p3460) target = $region56
      $region55: #{inception_a_forward.1} parent=51 // pred_region
        %p3463 = scmp.lt.s32.totalorder %s18, 1
        %s3464 = scalar_select %p3463, %s18, 1
        %s3465 = smul.addr %s3464, 22
        %s3466 = smul.addr %s3465, 8
        %s3467 = scalar_lea.vmem %s6, %s3466
      $region56: #{inception_a_forward.1} parent=51 // pred_fallthru
        _
    $region52: #{inception_a_forward.1} parent=5 // pred_fallthru
      _
  $region6: #{inception_a_forward.1} parent=0 // loop_footer
    %s16 = sadd.s32 1, %s12
  $region7: #{inception_a_forward.1} parent=0 // loop_footer_branch
    %11 = sbr.rel target = $region3
  $region8: #{inception_a_forward.1} parent=0 // loop_exit
    _

</llo_original>
